<compile_context>
chip_gen: v5e
topology: v5e:2x2
jax: 0.10.0
libtpu: 0.0.40
codegen_flags: <defaults>
</compile_context>

<pallas_src>
import math
import numpy as np
import jax
import jax.numpy as jnp
from jax.experimental import pallas as pl
from jax.experimental.pallas import tpu as pltpu

# ----------------------------- module constants ------------------------------
ORIG_FREQ = 44100
NEW_FREQ = 32000
SAMPLE_RATE = 32000
N_FFT = 4096
WIN_LENGTH = 3072
HOP_LENGTH = 500
N_MELS = 256
N_FREQS = N_FFT // 2 + 1          # 2049 onesided rfft bins
N_FREQS_USED = 2048               # Nyquist bin dropped (mel fb row 2048 == 0)
WIN_OFFSET = (N_FFT - WIN_LENGTH) // 2   # 512 — centered window padding inside n_fft frame
K_DFT = WIN_LENGTH                # 3072 contraction dim after window fold

_GCD = math.gcd(ORIG_FREQ, NEW_FREQ)
RS_ORIG = ORIG_FREQ // _GCD       # 441
RS_NEW = NEW_FREQ // _GCD         # 320
RS_N_PAD = 384                    # 320 padded to a multiple of 128 (lane-dense stores)
LOWPASS_WIDTH = 6                 # torchaudio Resample default
ROLLOFF = 0.99                    # torchaudio Resample default

FREQ_TILE = 256                   # freq tile (8 tiles of 256 = 2048 bins)
MEL_ROW_TILE = 256                # frames per mel-kernel row tile
RS_ROW_TILE = 256                 # rows per resample-kernel tile
VMEM_LIMIT = 48 * 1024 * 1024     # <= v7x 64 MiB physical VMEM


# --------------------------- parameter construction --------------------------
def build_resample_kernel():
    """torchaudio.transforms.Resample (sinc_interp_hann) polyphase kernel."""
    base_freq = min(RS_ORIG, RS_NEW) * ROLLOFF
    width = int(math.ceil(LOWPASS_WIDTH * RS_ORIG / base_freq))
    idx = np.arange(-width, width + RS_ORIG, dtype=np.float64)[None, :] / RS_ORIG
    t = np.arange(0, -RS_NEW, -1, dtype=np.float64)[:, None] / RS_NEW + idx
    t = t * base_freq
    t = np.clip(t, -LOWPASS_WIDTH, LOWPASS_WIDTH)
    window = np.cos(t * math.pi / LOWPASS_WIDTH / 2.0) ** 2
    t = t * math.pi
    scale = base_freq / RS_ORIG
    safe_t = np.where(t == 0.0, 1.0, t)
    kern = np.where(t == 0.0, 1.0, np.sin(safe_t) / safe_t)
    kern = kern * window * scale
    return kern.astype(np.float32), width  # (RS_NEW, 2*width + RS_ORIG)


def _hz_to_mel_htk(f):
    return 2595.0 * np.log10(1.0 + np.asarray(f, dtype=np.float64) / 700.0)


def _mel_to_hz_htk(m):
    return 700.0 * (10.0 ** (np.asarray(m, dtype=np.float64) / 2595.0) - 1.0)


def build_mel_fb():
    """torchaudio.functional.melscale_fbanks(2049, 0, 16000, 256, 32000, htk, norm=None),
    with the (analytically zero) Nyquist row dropped."""
    all_freqs = np.linspace(0.0, SAMPLE_RATE // 2, N_FREQS)
    m_pts = np.linspace(_hz_to_mel_htk(0.0), _hz_to_mel_htk(SAMPLE_RATE / 2.0), N_MELS + 2)
    f_pts = _mel_to_hz_htk(m_pts)
    f_diff = f_pts[1:] - f_pts[:-1]
    slopes = f_pts[None, :] - all_freqs[:, None]
    down = (-slopes[:, :-2]) / f_diff[:-1]
    up = slopes[:, 2:] / f_diff[1:]
    fb = np.maximum(0.0, np.minimum(down, up)).astype(np.float32)   # (2049, 256)
    assert float(np.abs(fb[-1]).max()) < 1e-6, "Nyquist mel row not negligible"
    return fb[:N_FREQS_USED]                                        # (2048, 256)


def build_windowed_dft_cs():
    """Hann-window-folded real/imag DFT matrices, restricted to the 3072 nonzero window
    samples and the 2048 non-Nyquist bins, packed per freq tile as [cos_tile | sin_tile]."""
    n = np.arange(WIN_LENGTH, dtype=np.float64)
    hann = 0.5 - 0.5 * np.cos(2.0 * np.pi * n / WIN_LENGTH)          # periodic hann(3072)
    nn = np.arange(WIN_LENGTH, dtype=np.int64) + WIN_OFFSET          # absolute sample index in n_fft frame
    k = np.arange(N_FREQS_USED, dtype=np.int64)
    ph = (np.outer(nn, k) % N_FFT).astype(np.float64)                # phase reduced mod N for accuracy
    ang = 2.0 * np.pi * ph / N_FFT
    wc = (np.cos(ang) * hann[:, None]).astype(np.float32)            # (3072, 2048)
    ws = (np.sin(ang) * hann[:, None]).astype(np.float32)
    nt = N_FREQS_USED // FREQ_TILE
    wc_t = wc.reshape(WIN_LENGTH, nt, FREQ_TILE)
    ws_t = ws.reshape(WIN_LENGTH, nt, FREQ_TILE)
    cs = np.stack([wc_t, ws_t], axis=2).reshape(WIN_LENGTH, nt * 2 * FREQ_TILE)
    return cs                                                        # (3072, 4096)


# -------------------------------- Pallas kernels ------------------------------
def _rs_matmul_kernel(a_ref, w_ref, o_ref):
    # polyphase resample: rows = strided conv windows (bf16), cols = taps (padded to 512)
    o_ref[...] = jnp.dot(a_ref[...], w_ref[...], preferred_element_type=jnp.float32)


def _melspec_kernel(frames_ref, cs_ref, fb_ref, o_ref):
    # grid = (row_tiles [parallel], freq_tiles [arbitrary, reduction])
    k = pl.program_id(1)

    @pl.when(k == 0)
    def _init():
        o_ref[...] = jnp.zeros_like(o_ref)

    # single MXU pass: windowed frames @ [cos_tile | sin_tile]  -> (rows, 2*FREQ_TILE) f32
    ri = jnp.dot(frames_ref[...], cs_ref[...], preferred_element_type=jnp.float32)
    re = ri[:, :FREQ_TILE]
    im = ri[:, FREQ_TILE:]
    power = (re * re + im * im).astype(fb_ref.dtype)                 # |X|^2 (power=2.0), bf16 for MXU
    o_ref[...] += jnp.dot(power, fb_ref[...], preferred_element_type=jnp.float32)

    @pl.when(k == pl.num_programs(1) - 1)
    def _finalize():
        o_ref[...] = jnp.log(o_ref[...] + 1e-5)


# --------------------------------- wrappers -----------------------------------
def resample_pallas(x, rs_kernel, width):
    """torchaudio sinc resample 44100 -> 32000 as a row-tiled Pallas matmul."""
    B, L = x.shape
    taps = rs_kernel.shape[1]                                        # 459
    xp = jnp.pad(x, ((0, 0), (width, width + RS_ORIG)))
    n_pos = (xp.shape[1] - taps) // RS_ORIG + 1

    # Frame build via reshape + 2 slices (no n_pos-long stack in the XLA graph).
    n_blocks = n_pos + 1
    need = n_blocks * RS_ORIG
    xb = jnp.pad(xp, ((0, 0), (0, max(0, need - xp.shape[1]))))[:, :need]
    blocks = xb.reshape(B, n_blocks, RS_ORIG)
    head = blocks[:, :n_pos, :]                                      # (B, n_pos, 441)
    tail = blocks[:, 1:n_pos + 1, : taps - RS_ORIG]                  # (B, n_pos, 18)
    frames = jnp.concatenate([head, tail], axis=-1)                  # (B, n_pos, 459)

    R = B * n_pos
    taps_pad = pl.cdiv(taps, 128) * 128                              # 512
    row_tile = int(min(RS_ROW_TILE, max(8, pl.cdiv(R, 8) * 8)))
    r_pad = pl.cdiv(R, row_tile) * row_tile

    a = jnp.zeros((r_pad, taps_pad), jnp.bfloat16).at[:R, :taps].set(
        frames.reshape(R, taps).astype(jnp.bfloat16))
    w = jnp.zeros((taps_pad, RS_N_PAD), jnp.bfloat16).at[:taps, :RS_NEW].set(
        jnp.asarray(rs_kernel).T.astype(jnp.bfloat16))

    out = pl.pallas_call(
        _rs_matmul_kernel,
        out_shape=jax.ShapeDtypeStruct((r_pad, RS_N_PAD), jnp.float32),
        grid=(r_pad // row_tile,),
        in_specs=[pl.BlockSpec((row_tile, taps_pad), lambda i: (i, 0)),
                  pl.BlockSpec((taps_pad, RS_N_PAD), lambda i: (0, 0))],
        out_specs=pl.BlockSpec((row_tile, RS_N_PAD), lambda i: (i, 0)),
        compiler_params=pltpu.CompilerParams(
            dimension_semantics=("parallel",),
            vmem_limit_bytes=VMEM_LIMIT),
    )(a, w)

    out = out[:R, :RS_NEW].reshape(B, n_pos, RS_NEW).reshape(B, n_pos * RS_NEW)
    target_len = int(math.ceil(RS_NEW * L / RS_ORIG))
    return out[:, :target_len]


def melspec_pallas(res, cs, fb):
    """Fused STFT(power=2) + MelScale + log(x + 1e-5), row-tiled / freq-reduction grid."""
    B, L = res.shape
    pad = N_FFT // 2
    xp = jnp.pad(res, ((0, 0), (pad, pad)), mode="reflect")          # center=True, reflect
    n_frames = 1 + L // HOP_LENGTH

    # Effective frame content is xp[t*hop + 512 : t*hop + 512 + 3072] (window is 0 elsewhere).
    wav = xp[:, WIN_OFFSET:]
    nchunk = pl.cdiv(K_DFT, HOP_LENGTH)                              # 7
    n_blocks = n_frames + nchunk - 1
    need = n_blocks * HOP_LENGTH
    wav = jnp.pad(wav, ((0, 0), (0, max(0, need - wav.shape[1]))))[:, :need]
    blocks = wav.reshape(B, n_blocks, HOP_LENGTH)
    parts = [blocks[:, j:j + n_frames, :] for j in range(nchunk)]    # 7 slices, not n_frames
    frames = jnp.concatenate(parts, axis=-1)[..., :K_DFT]            # (B, n_frames, 3072)

    R = B * n_frames
    row_tile = int(min(MEL_ROW_TILE, max(8, pl.cdiv(R, 8) * 8)))
    r_pad = pl.cdiv(R, row_tile) * row_tile
    fr = jnp.zeros((r_pad, K_DFT), jnp.bfloat16).at[:R].set(
        frames.reshape(R, K_DFT).astype(jnp.bfloat16))

    n_ftiles = N_FREQS_USED // FREQ_TILE                             # 8
    out = pl.pallas_call(
        _melspec_kernel,
        out_shape=jax.ShapeDtypeStruct((r_pad, N_MELS), jnp.float32),
        grid=(r_pad // row_tile, n_ftiles),
        in_specs=[pl.BlockSpec((row_tile, K_DFT), lambda r, k: (r, 0)),
                  pl.BlockSpec((K_DFT, 2 * FREQ_TILE), lambda r, k: (0, k)),
                  pl.BlockSpec((FREQ_TILE, N_MELS), lambda r, k: (k, 0))],
        out_specs=pl.BlockSpec((row_tile, N_MELS), lambda r, k: (r, 0)),
        compiler_params=pltpu.CompilerParams(
            dimension_semantics=("parallel", "arbitrary"),
            vmem_limit_bytes=VMEM_LIMIT),
    )(fr, cs, fb)

    out = out[:R].reshape(B, n_frames, N_MELS)
    return jnp.transpose(out, (0, 2, 1))                             # (B, n_mels, time)


def melspec_forward(x, params):
    rs_kernel, width, cs, fb = params
    res = resample_pallas(x, rs_kernel, width)
    return melspec_pallas(res, cs, fb)


# ----------------------------------- main -------------------------------------
if __name__ == "__main__":
    # deterministic parameter setup (analytic torchaudio-equivalent init, no checkpoint)
    rs_kernel, width = build_resample_kernel()
    cs = jnp.asarray(build_windowed_dft_cs(), dtype=jnp.bfloat16)    # (3072, 4096) packed [cos|sin] tiles
    fb = jnp.asarray(build_mel_fb(), dtype=jnp.bfloat16)             # (2048, 256)

    key = jax.random.PRNGKey(0)
    B, L = 2, 4410   # 0.1 s of 44.1 kHz audio -> 3200 resampled samples -> 7 STFT frames
    x = jax.random.normal(key, (B, L), dtype=jnp.float32)

    fwd = jax.jit(lambda xx: melspec_forward(xx, (rs_kernel, width, cs, fb)))
    y = fwd(x)
    y = jax.block_until_ready(y)

    expected_res_len = int(math.ceil(RS_NEW * L / RS_ORIG))
    expected_frames = 1 + expected_res_len // HOP_LENGTH
    assert y.shape == (B, N_MELS, expected_frames), y.shape
    assert bool(jnp.all(jnp.isfinite(y)))
    print("KERNEL_OK")
</pallas_src>

<mosaic_0001>
module attributes {stable_mosaic.version = 11 : i64} {
  func.func @_rs_matmul_kernel(%arg0: i32, %arg1: memref<24x512xbf16, #tpu.memory_space<vmem>>, %arg2: memref<512x384xbf16, #tpu.memory_space<vmem>>, %arg3: memref<24x384xf32, #tpu.memory_space<vmem>>) attributes {dimension_semantics = [#tpu.dimension_semantics<parallel>], iteration_bounds = array<i64: 1>, scalar_prefetch = 0 : i64, scratch_operands = 0 : i64, tpu.core_type = #tpu.core_type<tc>, window_params = [{transform_indices = @transform_0, window_bounds = array<i64: 24, 512>}, {pipeline_mode = #tpu.pipeline_mode<synchronous>, transform_indices = @transform_1, window_bounds = array<i64: 512, 384>}, {transform_indices = @transform_2, window_bounds = array<i64: 24, 384>}]} {
    %c0 = arith.constant 0 : index
    %c0_0 = arith.constant 0 : index
    %0 = vector.load %arg1[%c0, %c0_0] : memref<24x512xbf16, #tpu.memory_space<vmem>>, vector<24x512xbf16>
    %c0_1 = arith.constant 0 : index
    %c0_2 = arith.constant 0 : index
    %1 = vector.load %arg2[%c0_1, %c0_2] : memref<512x384xbf16, #tpu.memory_space<vmem>>, vector<512x384xbf16>
    %cst = arith.constant dense<0.000000e+00> : vector<24x384xf32>
    %2 = tpu.matmul %0, %1, %cst {dimension_numbers = #tpu.dot_dimension_numbers<[1], [0], [0], [1], [0, 0, 1, 1], [], []>} : vector<24x512xbf16>, vector<512x384xbf16>, vector<24x384xf32> -> vector<24x384xf32>
    %c0_3 = arith.constant 0 : index
    %c0_4 = arith.constant 0 : index
    %3 = vector.load %arg3[%c0_3, %c0_4] : memref<24x384xf32, #tpu.memory_space<vmem>>, vector<24x384xf32>
    tpu.vector_store %arg3[%c0_3, %c0_4], %2 {strides = array<i32>} : memref<24x384xf32, #tpu.memory_space<vmem>>, vector<24x384xf32>,
    return
  }
  func.func @transform_0(%arg0: i32) -> (i32, i32) {
    %c0_i32 = arith.constant 0 : i32
    %c0_i32_0 = arith.constant 0 : i32
    return %arg0, %c0_i32 : i32, i32
  }
  func.func @transform_1(%arg0: i32) -> (i32, i32) {
    %c0_i32 = arith.constant 0 : i32
    %c0_i32_0 = arith.constant 0 : i32
    %c0_i32_1 = arith.constant 0 : i32
    return %c0_i32, %c0_i32_0 : i32, i32
  }
  func.func @transform_2(%arg0: i32) -> (i32, i32) {
    %c0_i32 = arith.constant 0 : i32
    %c0_i32_0 = arith.constant 0 : i32
    return %arg0, %c0_i32 : i32, i32
  }
}

module attributes {stable_mosaic.version = 11 : i64} {
  func.func @_melspec_kernel(%arg0: i32, %arg1: i32, %arg2: memref<16x3072xbf16, #tpu.memory_space<vmem>>, %arg3: memref<3072x512xbf16, #tpu.memory_space<vmem>>, %arg4: memref<256x256xbf16, #tpu.memory_space<vmem>>, %arg5: memref<16x256xf32, #tpu.memory_space<vmem>>) attributes {dimension_semantics = [#tpu.dimension_semantics<parallel>, #tpu.dimension_semantics<arbitrary>], iteration_bounds = array<i64: 1, 8>, scalar_prefetch = 0 : i64, scratch_operands = 0 : i64, tpu.core_type = #tpu.core_type<tc>, window_params = [{transform_indices = @transform_0, window_bounds = array<i64: 16, 3072>}, {transform_indices = @transform_1, window_bounds = array<i64: 3072, 512>}, {transform_indices = @transform_2, window_bounds = array<i64: 256, 256>}, {transform_indices = @transform_3, window_bounds = array<i64: 16, 256>}]} {
    %c0_i32 = arith.constant 0 : i32
    %0 = arith.cmpi eq, %arg1, %c0_i32 : i32
    %1 = arith.extui %0 : i1 to i32
    %c0_i32_0 = arith.constant 0 : i32
    %2 = arith.cmpi ne, %1, %c0_i32_0 : i32
    scf.if %2 {
      %cst_12 = arith.constant 0.000000e+00 : f32
      %20 = vector.broadcast %cst_12 : f32 to vector<16x256xf32>
      %c0_13 = arith.constant 0 : index
      %c0_14 = arith.constant 0 : index
      %21 = vector.load %arg5[%c0_13, %c0_14] : memref<16x256xf32, #tpu.memory_space<vmem>>, vector<16x256xf32>
      tpu.vector_store %arg5[%c0_13, %c0_14], %20 {strides = array<i32>} : memref<16x256xf32, #tpu.memory_space<vmem>>, vector<16x256xf32>,
    } else {
    }
    %c0 = arith.constant 0 : index
    %c0_1 = arith.constant 0 : index
    %3 = vector.load %arg2[%c0, %c0_1] : memref<16x3072xbf16, #tpu.memory_space<vmem>>, vector<16x3072xbf16>
    %c0_2 = arith.constant 0 : index
    %c0_3 = arith.constant 0 : index
    %4 = vector.load %arg3[%c0_2, %c0_3] : memref<3072x512xbf16, #tpu.memory_space<vmem>>, vector<3072x512xbf16>
    %cst = arith.constant dense<0.000000e+00> : vector<16x512xf32>
    %5 = tpu.matmul %3, %4, %cst {dimension_numbers = #tpu.dot_dimension_numbers<[1], [0], [0], [1], [0, 0, 1, 1], [], []>} : vector<16x3072xbf16>, vector<3072x512xbf16>, vector<16x512xf32> -> vector<16x512xf32>
    %6 = vector.extract_strided_slice %5 {offsets = [0, 0], sizes = [16, 256], strides = [1, 1]} : vector<16x512xf32> to vector<16x256xf32>
    %7 = vector.extract_strided_slice %5 {offsets = [0, 256], sizes = [16, 256], strides = [1, 1]} : vector<16x512xf32> to vector<16x256xf32>
    %8 = arith.mulf %6, %6 : vector<16x256xf32>
    %9 = arith.mulf %7, %7 : vector<16x256xf32>
    %10 = arith.addf %8, %9 : vector<16x256xf32>
    %11 = arith.truncf %10 : vector<16x256xf32> to vector<16x256xbf16>
    %c0_4 = arith.constant 0 : index
    %c0_5 = arith.constant 0 : index
    %12 = vector.load %arg5[%c0_4, %c0_5] : memref<16x256xf32, #tpu.memory_space<vmem>>, vector<16x256xf32>
    %c0_6 = arith.constant 0 : index
    %c0_7 = arith.constant 0 : index
    %13 = vector.load %arg4[%c0_6, %c0_7] : memref<256x256xbf16, #tpu.memory_space<vmem>>, vector<256x256xbf16>
    %cst_8 = arith.constant dense<0.000000e+00> : vector<16x256xf32>
    %14 = tpu.matmul %11, %13, %cst_8 {dimension_numbers = #tpu.dot_dimension_numbers<[1], [0], [0], [1], [0, 0, 1, 1], [], []>} : vector<16x256xbf16>, vector<256x256xbf16>, vector<16x256xf32> -> vector<16x256xf32>
    %15 = arith.addf %12, %14 : vector<16x256xf32>
    %c0_9 = arith.constant 0 : index
    %c0_10 = arith.constant 0 : index
    %16 = vector.load %arg5[%c0_9, %c0_10] : memref<16x256xf32, #tpu.memory_space<vmem>>, vector<16x256xf32>
    tpu.vector_store %arg5[%c0_9, %c0_10], %15 {strides = array<i32>} : memref<16x256xf32, #tpu.memory_space<vmem>>, vector<16x256xf32>,
    %c7_i32 = arith.constant 7 : i32
    %17 = arith.cmpi eq, %arg1, %c7_i32 : i32
    %18 = arith.extui %17 : i1 to i32
    %c0_i32_11 = arith.constant 0 : i32
    %19 = arith.cmpi ne, %18, %c0_i32_11 : i32
    scf.if %19 {
      %c0_12 = arith.constant 0 : index
      %c0_13 = arith.constant 0 : index
      %20 = vector.load %arg5[%c0_12, %c0_13] : memref<16x256xf32, #tpu.memory_space<vmem>>, vector<16x256xf32>
      %cst_14 = arith.constant 9.99999974E-6 : f32
      %21 = vector.broadcast %cst_14 : f32 to vector<16x256xf32>
      %22 = arith.addf %20, %21 : vector<16x256xf32>
      %23 = math.log %22 : vector<16x256xf32>
      %c0_15 = arith.constant 0 : index
      %c0_16 = arith.constant 0 : index
      %24 = vector.load %arg5[%c0_15, %c0_16] : memref<16x256xf32, #tpu.memory_space<vmem>>, vector<16x256xf32>
      tpu.vector_store %arg5[%c0_15, %c0_16], %23 {strides = array<i32>} : memref<16x256xf32, #tpu.memory_space<vmem>>, vector<16x256xf32>,
    } else {
    }
    return
  }
  func.func @transform_0(%arg0: i32, %arg1: i32) -> (i32, i32) {
    %c0_i32 = arith.constant 0 : i32
    %c0_i32_0 = arith.constant 0 : i32
    return %arg0, %c0_i32 : i32, i32
  }
  func.func @transform_1(%arg0: i32, %arg1: i32) -> (i32, i32) {
    %c0_i32 = arith.constant 0 : i32
    %c0_i32_0 = arith.constant 0 : i32
    return %c0_i32, %arg1 : i32, i32
  }
  func.func @transform_2(%arg0: i32, %arg1: i32) -> (i32, i32) {
    %c0_i32 = arith.constant 0 : i32
    %c0_i32_0 = arith.constant 0 : i32
    return %arg1, %c0_i32 : i32, i32
  }
  func.func @transform_3(%arg0: i32, %arg1: i32) -> (i32, i32) {
    %c0_i32 = arith.constant 0 : i32
    %c0_i32_0 = arith.constant 0 : i32
    return %arg0, %c0_i32 : i32, i32
  }
}

</mosaic_0001>

<llo_original>
// kernel: _lambda_.2
$region0: #{_lambda_.2}
  #allocation0 [shape = 'u32[]', space=smem, size = 0x4, offset = 0x4, fixed_abs, tag = 'smem constant byte address 0x4 - core index']
  #allocation1 [shape = 'u32[72,128]{1,0:T(1,128)}', space=vmem, size = 0x9000, scoped, tag = 'internal scratch']
  %s0 = inlined_call_operand.vmem [shape: bf16[24,512], index: 0, kind: input, shape index: {}]
  %s1 = inlined_call_operand.hbm [shape: bf16[512,384], index: 1, kind: input, shape index: {}]
  %s2 = inlined_call_operand.vmem [shape: f32[24,384], index: 2, kind: output, shape index: {}]
  %s3 = sld [smem:[#allocation0]]
  $region22: #{_lambda_.2} parent=0
    _
  %s5 = ssub.s32 1, %s3
  %s6 = scalar_select 0, %s5, %s3
  $region1: #{_lambda_.2} parent=0
    #allocation2 [shape = 'u8[393216]{0}', space=vmem, size = 0x60000, scoped, tag = 'input window, operand 1, single buffered']
    #allocation3 [shape = 's32[1]{0}', space=sflag, size = 0x4, scoped, tag = 'scoped memory for _lambda_.2']
    %7 = vsyncpa [#allocation3], 0
    // Predicated region
    $region2: #{_lambda_.2} parent=1 // pred_check
      _
    $region3: #{_lambda_.2} parent=1 // pred_check_branch
      %9 = sbr.rel (0) target = $region5
    $region4: #{_lambda_.2} parent=1 // pred_region
      _
    $region5: #{_lambda_.2} parent=1 // pred_fallthru
      _
    // Predicated region
    $region6: #{_lambda_.2} parent=1 // pred_check
      _
    $region7: #{_lambda_.2} parent=1 // pred_check_branch
      %11 = sbr.rel (0) target = $region9
    $region8: #{_lambda_.2} parent=1 // pred_region
      %13 = vsyncadd [#allocation3], 0
      %s14 = sshll.u32 %s1, 4
      %s15 = int_to_ptr.hbm [resolvable:$true] %s14
      %s16 = sshll.u32 [#allocation2], 4
      %s17 = int_to_ptr.vmem [resolvable:$true] %s16
      %22 = dma.hbm_to_vmem [thread:$0]  %s15, 12288, %s17, [#allocation3], 192, 192, 12
    $region9: #{_lambda_.2} parent=1 // pred_fallthru
      _
    // Predicated region
    $region10: #{_lambda_.2} parent=1 // pred_check
      _
    $region11: #{_lambda_.2} parent=1 // pred_check_branch
      %24 = sbr.rel (0) target = $region13
    $region12: #{_lambda_.2} parent=1 // pred_region
      %26 = dma.done [#allocation3], 12288
    $region13: #{_lambda_.2} parent=1 // pred_fallthru
      _
    %v27 = vld [vmem:[%s0] sm:$0xff]
    %v28 = vld [vmem:[%s0 + $0x8] sm:$0xff]
    %v29 = vld [vmem:[%s0 + $0x10] sm:$0xff]
    %v30 = vld [vmem:[%s0 + $0x18] sm:$0xff]
    %v31 = vld [vmem:[%s0 + $0x20] sm:$0xff]
    %v32 = vld [vmem:[%s0 + $0x28] sm:$0xff]
    %v33 = vld [vmem:[#allocation2] sm:$0xff]
    %v34 = vld [vmem:[#allocation2 + $0x8] sm:$0xf]
    %v35 = vld [vmem:[#allocation2 + $0xc] sm:$0xff]
    %v36 = vld [vmem:[#allocation2 + $0x14] sm:$0xf]
    %v37 = vld [vmem:[#allocation2 + $0x18] sm:$0xff]
    %v38 = vld [vmem:[#allocation2 + $0x20] sm:$0xf]
    %v39 = vld [vmem:[#allocation2 + $0x24] sm:$0xff]
    %v40 = vld [vmem:[#allocation2 + $0x2c] sm:$0xf]
    %v41 = vld [vmem:[#allocation2 + $0x30] sm:$0xff]
    %v42 = vld [vmem:[#allocation2 + $0x38] sm:$0xf]
    %v43 = vld [vmem:[#allocation2 + $0x3c] sm:$0xff]
    %v44 = vld [vmem:[#allocation2 + $0x44] sm:$0xf]
    %v45 = vld [vmem:[#allocation2 + $0x48] sm:$0xff]
    %v46 = vld [vmem:[#allocation2 + $0x50] sm:$0xf]
    %v47 = vld [vmem:[#allocation2 + $0x54] sm:$0xff]
    %v48 = vld [vmem:[#allocation2 + $0x5c] sm:$0xf]
    %v49 = vld [vmem:[#allocation2 + $0x60] sm:$0xff]
    %v50 = vld [vmem:[#allocation2 + $0x68] sm:$0xf]
    %v51 = vld [vmem:[#allocation2 + $0x6c] sm:$0xff]
    %v52 = vld [vmem:[#allocation2 + $0x74] sm:$0xf]
    %v53 = vld [vmem:[#allocation2 + $0x78] sm:$0xff]
    %v54 = vld [vmem:[#allocation2 + $0x80] sm:$0xf]
    %v55 = vld [vmem:[#allocation2 + $0x84] sm:$0xff]
    %v56 = vld [vmem:[#allocation2 + $0x8c] sm:$0xf]
    %v57 = vld [vmem:[#allocation2 + $0x90] sm:$0xff]
    %v58 = vld [vmem:[#allocation2 + $0x98] sm:$0xf]
    %v59 = vld [vmem:[#allocation2 + $0x9c] sm:$0xff]
    %v60 = vld [vmem:[#allocation2 + $0xa4] sm:$0xf]
    %v61 = vld [vmem:[#allocation2 + $0xa8] sm:$0xff]
    %v62 = vld [vmem:[#allocation2 + $0xb0] sm:$0xf]
    %v63 = vld [vmem:[#allocation2 + $0xb4] sm:$0xff]
    %v64 = vld [vmem:[#allocation2 + $0xbc] sm:$0xf]
    %v65 = vld [vmem:[#allocation2 + $0xc0] sm:$0xff]
    %v66 = vld [vmem:[#allocation2 + $0xc8] sm:$0xf]
    %v67 = vld [vmem:[#allocation2 + $0xcc] sm:$0xff]
    %v68 = vld [vmem:[#allocation2 + $0xd4] sm:$0xf]
    %v69 = vld [vmem:[#allocation2 + $0xd8] sm:$0xff]
    %v70 = vld [vmem:[#allocation2 + $0xe0] sm:$0xf]
    %v71 = vld [vmem:[#allocation2 + $0xe4] sm:$0xff]
    %v72 = vld [vmem:[#allocation2 + $0xec] sm:$0xf]
    %v73 = vld [vmem:[#allocation2 + $0xf0] sm:$0xff]
    %v74 = vld [vmem:[#allocation2 + $0xf8] sm:$0xf]
    %v75 = vld [vmem:[#allocation2 + $0xfc] sm:$0xff]
    %v76 = vld [vmem:[#allocation2 + $0x104] sm:$0xf]
    %v77 = vld [vmem:[#allocation2 + $0x108] sm:$0xff]
    %v78 = vld [vmem:[#allocation2 + $0x110] sm:$0xf]
    %v79 = vld [vmem:[#allocation2 + $0x114] sm:$0xff]
    %v80 = vld [vmem:[#allocation2 + $0x11c] sm:$0xf]
    %v81 = vld [vmem:[#allocation2 + $0x120] sm:$0xff]
    %v82 = vld [vmem:[#allocation2 + $0x128] sm:$0xf]
    %v83 = vld [vmem:[#allocation2 + $0x12c] sm:$0xff]
    %v84 = vld [vmem:[#allocation2 + $0x134] sm:$0xf]
    %v85 = vld [vmem:[#allocation2 + $0x138] sm:$0xff]
    %v86 = vld [vmem:[#allocation2 + $0x140] sm:$0xf]
    %v87 = vld [vmem:[#allocation2 + $0x144] sm:$0xff]
    %v88 = vld [vmem:[#allocation2 + $0x14c] sm:$0xf]
    %v89 = vld [vmem:[#allocation2 + $0x150] sm:$0xff]
    %v90 = vld [vmem:[#allocation2 + $0x158] sm:$0xf]
    %v91 = vld [vmem:[#allocation2 + $0x15c] sm:$0xff]
    %v92 = vld [vmem:[#allocation2 + $0x164] sm:$0xf]
    %v93 = vld [vmem:[#allocation2 + $0x168] sm:$0xff]
    %v94 = vld [vmem:[#allocation2 + $0x170] sm:$0xf]
    %v95 = vld [vmem:[#allocation2 + $0x174] sm:$0xff]
    %v96 = vld [vmem:[#allocation2 + $0x17c] sm:$0xf]
    %v97 = vld [vmem:[#allocation2 + $0x180] sm:$0xff]
    %v98 = vld [vmem:[#allocation2 + $0x188] sm:$0xf]
    %v99 = vld [vmem:[#allocation2 + $0x18c] sm:$0xff]
    %v100 = vld [vmem:[#allocation2 + $0x194] sm:$0xf]
    %v101 = vld [vmem:[#allocation2 + $0x198] sm:$0xff]
    %v102 = vld [vmem:[#allocation2 + $0x1a0] sm:$0xf]
    %v103 = vld [vmem:[#allocation2 + $0x1a4] sm:$0xff]
    %v104 = vld [vmem:[#allocation2 + $0x1ac] sm:$0xf]
    %v105 = vld [vmem:[#allocation2 + $0x1b0] sm:$0xff]
    %v106 = vld [vmem:[#allocation2 + $0x1b8] sm:$0xf]
    %v107 = vld [vmem:[#allocation2 + $0x1bc] sm:$0xff]
    %v108 = vld [vmem:[#allocation2 + $0x1c4] sm:$0xf]
    %v109 = vld [vmem:[#allocation2 + $0x1c8] sm:$0xff]
    %v110 = vld [vmem:[#allocation2 + $0x1d0] sm:$0xf]
    %v111 = vld [vmem:[#allocation2 + $0x1d4] sm:$0xff]
    %v112 = vld [vmem:[#allocation2 + $0x1dc] sm:$0xf]
    %v113 = vld [vmem:[#allocation2 + $0x1e0] sm:$0xff]
    %v114 = vld [vmem:[#allocation2 + $0x1e8] sm:$0xf]
    %v115 = vld [vmem:[#allocation2 + $0x1ec] sm:$0xff]
    %v116 = vld [vmem:[#allocation2 + $0x1f4] sm:$0xf]
    %v117 = vld [vmem:[#allocation2 + $0x1f8] sm:$0xff]
    %v118 = vld [vmem:[#allocation2 + $0x200] sm:$0xf]
    %v119 = vld [vmem:[#allocation2 + $0x204] sm:$0xff]
    %v120 = vld [vmem:[#allocation2 + $0x20c] sm:$0xf]
    %v121 = vld [vmem:[#allocation2 + $0x210] sm:$0xff]
    %v122 = vld [vmem:[#allocation2 + $0x218] sm:$0xf]
    %v123 = vld [vmem:[#allocation2 + $0x21c] sm:$0xff]
    %v124 = vld [vmem:[#allocation2 + $0x224] sm:$0xf]
    %v125 = vld [vmem:[#allocation2 + $0x228] sm:$0xff]
    %v126 = vld [vmem:[#allocation2 + $0x230] sm:$0xf]
    %v127 = vld [vmem:[#allocation2 + $0x234] sm:$0xff]
    %v128 = vld [vmem:[#allocation2 + $0x23c] sm:$0xf]
    %v129 = vld [vmem:[#allocation2 + $0x240] sm:$0xff]
    %v130 = vld [vmem:[#allocation2 + $0x248] sm:$0xf]
    %v131 = vld [vmem:[#allocation2 + $0x24c] sm:$0xff]
    %v132 = vld [vmem:[#allocation2 + $0x254] sm:$0xf]
    %v133 = vld [vmem:[#allocation2 + $0x258] sm:$0xff]
    %v134 = vld [vmem:[#allocation2 + $0x260] sm:$0xf]
    %v135 = vld [vmem:[#allocation2 + $0x264] sm:$0xff]
    %v136 = vld [vmem:[#allocation2 + $0x26c] sm:$0xf]
    %v137 = vld [vmem:[#allocation2 + $0x270] sm:$0xff]
    %v138 = vld [vmem:[#allocation2 + $0x278] sm:$0xf]
    %v139 = vld [vmem:[#allocation2 + $0x27c] sm:$0xff]
    %v140 = vld [vmem:[#allocation2 + $0x284] sm:$0xf]
    %v141 = vld [vmem:[#allocation2 + $0x288] sm:$0xff]
    %v142 = vld [vmem:[#allocation2 + $0x290] sm:$0xf]
    %v143 = vld [vmem:[#allocation2 + $0x294] sm:$0xff]
    %v144 = vld [vmem:[#allocation2 + $0x29c] sm:$0xf]
    %v145 = vld [vmem:[#allocation2 + $0x2a0] sm:$0xff]
    %v146 = vld [vmem:[#allocation2 + $0x2a8] sm:$0xf]
    %v147 = vld [vmem:[#allocation2 + $0x2ac] sm:$0xff]
    %v148 = vld [vmem:[#allocation2 + $0x2b4] sm:$0xf]
    %v149 = vld [vmem:[#allocation2 + $0x2b8] sm:$0xff]
    %v150 = vld [vmem:[#allocation2 + $0x2c0] sm:$0xf]
    %v151 = vld [vmem:[#allocation2 + $0x2c4] sm:$0xff]
    %v152 = vld [vmem:[#allocation2 + $0x2cc] sm:$0xf]
    %v153 = vld [vmem:[#allocation2 + $0x2d0] sm:$0xff]
    %v154 = vld [vmem:[#allocation2 + $0x2d8] sm:$0xf]
    %v155 = vld [vmem:[#allocation2 + $0x2dc] sm:$0xff]
    %v156 = vld [vmem:[#allocation2 + $0x2e4] sm:$0xf]
    %v157 = vld [vmem:[#allocation2 + $0x2e8] sm:$0xff]
    %v158 = vld [vmem:[#allocation2 + $0x2f0] sm:$0xf]
    %v159 = vld [vmem:[#allocation2 + $0x2f4] sm:$0xff]
    %v160 = vld [vmem:[#allocation2 + $0x2fc] sm:$0xf]
    %v167 = vunpack.c.l.b16 %v27
    %v168 = vunpack.c.h.b16 %v27
    %v169 = vunpack.c.l.b16 %v28
    %v170 = vunpack.c.h.b16 %v28
    %v171 = vunpack.c.l.b16 %v29
    %v172 = vunpack.c.h.b16 %v29
    %v173 = vunpack.c.l.b16 %v30
    %v174 = vunpack.c.h.b16 %v30
    %v175 = vunpack.c.l.b16 %v31
    %v176 = vunpack.c.h.b16 %v31
    %v177 = vunpack.c.l.b16 %v32
    %v178 = vunpack.c.h.b16 %v32
    %v179 = vpack.c.b16 %v171, %v167
    %v180 = vpack.c.b16 %v172, %v168
    %v181 = vpack.c.b16 %v173, %v169
    %v182 = vpack.c.b16 %v174, %v170
    %v183 = vpack.c.b16 %v175, %v175
    %v184 = vpack.c.b16 %v176, %v176
    %v185 = vpack.c.b16 %v177, %v177
    %v186 = vpack.c.b16 %v178, %v178
    %v323 = vunpack.c.l.b16 %v33
    %v324 = vunpack.c.h.b16 %v33
    %v325 = vunpack.c.l.b16 %v34
    %v326 = vunpack.c.l.b16 %v35
    %v327 = vunpack.c.h.b16 %v35
    %v328 = vunpack.c.l.b16 %v36
    %v329 = vunpack.c.l.b16 %v37
    %v330 = vunpack.c.h.b16 %v37
    %v331 = vunpack.c.l.b16 %v38
    %v332 = vunpack.c.l.b16 %v39
    %v333 = vunpack.c.h.b16 %v39
    %v334 = vunpack.c.l.b16 %v40
    %v335 = vunpack.c.l.b16 %v41
    %v336 = vunpack.c.h.b16 %v41
    %v337 = vunpack.c.l.b16 %v42
    %v338 = vunpack.c.l.b16 %v43
    %v339 = vunpack.c.h.b16 %v43
    %v340 = vunpack.c.l.b16 %v44
    %v341 = vunpack.c.l.b16 %v45
    %v342 = vunpack.c.h.b16 %v45
    %v343 = vunpack.c.l.b16 %v46
    %v344 = vunpack.c.l.b16 %v47
    %v345 = vunpack.c.h.b16 %v47
    %v346 = vunpack.c.l.b16 %v48
    %v347 = vunpack.c.l.b16 %v49
    %v348 = vunpack.c.h.b16 %v49
    %v349 = vunpack.c.l.b16 %v50
    %v350 = vunpack.c.l.b16 %v51
    %v351 = vunpack.c.h.b16 %v51
    %v352 = vunpack.c.l.b16 %v52
    %v353 = vunpack.c.l.b16 %v53
    %v354 = vunpack.c.h.b16 %v53
    %v355 = vunpack.c.l.b16 %v54
    %v356 = vunpack.c.l.b16 %v55
    %v357 = vunpack.c.h.b16 %v55
    %v358 = vunpack.c.l.b16 %v56
    %v359 = vunpack.c.l.b16 %v57
    %v360 = vunpack.c.h.b16 %v57
    %v361 = vunpack.c.l.b16 %v58
    %v362 = vunpack.c.l.b16 %v59
    %v363 = vunpack.c.h.b16 %v59
    %v364 = vunpack.c.l.b16 %v60
    %v365 = vunpack.c.l.b16 %v61
    %v366 = vunpack.c.h.b16 %v61
    %v367 = vunpack.c.l.b16 %v62
    %v368 = vunpack.c.l.b16 %v63
    %v369 = vunpack.c.h.b16 %v63
    %v370 = vunpack.c.l.b16 %v64
    %v371 = vunpack.c.l.b16 %v65
    %v372 = vunpack.c.h.b16 %v65
    %v373 = vunpack.c.l.b16 %v66
    %v374 = vunpack.c.l.b16 %v67
    %v375 = vunpack.c.h.b16 %v67
    %v376 = vunpack.c.l.b16 %v68
    %v377 = vunpack.c.l.b16 %v69
    %v378 = vunpack.c.h.b16 %v69
    %v379 = vunpack.c.l.b16 %v70
    %v380 = vunpack.c.l.b16 %v71
    %v381 = vunpack.c.h.b16 %v71
    %v382 = vunpack.c.l.b16 %v72
    %v383 = vunpack.c.l.b16 %v73
    %v384 = vunpack.c.h.b16 %v73
    %v385 = vunpack.c.l.b16 %v74
    %v386 = vunpack.c.l.b16 %v75
    %v387 = vunpack.c.h.b16 %v75
    %v388 = vunpack.c.l.b16 %v76
    %v389 = vunpack.c.l.b16 %v77
    %v390 = vunpack.c.h.b16 %v77
    %v391 = vunpack.c.l.b16 %v78
    %v392 = vunpack.c.l.b16 %v79
    %v393 = vunpack.c.h.b16 %v79
    %v394 = vunpack.c.l.b16 %v80
    %v395 = vunpack.c.l.b16 %v81
    %v396 = vunpack.c.h.b16 %v81
    %v397 = vunpack.c.l.b16 %v82
    %v398 = vunpack.c.l.b16 %v83
    %v399 = vunpack.c.h.b16 %v83
    %v400 = vunpack.c.l.b16 %v84
    %v401 = vunpack.c.l.b16 %v85
    %v402 = vunpack.c.h.b16 %v85
    %v403 = vunpack.c.l.b16 %v86
    %v404 = vunpack.c.l.b16 %v87
    %v405 = vunpack.c.h.b16 %v87
    %v406 = vunpack.c.l.b16 %v88
    %v407 = vunpack.c.l.b16 %v89
    %v408 = vunpack.c.h.b16 %v89
    %v409 = vunpack.c.l.b16 %v90
    %v410 = vunpack.c.l.b16 %v91
    %v411 = vunpack.c.h.b16 %v91
    %v412 = vunpack.c.l.b16 %v92
    %v413 = vunpack.c.l.b16 %v93
    %v414 = vunpack.c.h.b16 %v93
    %v415 = vunpack.c.l.b16 %v94
    %v416 = vunpack.c.l.b16 %v95
    %v417 = vunpack.c.h.b16 %v95
    %v418 = vunpack.c.l.b16 %v96
    %v419 = vunpack.c.l.b16 %v97
    %v420 = vunpack.c.h.b16 %v97
    %v421 = vunpack.c.l.b16 %v98
    %v422 = vunpack.c.l.b16 %v99
    %v423 = vunpack.c.h.b16 %v99
    %v424 = vunpack.c.l.b16 %v100
    %v425 = vunpack.c.l.b16 %v101
    %v426 = vunpack.c.h.b16 %v101
    %v427 = vunpack.c.l.b16 %v102
    %v428 = vunpack.c.l.b16 %v103
    %v429 = vunpack.c.h.b16 %v103
    %v430 = vunpack.c.l.b16 %v104
    %v431 = vunpack.c.l.b16 %v105
    %v432 = vunpack.c.h.b16 %v105
    %v433 = vunpack.c.l.b16 %v106
    %v434 = vunpack.c.l.b16 %v107
    %v435 = vunpack.c.h.b16 %v107
    %v436 = vunpack.c.l.b16 %v108
    %v437 = vunpack.c.l.b16 %v109
    %v438 = vunpack.c.h.b16 %v109
    %v439 = vunpack.c.l.b16 %v110
    %v440 = vunpack.c.l.b16 %v111
    %v441 = vunpack.c.h.b16 %v111
    %v442 = vunpack.c.l.b16 %v112
    %v443 = vunpack.c.l.b16 %v113
    %v444 = vunpack.c.h.b16 %v113
    %v445 = vunpack.c.l.b16 %v114
    %v446 = vunpack.c.l.b16 %v115
    %v447 = vunpack.c.h.b16 %v115
    %v448 = vunpack.c.l.b16 %v116
    %v449 = vunpack.c.l.b16 %v117
    %v450 = vunpack.c.h.b16 %v117
    %v451 = vunpack.c.l.b16 %v118
    %v452 = vunpack.c.l.b16 %v119
    %v453 = vunpack.c.h.b16 %v119
    %v454 = vunpack.c.l.b16 %v120
    %v455 = vunpack.c.l.b16 %v121
    %v456 = vunpack.c.h.b16 %v121
    %v457 = vunpack.c.l.b16 %v122
    %v458 = vunpack.c.l.b16 %v123
    %v459 = vunpack.c.h.b16 %v123
    %v460 = vunpack.c.l.b16 %v124
    %v461 = vunpack.c.l.b16 %v125
    %v462 = vunpack.c.h.b16 %v125
    %v463 = vunpack.c.l.b16 %v126
    %v464 = vunpack.c.l.b16 %v127
    %v465 = vunpack.c.h.b16 %v127
    %v466 = vunpack.c.l.b16 %v128
    %v467 = vunpack.c.l.b16 %v129
    %v468 = vunpack.c.h.b16 %v129
    %v469 = vunpack.c.l.b16 %v130
    %v470 = vunpack.c.l.b16 %v131
    %v471 = vunpack.c.h.b16 %v131
    %v472 = vunpack.c.l.b16 %v132
    %v473 = vunpack.c.l.b16 %v133
    %v474 = vunpack.c.h.b16 %v133
    %v475 = vunpack.c.l.b16 %v134
    %v476 = vunpack.c.l.b16 %v135
    %v477 = vunpack.c.h.b16 %v135
    %v478 = vunpack.c.l.b16 %v136
    %v479 = vunpack.c.l.b16 %v137
    %v480 = vunpack.c.h.b16 %v137
    %v481 = vunpack.c.l.b16 %v138
    %v482 = vunpack.c.l.b16 %v139
    %v483 = vunpack.c.h.b16 %v139
    %v484 = vunpack.c.l.b16 %v140
    %v485 = vunpack.c.l.b16 %v141
    %v486 = vunpack.c.h.b16 %v141
    %v487 = vunpack.c.l.b16 %v142
    %v488 = vunpack.c.l.b16 %v143
    %v489 = vunpack.c.h.b16 %v143
    %v490 = vunpack.c.l.b16 %v144
    %v491 = vunpack.c.l.b16 %v145
    %v492 = vunpack.c.h.b16 %v145
    %v493 = vunpack.c.l.b16 %v146
    %v494 = vunpack.c.l.b16 %v147
    %v495 = vunpack.c.h.b16 %v147
    %v496 = vunpack.c.l.b16 %v148
    %v497 = vunpack.c.l.b16 %v149
    %v498 = vunpack.c.h.b16 %v149
    %v499 = vunpack.c.l.b16 %v150
    %v500 = vunpack.c.l.b16 %v151
    %v501 = vunpack.c.h.b16 %v151
    %v502 = vunpack.c.l.b16 %v152
    %v503 = vunpack.c.l.b16 %v153
    %v504 = vunpack.c.h.b16 %v153
    %v505 = vunpack.c.l.b16 %v154
    %v506 = vunpack.c.l.b16 %v155
    %v507 = vunpack.c.h.b16 %v155
    %v508 = vunpack.c.l.b16 %v156
    %v509 = vunpack.c.l.b16 %v157
    %v510 = vunpack.c.h.b16 %v157
    %v511 = vunpack.c.l.b16 %v158
    %v512 = vunpack.c.l.b16 %v159
    %v513 = vunpack.c.h.b16 %v159
    %v514 = vunpack.c.l.b16 %v160
    %v515 = vpack.c.b16 %v326, %v323
    %v516 = vpack.c.b16 %v327, %v324
    %v517 = vpack.c.b16 %v328, %v325
    %v518 = vpack.c.b16 %v332, %v329
    %v519 = vpack.c.b16 %v333, %v330
    %v520 = vpack.c.b16 %v334, %v331
    %v521 = vpack.c.b16 %v338, %v335
    %v522 = vpack.c.b16 %v339, %v336
    %v523 = vpack.c.b16 %v340, %v337
    %v524 = vpack.c.b16 %v344, %v341
    %v525 = vpack.c.b16 %v345, %v342
    %v526 = vpack.c.b16 %v346, %v343
    %v527 = vpack.c.b16 %v350, %v347
    %v528 = vpack.c.b16 %v351, %v348
    %v529 = vpack.c.b16 %v352, %v349
    %v530 = vpack.c.b16 %v356, %v353
    %v531 = vpack.c.b16 %v357, %v354
    %v532 = vpack.c.b16 %v358, %v355
    %v533 = vpack.c.b16 %v362, %v359
    %v534 = vpack.c.b16 %v363, %v360
    %v535 = vpack.c.b16 %v364, %v361
    %v536 = vpack.c.b16 %v368, %v365
    %v537 = vpack.c.b16 %v369, %v366
    %v538 = vpack.c.b16 %v370, %v367
    %v539 = vpack.c.b16 %v374, %v371
    %v540 = vpack.c.b16 %v375, %v372
    %v541 = vpack.c.b16 %v376, %v373
    %v542 = vpack.c.b16 %v380, %v377
    %v543 = vpack.c.b16 %v381, %v378
    %v544 = vpack.c.b16 %v382, %v379
    %v545 = vpack.c.b16 %v386, %v383
    %v546 = vpack.c.b16 %v387, %v384
    %v547 = vpack.c.b16 %v388, %v385
    %v548 = vpack.c.b16 %v392, %v389
    %v549 = vpack.c.b16 %v393, %v390
    %v550 = vpack.c.b16 %v394, %v391
    %v551 = vpack.c.b16 %v398, %v395
    %v552 = vpack.c.b16 %v399, %v396
    %v553 = vpack.c.b16 %v400, %v397
    %v554 = vpack.c.b16 %v404, %v401
    %v555 = vpack.c.b16 %v405, %v402
    %v556 = vpack.c.b16 %v406, %v403
    %v557 = vpack.c.b16 %v410, %v407
    %v558 = vpack.c.b16 %v411, %v408
    %v559 = vpack.c.b16 %v412, %v409
    %v560 = vpack.c.b16 %v416, %v413
    %v561 = vpack.c.b16 %v417, %v414
    %v562 = vpack.c.b16 %v418, %v415
    %v563 = vpack.c.b16 %v422, %v419
    %v564 = vpack.c.b16 %v423, %v420
    %v565 = vpack.c.b16 %v424, %v421
    %v566 = vpack.c.b16 %v428, %v425
    %v567 = vpack.c.b16 %v429, %v426
    %v568 = vpack.c.b16 %v430, %v427
    %v569 = vpack.c.b16 %v434, %v431
    %v570 = vpack.c.b16 %v435, %v432
    %v571 = vpack.c.b16 %v436, %v433
    %v572 = vpack.c.b16 %v440, %v437
    %v573 = vpack.c.b16 %v441, %v438
    %v574 = vpack.c.b16 %v442, %v439
    %v575 = vpack.c.b16 %v446, %v443
    %v576 = vpack.c.b16 %v447, %v444
    %v577 = vpack.c.b16 %v448, %v445
    %v578 = vpack.c.b16 %v452, %v449
    %v579 = vpack.c.b16 %v453, %v450
    %v580 = vpack.c.b16 %v454, %v451
    %v581 = vpack.c.b16 %v458, %v455
    %v582 = vpack.c.b16 %v459, %v456
    %v583 = vpack.c.b16 %v460, %v457
    %v584 = vpack.c.b16 %v464, %v461
    %v585 = vpack.c.b16 %v465, %v462
    %v586 = vpack.c.b16 %v466, %v463
    %v587 = vpack.c.b16 %v470, %v467
    %v588 = vpack.c.b16 %v471, %v468
    %v589 = vpack.c.b16 %v472, %v469
    %v590 = vpack.c.b16 %v476, %v473
    %v591 = vpack.c.b16 %v477, %v474
    %v592 = vpack.c.b16 %v478, %v475
    %v593 = vpack.c.b16 %v482, %v479
    %v594 = vpack.c.b16 %v483, %v480
    %v595 = vpack.c.b16 %v484, %v481
    %v596 = vpack.c.b16 %v488, %v485
    %v597 = vpack.c.b16 %v489, %v486
    %v598 = vpack.c.b16 %v490, %v487
    %v599 = vpack.c.b16 %v494, %v491
    %v600 = vpack.c.b16 %v495, %v492
    %v601 = vpack.c.b16 %v496, %v493
    %v602 = vpack.c.b16 %v500, %v497
    %v603 = vpack.c.b16 %v501, %v498
    %v604 = vpack.c.b16 %v502, %v499
    %v605 = vpack.c.b16 %v506, %v503
    %v606 = vpack.c.b16 %v507, %v504
    %v607 = vpack.c.b16 %v508, %v505
    %v608 = vpack.c.b16 %v512, %v509
    %v609 = vpack.c.b16 %v513, %v510
    %v610 = vpack.c.b16 %v514, %v511
    %707 = vmatpush.bf16.msra.mxu0 %v536
    %708 = vmatpush.bf16.msra.mxu0 %v533
    %709 = vmatpush.bf16.msra.mxu0 %v530
    %710 = vmatpush.bf16.msra.mxu0 %v527
    %711 = vmatpush.bf16.msra.mxu0 %v524
    %712 = vmatpush.bf16.msra.mxu0 %v521
    %713 = vmatpush.bf16.msra.mxu0 %v518
    %714 = vmatpush.bf16.msra.mxu0 %v515
    %715 = vmatmul.bf16.gmra.mxu0 %v179
    %v716 = vpop.f32.mrf.mxu0
    %v717 = vadd.f32 0.0, %v716
    %v718 = vpop.f32.mrf.mxu0
    %v719 = vadd.f32 0.0, %v718
    %720 = vmatmul.bf16.gmra.mxu0 %v183
    %v721 = vpop.f32.mrf.mxu0
    %v722 = vadd.f32 0.0, %v721
    %v723 = vpop.f32.mrf.mxu0
    %724 = vdwg.mxu0
    %725 = vmatpush.bf16.msra.mxu0 %v560
    %726 = vmatpush.bf16.msra.mxu0 %v557
    %727 = vmatpush.bf16.msra.mxu0 %v554
    %728 = vmatpush.bf16.msra.mxu0 %v551
    %729 = vmatpush.bf16.msra.mxu0 %v548
    %730 = vmatpush.bf16.msra.mxu0 %v545
    %731 = vmatpush.bf16.msra.mxu0 %v542
    %732 = vmatpush.bf16.msra.mxu0 %v539
    %733 = vmatmul.bf16.gmra.mxu0 %v180
    %v734 = vpop.f32.mrf.mxu0
    %v735 = vadd.f32 %v717, %v734
    %v736 = vpop.f32.mrf.mxu0
    %v737 = vadd.f32 %v719, %v736
    %738 = vmatmul.bf16.gmra.mxu0 %v184
    %v739 = vpop.f32.mrf.mxu0
    %v740 = vadd.f32 %v722, %v739
    %v741 = vpop.f32.mrf.mxu0
    %742 = vdwg.mxu0
    %743 = vmatpush.bf16.msra.mxu0 %v584
    %744 = vmatpush.bf16.msra.mxu0 %v581
    %745 = vmatpush.bf16.msra.mxu0 %v578
    %746 = vmatpush.bf16.msra.mxu0 %v575
    %747 = vmatpush.bf16.msra.mxu0 %v572
    %748 = vmatpush.bf16.msra.mxu0 %v569
    %749 = vmatpush.bf16.msra.mxu0 %v566
    %750 = vmatpush.bf16.msra.mxu0 %v563
    %751 = vmatmul.bf16.gmra.mxu0 %v181
    %v752 = vpop.f32.mrf.mxu0
    %v753 = vadd.f32 %v735, %v752
    %v754 = vpop.f32.mrf.mxu0
    %v755 = vadd.f32 %v737, %v754
    %756 = vmatmul.bf16.gmra.mxu0 %v185
    %v757 = vpop.f32.mrf.mxu0
    %v758 = vadd.f32 %v740, %v757
    %v759 = vpop.f32.mrf.mxu0
    %760 = vdwg.mxu0
    %761 = vmatpush.bf16.msra.mxu0 %v608
    %762 = vmatpush.bf16.msra.mxu0 %v605
    %763 = vmatpush.bf16.msra.mxu0 %v602
    %764 = vmatpush.bf16.msra.mxu0 %v599
    %765 = vmatpush.bf16.msra.mxu0 %v596
    %766 = vmatpush.bf16.msra.mxu0 %v593
    %767 = vmatpush.bf16.msra.mxu0 %v590
    %768 = vmatpush.bf16.msra.mxu0 %v587
    %769 = vmatmul.bf16.gmra.mxu0 %v182
    %v770 = vpop.f32.mrf.mxu0
    %v771 = vadd.f32 %v753, %v770
    %v772 = vpop.f32.mrf.mxu0
    %v773 = vadd.f32 %v755, %v772
    %774 = vmatmul.bf16.gmra.mxu0 %v186
    %v775 = vpop.f32.mrf.mxu0
    %v776 = vadd.f32 %v758, %v775
    %v777 = vpop.f32.mrf.mxu0
    %778 = vdwg.mxu0
    %779 = vmatpush.bf16.msra.mxu0 %v537
    %780 = vmatpush.bf16.msra.mxu0 %v534
    %781 = vmatpush.bf16.msra.mxu0 %v531
    %782 = vmatpush.bf16.msra.mxu0 %v528
    %783 = vmatpush.bf16.msra.mxu0 %v525
    %784 = vmatpush.bf16.msra.mxu0 %v522
    %785 = vmatpush.bf16.msra.mxu0 %v519
    %786 = vmatpush.bf16.msra.mxu0 %v516
    %787 = vmatmul.bf16.gmra.mxu0 %v179
    %v788 = vpop.f32.mrf.mxu0
    %v789 = vadd.f32 0.0, %v788
    %v790 = vpop.f32.mrf.mxu0
    %v791 = vadd.f32 0.0, %v790
    %792 = vmatmul.bf16.gmra.mxu0 %v183
    %v793 = vpop.f32.mrf.mxu0
    %v794 = vadd.f32 0.0, %v793
    %v795 = vpop.f32.mrf.mxu0
    %796 = vdwg.mxu0
    %797 = vmatpush.bf16.msra.mxu0 %v561
    %798 = vmatpush.bf16.msra.mxu0 %v558
    %799 = vmatpush.bf16.msra.mxu0 %v555
    %800 = vmatpush.bf16.msra.mxu0 %v552
    %801 = vmatpush.bf16.msra.mxu0 %v549
    %802 = vmatpush.bf16.msra.mxu0 %v546
    %803 = vmatpush.bf16.msra.mxu0 %v543
    %804 = vmatpush.bf16.msra.mxu0 %v540
    %805 = vmatmul.bf16.gmra.mxu0 %v180
    %v806 = vpop.f32.mrf.mxu0
    %v807 = vadd.f32 %v789, %v806
    %v808 = vpop.f32.mrf.mxu0
    %v809 = vadd.f32 %v791, %v808
    %810 = vmatmul.bf16.gmra.mxu0 %v184
    %v811 = vpop.f32.mrf.mxu0
    %v812 = vadd.f32 %v794, %v811
    %v813 = vpop.f32.mrf.mxu0
    %814 = vdwg.mxu0
    %815 = vmatpush.bf16.msra.mxu0 %v585
    %816 = vmatpush.bf16.msra.mxu0 %v582
    %817 = vmatpush.bf16.msra.mxu0 %v579
    %818 = vmatpush.bf16.msra.mxu0 %v576
    %819 = vmatpush.bf16.msra.mxu0 %v573
    %820 = vmatpush.bf16.msra.mxu0 %v570
    %821 = vmatpush.bf16.msra.mxu0 %v567
    %822 = vmatpush.bf16.msra.mxu0 %v564
    %823 = vmatmul.bf16.gmra.mxu0 %v181
    %v824 = vpop.f32.mrf.mxu0
    %v825 = vadd.f32 %v807, %v824
    %v826 = vpop.f32.mrf.mxu0
    %v827 = vadd.f32 %v809, %v826
    %828 = vmatmul.bf16.gmra.mxu0 %v185
    %v829 = vpop.f32.mrf.mxu0
    %v830 = vadd.f32 %v812, %v829
    %v831 = vpop.f32.mrf.mxu0
    %832 = vdwg.mxu0
    %833 = vmatpush.bf16.msra.mxu0 %v609
    %834 = vmatpush.bf16.msra.mxu0 %v606
    %835 = vmatpush.bf16.msra.mxu0 %v603
    %836 = vmatpush.bf16.msra.mxu0 %v600
    %837 = vmatpush.bf16.msra.mxu0 %v597
    %838 = vmatpush.bf16.msra.mxu0 %v594
    %839 = vmatpush.bf16.msra.mxu0 %v591
    %840 = vmatpush.bf16.msra.mxu0 %v588
    %841 = vmatmul.bf16.gmra.mxu0 %v182
    %v842 = vpop.f32.mrf.mxu0
    %v843 = vadd.f32 %v825, %v842
    %v844 = vpop.f32.mrf.mxu0
    %v845 = vadd.f32 %v827, %v844
    %846 = vmatmul.bf16.gmra.mxu0 %v186
    %v847 = vpop.f32.mrf.mxu0
    %v848 = vadd.f32 %v830, %v847
    %v849 = vpop.f32.mrf.mxu0
    %850 = vdwg.mxu0
    %851 = vmatpush.bf16.msra.mxu0 %v538
    %852 = vmatpush.bf16.msra.mxu0 %v535
    %853 = vmatpush.bf16.msra.mxu0 %v532
    %854 = vmatpush.bf16.msra.mxu0 %v529
    %855 = vmatpush.bf16.msra.mxu0 %v526
    %856 = vmatpush.bf16.msra.mxu0 %v523
    %857 = vmatpush.bf16.msra.mxu0 %v520
    %858 = vmatpush.bf16.msra.mxu0 %v517
    %859 = vmatmul.bf16.gmra.mxu0 %v179
    %v860 = vpop.f32.mrf.mxu0
    %v861 = vadd.f32 0.0, %v860
    %v862 = vpop.f32.mrf.mxu0
    %v863 = vadd.f32 0.0, %v862
    %864 = vmatmul.bf16.gmra.mxu0 %v183
    %v865 = vpop.f32.mrf.mxu0
    %v866 = vadd.f32 0.0, %v865
    %v867 = vpop.f32.mrf.mxu0
    %868 = vdwg.mxu0
    %869 = vmatpush.bf16.msra.mxu0 %v562
    %870 = vmatpush.bf16.msra.mxu0 %v559
    %871 = vmatpush.bf16.msra.mxu0 %v556
    %872 = vmatpush.bf16.msra.mxu0 %v553
    %873 = vmatpush.bf16.msra.mxu0 %v550
    %874 = vmatpush.bf16.msra.mxu0 %v547
    %875 = vmatpush.bf16.msra.mxu0 %v544
    %876 = vmatpush.bf16.msra.mxu0 %v541
    %877 = vmatmul.bf16.gmra.mxu0 %v180
    %v878 = vpop.f32.mrf.mxu0
    %v879 = vadd.f32 %v861, %v878
    %v880 = vpop.f32.mrf.mxu0
    %v881 = vadd.f32 %v863, %v880
    %882 = vmatmul.bf16.gmra.mxu0 %v184
    %v883 = vpop.f32.mrf.mxu0
    %v884 = vadd.f32 %v866, %v883
    %v885 = vpop.f32.mrf.mxu0
    %886 = vdwg.mxu0
    %887 = vmatpush.bf16.msra.mxu0 %v586
    %888 = vmatpush.bf16.msra.mxu0 %v583
    %889 = vmatpush.bf16.msra.mxu0 %v580
    %890 = vmatpush.bf16.msra.mxu0 %v577
    %891 = vmatpush.bf16.msra.mxu0 %v574
    %892 = vmatpush.bf16.msra.mxu0 %v571
    %893 = vmatpush.bf16.msra.mxu0 %v568
    %894 = vmatpush.bf16.msra.mxu0 %v565
    %895 = vmatmul.bf16.gmra.mxu0 %v181
    %v896 = vpop.f32.mrf.mxu0
    %v897 = vadd.f32 %v879, %v896
    %v898 = vpop.f32.mrf.mxu0
    %v899 = vadd.f32 %v881, %v898
    %900 = vmatmul.bf16.gmra.mxu0 %v185
    %v901 = vpop.f32.mrf.mxu0
    %v902 = vadd.f32 %v884, %v901
    %v903 = vpop.f32.mrf.mxu0
    %904 = vdwg.mxu0
    %905 = vmatpush.bf16.msra.mxu0 %v610
    %906 = vmatpush.bf16.msra.mxu0 %v607
    %907 = vmatpush.bf16.msra.mxu0 %v604
    %908 = vmatpush.bf16.msra.mxu0 %v601
    %909 = vmatpush.bf16.msra.mxu0 %v598
    %910 = vmatpush.bf16.msra.mxu0 %v595
    %911 = vmatpush.bf16.msra.mxu0 %v592
    %912 = vmatpush.bf16.msra.mxu0 %v589
    %913 = vmatmul.bf16.gmra.mxu0 %v182
    %v914 = vpop.f32.mrf.mxu0
    %v915 = vadd.f32 %v897, %v914
    %v916 = vpop.f32.mrf.mxu0
    %v917 = vadd.f32 %v899, %v916
    %918 = vmatmul.bf16.gmra.mxu0 %v186
    %v919 = vpop.f32.mrf.mxu0
    %v920 = vadd.f32 %v902, %v919
    %v921 = vpop.f32.mrf.mxu0
    %922 = vdwg.mxu0
    %923 = vst [vmem:[%s2] sm:$0xff] %v771
    %924 = vst [vmem:[%s2 + $0x8] sm:$0xff] %v843
    %925 = vst [vmem:[%s2 + $0x10] sm:$0xff] %v915
    %926 = vst [vmem:[%s2 + $0x18] sm:$0xff] %v773
    %927 = vst [vmem:[%s2 + $0x20] sm:$0xff] %v845
    %928 = vst [vmem:[%s2 + $0x28] sm:$0xff] %v917
    %929 = vst [vmem:[%s2 + $0x30] sm:$0xff] %v776
    %930 = vst [vmem:[%s2 + $0x38] sm:$0xff] %v848
    %931 = vst [vmem:[%s2 + $0x40] sm:$0xff] %v920
    // Predicated region
    $region14: #{_lambda_.2} parent=1 // pred_check
      _
    $region15: #{_lambda_.2} parent=1 // pred_check_branch
      %933 = sbr.rel (0) target = $region17
    $region16: #{_lambda_.2} parent=1 // pred_region
      _
    $region17: #{_lambda_.2} parent=1 // pred_fallthru
      _
    // Predicated region
    $region18: #{_lambda_.2} parent=1 // pred_check
      _
    $region19: #{_lambda_.2} parent=1 // pred_check_branch
      %935 = sbr.rel (0) target = $region21
    $region20: #{_lambda_.2} parent=1 // pred_region
      _
    $region21: #{_lambda_.2} parent=1 // pred_fallthru
      _
    %936 = vsyncpa [#allocation3], 1

// kernel: _lambda_.3
$region0: #{_lambda_.3}
  #allocation0 [shape = 'u32[]', space=smem, size = 0x4, offset = 0x4, fixed_abs, tag = 'smem constant byte address 0x4 - core index']
  #allocation1 [shape = 'u32[72,128]{1,0:T(1,128)}', space=vmem, size = 0x9000, scoped, tag = 'internal scratch']
  %s0 = inlined_call_operand.vmem [shape: bf16[16,3072], index: 0, kind: input, shape index: {}]
  %s1 = inlined_call_operand.hbm [shape: bf16[3072,4096], index: 1, kind: input, shape index: {}]
  %s2 = inlined_call_operand.hbm [shape: bf16[2048,256], index: 2, kind: input, shape index: {}]
  %s3 = inlined_call_operand.vmem [shape: f32[16,256], index: 3, kind: output, shape index: {}]
  %s4 = sld [smem:[#allocation0]]
  $region61: #{_lambda_.3} parent=0
    _
  %s6 = ssub.s32 1, %s4
  %s7 = scalar_select 0, %s6, %s4
  $region1: #{_lambda_.3} parent=0
    #allocation2 [shape = 'u8[6291456]{0}', space=vmem, size = 0x600000, scoped, tag = 'input window, operand 1']
    #allocation3 [shape = 's32[2]{0}', space=sflag, size = 0x8, scoped, tag = 'scoped memory for _lambda_.3']
    #allocation4 [shape = 'u8[262144]{0}', space=vmem, size = 0x40000, scoped, tag = 'input window, operand 2']
    #allocation5 [shape = 's32[2]{0}', space=sflag, size = 0x8, scoped, tag = 'scoped memory for _lambda_.3']
    %8 = vsyncpa [#allocation3], 0
    %s9 = scalar_lea.sflag [#allocation3], 1
    %10 = vsyncpa %s9, 0
    %11 = vsyncpa [#allocation5], 0
    %s12 = scalar_lea.sflag [#allocation5], 1
    %13 = vsyncpa %s12, 0
    loop: start=0, step=1, limit=10
    $region2: #{_lambda_.3} parent=1 // loop_pre_header
      _
    $region3: #{_lambda_.3} parent=1 // loop_header
      %s15 = sphi 0, %s19
      %p16 = scmp.ge.s32.totalorder %s15, 10
      %s22 = sphi 0, %s34
      %s23 = sphi 0, %s30
      %s24 = sphi 0, %s22
      %s25 = sphi 0, %s23
      %s26 = sphi 0, %s24
      %s27 = sphi 0, %s25
      %s37 = sphi 0, %s39
      %s40 = sphi 0, %s37
      %s41 = sphi 0, %s40
      %s57 = sphi 0, %s41
      %s63 = sphi 0, %s65
      %s66 = sphi 0, %s63
      %s67 = sphi 0, %s66
      %s83 = sphi 0, %s67
      %s89 = sphi 0, %s91
      %s92 = sphi 0, %s89
      %s93 = sphi 0, %s92
      %s109 = sphi 0, %s93
      %s115 = sphi 0, %s117
      %s118 = sphi 0, %s115
      %s119 = sphi 0, %s118
      %s135 = sphi 0, %s119
    $region4: #{_lambda_.3} parent=1 // loop_header_branch
      %18 = sbr.rel (%p16) target = $region8
    $region5: #{_lambda_.3} parent=1 // loop_body
      %s20 = ssub.s32 %s15, 1
      %s21 = ssub.s32 %s15, 2
      %s28 = sadd.s32 1, %s23
      %p29 = scmp.ge.s32.totalorder %s28, 8
      %s30 = scalar_select %p29, 0, %s28
      %s31 = sadd.s32 1, %s22
      %s32 = scalar_select %p29, %s31, %s22
      %p33 = scmp.ge.s32.totalorder %s32, 1
      %s34 = scalar_select %p33, 0, %s32
      %s35 = ssub.s32 %s22, %s34
      %p36 = scmp.eq.s32.totalorder %s35, 0
      %s38 = sadd.s32 %s37, 1
      %s39 = scalar_select %p36, %s37, %s38
      %p42 = pneg %p36
      %p43 = scmp.eq.s32.totalorder %s15, 7
      %p44 = por %p42, %p43
      %p45 = scmp.ne.s32.totalorder %s37, %s40
      %p46 = scmp.eq.s32.totalorder %s15, 0
      %p47 = por %p45, %p46
      %p48 = scmp.ne.s32.totalorder %s37, %s40
      %p49 = scmp.eq.s32.totalorder %s20, 7
      %p50 = por %p48, %p49
      %p51 = scmp.ne.s32.totalorder %s40, %s41
      %p52 = scmp.eq.s32.totalorder %s20, 0
      %p53 = por %p51, %p52
      %p54 = scmp.ne.s32.totalorder %s40, %s41
      %p55 = scmp.eq.s32.totalorder %s21, 7
      %p56 = por %p54, %p55
      %p58 = scmp.ne.s32.totalorder %s41, %s57
      %p59 = scmp.eq.s32.totalorder %s21, 0
      %p60 = por %p58, %p59
      %s61 = ssub.s32 %s23, %s30
      %p62 = scmp.eq.s32.totalorder %s61, 0
      %s64 = sadd.s32 %s63, 1
      %s65 = scalar_select %p62, %s63, %s64
      %p68 = pneg %p62
      %p69 = scmp.eq.s32.totalorder %s15, 7
      %p70 = por %p68, %p69
      %p71 = scmp.ne.s32.totalorder %s63, %s66
      %p72 = scmp.eq.s32.totalorder %s15, 0
      %p73 = por %p71, %p72
      %p74 = scmp.ne.s32.totalorder %s63, %s66
      %p75 = scmp.eq.s32.totalorder %s20, 7
      %p76 = por %p74, %p75
      %p77 = scmp.ne.s32.totalorder %s66, %s67
      %p78 = scmp.eq.s32.totalorder %s20, 0
      %p79 = por %p77, %p78
      %p80 = scmp.ne.s32.totalorder %s66, %s67
      %p81 = scmp.eq.s32.totalorder %s21, 7
      %p82 = por %p80, %p81
      %p84 = scmp.ne.s32.totalorder %s67, %s83
      %p85 = scmp.eq.s32.totalorder %s21, 0
      %p86 = por %p84, %p85
      %s87 = ssub.s32 %s23, %s30
      %p88 = scmp.eq.s32.totalorder %s87, 0
      %s90 = sadd.s32 %s89, 1
      %s91 = scalar_select %p88, %s89, %s90
      %p94 = pneg %p88
      %p95 = scmp.eq.s32.totalorder %s15, 7
      %p96 = por %p94, %p95
      %p97 = scmp.ne.s32.totalorder %s89, %s92
      %p98 = scmp.eq.s32.totalorder %s15, 0
      %p99 = por %p97, %p98
      %p100 = scmp.ne.s32.totalorder %s89, %s92
      %p101 = scmp.eq.s32.totalorder %s20, 7
      %p102 = por %p100, %p101
      %p103 = scmp.ne.s32.totalorder %s92, %s93
      %p104 = scmp.eq.s32.totalorder %s20, 0
      %p105 = por %p103, %p104
      %p106 = scmp.ne.s32.totalorder %s92, %s93
      %p107 = scmp.eq.s32.totalorder %s21, 7
      %p108 = por %p106, %p107
      %p110 = scmp.ne.s32.totalorder %s93, %s109
      %p111 = scmp.eq.s32.totalorder %s21, 0
      %p112 = por %p110, %p111
      %s113 = ssub.s32 %s22, %s34
      %p114 = scmp.eq.s32.totalorder %s113, 0
      %s116 = sadd.s32 %s115, 1
      %s117 = scalar_select %p114, %s115, %s116
      %p120 = pneg %p114
      %p121 = scmp.eq.s32.totalorder %s15, 7
      %p122 = por %p120, %p121
      %p123 = scmp.ne.s32.totalorder %s115, %s118
      %p124 = scmp.eq.s32.totalorder %s15, 0
      %p125 = por %p123, %p124
      %p126 = scmp.ne.s32.totalorder %s115, %s118
      %p127 = scmp.eq.s32.totalorder %s20, 7
      %p128 = por %p126, %p127
      %p129 = scmp.ne.s32.totalorder %s118, %s119
      %p130 = scmp.eq.s32.totalorder %s20, 0
      %p131 = por %p129, %p130
      %p132 = scmp.ne.s32.totalorder %s118, %s119
      %p133 = scmp.eq.s32.totalorder %s21, 7
      %p134 = por %p132, %p133
      %p136 = scmp.ne.s32.totalorder %s119, %s135
      %p137 = scmp.eq.s32.totalorder %s21, 0
      %p138 = por %p136, %p137
      %p139 = scmp.le.s32.totalorder 1, %s15
      %p140 = scmp.lt.s32.totalorder %s15, 9
      %p141 = pnand %p139, %p140
      %p142 = pneg %p141
      // Predicated region
      $region9: #{_lambda_.3} parent=5 // pred_check
        _
      $region10: #{_lambda_.3} parent=5 // pred_check_branch
        %144 = sbr.rel (%p141) target = $region12
      $region11: #{_lambda_.3} parent=5 // pred_region
        %s145 = ssub.s32 %s15, 1
        // Predicated region
        $region13: #{_lambda_.3} parent=11 // pred_check
          %p146 = pneg %p53
        $region14: #{_lambda_.3} parent=11 // pred_check_branch
          %148 = sbr.rel (%p146) target = $region16
        $region15: #{_lambda_.3} parent=11 // pred_region
          %s149 = smul.u32 2, %s24
          %p150 = scmp.lt.s32.totalorder %s149, 1
          %s151 = scalar_select %p150, %s149, 1
          %s152 = smul.addr %s151, 24
          %s153 = smul.addr %s152, 4
          %s154 = scalar_lea.vmem %s0, %s153
          %s155 = smul.u32 2, %s24
        $region16: #{_lambda_.3} parent=11 // pred_fallthru
          _
      $region12: #{_lambda_.3} parent=5 // pred_fallthru
        _
      %p156 = scmp.lt.s32.totalorder %s15, 8
      // Predicated region
      $region17: #{_lambda_.3} parent=5 // pred_check
        %p157 = pneg %p156
      $region18: #{_lambda_.3} parent=5 // pred_check_branch
        %159 = sbr.rel (%p157) target = $region20
      $region19: #{_lambda_.3} parent=5 // pred_region
        // Predicated region
        $region21: #{_lambda_.3} parent=19 // pred_check
          %p160 = pneg %p73
        $region22: #{_lambda_.3} parent=19 // pred_check_branch
          %162 = sbr.rel (%p160) target = $region24
        $region23: #{_lambda_.3} parent=19 // pred_region
          %s163 = sand.u32 %s63, 1
          %s164 = scalar_lea.sflag [#allocation3], %s163
          %s165 = sand.u32 %s63, 1
          %s166 = smul.addr %s165, 6144
          %s167 = scalar_lea.vmem [#allocation2], %s166
          %s168 = smul.u32 4, %s23
          %170 = vsyncadd %s164, 0
          %s171 = smul.addr %s168, 4
          %s172 = scalar_lea.hbm %s1, %s171
          %s173 = sshll.u32 %s172, 4
          %s174 = int_to_ptr.hbm [resolvable:$true] %s173
          %s175 = sshll.u32 %s167, 4
          %s176 = int_to_ptr.vmem [resolvable:$true] %s175
          %181 = dma.hbm_to_vmem [thread:$0]  %s174, 98304, %s176, %s164, 2048, 256, 16
        $region24: #{_lambda_.3} parent=19 // pred_fallthru
          _
        // Predicated region
        $region25: #{_lambda_.3} parent=19 // pred_check
          %p182 = pneg %p99
        $region26: #{_lambda_.3} parent=19 // pred_check_branch
          %184 = sbr.rel (%p182) target = $region28
        $region27: #{_lambda_.3} parent=19 // pred_region
          %s185 = sand.u32 %s89, 1
          %s186 = scalar_lea.sflag [#allocation5], %s185
          %s187 = sand.u32 %s89, 1
          %s188 = smul.addr %s187, 256
          %s189 = scalar_lea.vmem [#allocation4], %s188
          %s190 = smul.u32 32, %s23
          %192 = vsyncadd %s186, 0
          %s193 = smul.addr %s190, 2
          %s194 = smul.addr %s193, 4
          %s195 = scalar_lea.hbm %s2, %s194
          %s196 = sshll.u32 %s195, 4
          %s197 = int_to_ptr.hbm [resolvable:$true] %s196
          %s198 = sshll.u32 %s189, 4
          %s199 = int_to_ptr.vmem [resolvable:$true] %s198
          %204 = dma.hbm_to_vmem [thread:$0]  %s197, 4096, %s199, %s186, 128, 128, 8
        $region28: #{_lambda_.3} parent=19 // pred_fallthru
          _
      $region20: #{_lambda_.3} parent=5 // pred_fallthru
        _
      %p205 = scmp.le.s32.totalorder 1, %s15
      %p206 = scmp.lt.s32.totalorder %s15, 9
      %p207 = pnand %p205, %p206
      %p208 = pneg %p207
      // Predicated region
      $region29: #{_lambda_.3} parent=5 // pred_check
        _
      $region30: #{_lambda_.3} parent=5 // pred_check_branch
        %210 = sbr.rel (%p207) target = $region32
      $region31: #{_lambda_.3} parent=5 // pred_region
        %s211 = ssub.s32 %s15, 1
        %s212 = sand.u32 %s66, 1
        %s213 = scalar_lea.sflag [#allocation3], %s212
        %s214 = sand.u32 %s66, 1
        %s215 = smul.addr %s214, 6144
        %s216 = scalar_lea.vmem [#allocation2], %s215
        // Predicated region
        $region33: #{_lambda_.3} parent=31 // pred_check
          %p217 = pneg %p79
        $region34: #{_lambda_.3} parent=31 // pred_check_branch
          %219 = sbr.rel (%p217) target = $region36
        $region35: #{_lambda_.3} parent=31 // pred_region
          %221 = dma.done %s213, 98304
        $region36: #{_lambda_.3} parent=31 // pred_fallthru
          _
        %s222 = sand.u32 %s92, 1
        %s223 = scalar_lea.sflag [#allocation5], %s222
        %s224 = sand.u32 %s92, 1
        %s225 = smul.addr %s224, 256
        %s226 = scalar_lea.vmem [#allocation4], %s225
        // Predicated region
        $region37: #{_lambda_.3} parent=31 // pred_check
          %p227 = pneg %p105
        $region38: #{_lambda_.3} parent=31 // pred_check_branch
          %229 = sbr.rel (%p227) target = $region40
        $region39: #{_lambda_.3} parent=31 // pred_region
          %231 = dma.done %s223, 4096
        $region40: #{_lambda_.3} parent=31 // pred_fallthru
          _
        %s232 = smul.u32 2, %s24
        %p233 = scmp.lt.s32.totalorder %s232, 1
        %s234 = scalar_select %p233, %s232, 1
        %s235 = smul.addr %s234, 24
        %s236 = smul.addr %s235, 4
        %s237 = scalar_lea.vmem %s0, %s236
        %p238 = pneg %p53
        %p239 = pneg %p50
        %s240 = sand.u32 %s66, 1
        %s241 = scalar_lea.sflag [#allocation3], %s240
        %s242 = sand.u32 %s66, 1
        %s243 = smul.addr %s242, 6144
        %s244 = scalar_lea.vmem [#allocation2], %s243
        %p245 = pneg %p79
        %p246 = pneg %p76
        %s247 = sand.u32 %s92, 1
        %s248 = scalar_lea.sflag [#allocation5], %s247
        %s249 = sand.u32 %s92, 1
        %s250 = smul.addr %s249, 256
        %s251 = scalar_lea.vmem [#allocation4], %s250
        %p252 = pneg %p105
        %p253 = pneg %p102
        %p254 = pneg %p131
        %p255 = pneg %p128
        %s256 = smul.u32 2, %s24
        %p257 = scmp.lt.s32.totalorder %s256, 1
        %s258 = scalar_select %p257, %s256, 1
        %s259 = smul.addr %s258, 2
        %s260 = smul.addr %s259, 8
        %s261 = scalar_lea.vmem %s3, %s260
        %s262 = smul.u32 2, %s24
        %p263 = scmp.lt.s32.totalorder %s262, 1
        %s264 = scalar_select %p263, %s262, 1
        %s265 = smul.addr %s264, 24
        %s266 = smul.addr %s265, 4
        %s267 = scalar_lea.vmem %s0, %s266
        %s268 = smul.u32 2, %s24
        %s269 = smul.u32 4, %s25
        %s270 = smul.u32 32, %s25
        %s271 = smul.u32 2, %s24
        %p272 = scmp.lt.s32.totalorder %s271, 1
        %s273 = scalar_select %p272, %s271, 1
        %s274 = smul.addr %s273, 2
        %s275 = smul.addr %s274, 8
        %s276 = scalar_lea.vmem %s3, %s275
        %s277 = smul.u32 2, %s24
        %p278 = scmp.eq.s32.totalorder %s25, 0
        // Predicated region
        $region41: #{_lambda_.3} parent=31 // pred_check
          %p279 = pneg %p278
        $region42: #{_lambda_.3} parent=31 // pred_check_branch
          %281 = sbr.rel (%p279) target = $region44
        $region43: #{_lambda_.3} parent=31 // pred_region
          %282 = vst [vmem:[%s276] sm:$0xff] 0.0
          %283 = vst [vmem:[%s276 + $0x8] sm:$0xff] 0.0
          %284 = vst [vmem:[%s276 + $0x10] sm:$0xff] 0.0
          %285 = vst [vmem:[%s276 + $0x18] sm:$0xff] 0.0
        $region44: #{_lambda_.3} parent=31 // pred_fallthru
          _
        %v286 = vld [vmem:[%s267] sm:$0xff]
        %v287 = vld [vmem:[%s267 + $0x8] sm:$0xff]
        %v288 = vld [vmem:[%s267 + $0x10] sm:$0xff]
        %v289 = vld [vmem:[%s267 + $0x18] sm:$0xff]
        %v290 = vld [vmem:[%s267 + $0x20] sm:$0xff]
        %v291 = vld [vmem:[%s267 + $0x28] sm:$0xff]
        %v292 = vld [vmem:[%s267 + $0x30] sm:$0xff]
        %v293 = vld [vmem:[%s267 + $0x38] sm:$0xff]
        %v294 = vld [vmem:[%s267 + $0x40] sm:$0xff]
        %v295 = vld [vmem:[%s267 + $0x48] sm:$0xff]
        %v296 = vld [vmem:[%s267 + $0x50] sm:$0xff]
        %v297 = vld [vmem:[%s267 + $0x58] sm:$0xff]
        %v298 = vld [vmem:[%s267 + $0x60] sm:$0xff]
        %v299 = vld [vmem:[%s267 + $0x68] sm:$0xff]
        %v300 = vld [vmem:[%s267 + $0x70] sm:$0xff]
        %v301 = vld [vmem:[%s267 + $0x78] sm:$0xff]
        %v302 = vld [vmem:[%s267 + $0x80] sm:$0xff]
        %v303 = vld [vmem:[%s267 + $0x88] sm:$0xff]
        %v304 = vld [vmem:[%s267 + $0x90] sm:$0xff]
        %v305 = vld [vmem:[%s267 + $0x98] sm:$0xff]
        %v306 = vld [vmem:[%s267 + $0xa0] sm:$0xff]
        %v307 = vld [vmem:[%s267 + $0xa8] sm:$0xff]
        %v308 = vld [vmem:[%s267 + $0xb0] sm:$0xff]
        %v309 = vld [vmem:[%s267 + $0xb8] sm:$0xff]
        %v310 = vld [vmem:[%s216] sm:$0xff]
        %v311 = vld [vmem:[%s216 + $0x8] sm:$0xff]
        %v312 = vld [vmem:[%s216 + $0x10] sm:$0xff]
        %v313 = vld [vmem:[%s216 + $0x18] sm:$0xff]
        %v314 = vld [vmem:[%s216 + $0x20] sm:$0xff]
        %v315 = vld [vmem:[%s216 + $0x28] sm:$0xff]
        %v316 = vld [vmem:[%s216 + $0x30] sm:$0xff]
        %v317 = vld [vmem:[%s216 + $0x38] sm:$0xff]
        %v318 = vld [vmem:[%s216 + $0x40] sm:$0xff]
        %v319 = vld [vmem:[%s216 + $0x48] sm:$0xff]
        %v320 = vld [vmem:[%s216 + $0x50] sm:$0xff]
        %v321 = vld [vmem:[%s216 + $0x58] sm:$0xff]
        %v322 = vld [vmem:[%s216 + $0x60] sm:$0xff]
        %v323 = vld [vmem:[%s216 + $0x68] sm:$0xff]
        %v324 = vld [vmem:[%s216 + $0x70] sm:$0xff]
        %v325 = vld [vmem:[%s216 + $0x78] sm:$0xff]
        %v326 = vld [vmem:[%s216 + $0x80] sm:$0xff]
        %v327 = vld [vmem:[%s216 + $0x88] sm:$0xff]
        %v328 = vld [vmem:[%s216 + $0x90] sm:$0xff]
        %v329 = vld [vmem:[%s216 + $0x98] sm:$0xff]
        %v330 = vld [vmem:[%s216 + $0xa0] sm:$0xff]
        %v331 = vld [vmem:[%s216 + $0xa8] sm:$0xff]
        %v332 = vld [vmem:[%s216 + $0xb0] sm:$0xff]
        %v333 = vld [vmem:[%s216 + $0xb8] sm:$0xff]
        %v334 = vld [vmem:[%s216 + $0xc0] sm:$0xff]
        %v335 = vld [vmem:[%s216 + $0xc8] sm:$0xff]
        %v336 = vld [vmem:[%s216 + $0xd0] sm:$0xff]
        %v337 = vld [vmem:[%s216 + $0xd8] sm:$0xff]
        %v338 = vld [vmem:[%s216 + $0xe0] sm:$0xff]
        %v339 = vld [vmem:[%s216 + $0xe8] sm:$0xff]
        %v340 = vld [vmem:[%s216 + $0xf0] sm:$0xff]
        %v341 = vld [vmem:[%s216 + $0xf8] sm:$0xff]
        %v342 = vld [vmem:[%s216 + $0x100] sm:$0xff]
        %v343 = vld [vmem:[%s216 + $0x108] sm:$0xff]
        %v344 = vld [vmem:[%s216 + $0x110] sm:$0xff]
        %v345 = vld [vmem:[%s216 + $0x118] sm:$0xff]
        %v346 = vld [vmem:[%s216 + $0x120] sm:$0xff]
        %v347 = vld [vmem:[%s216 + $0x128] sm:$0xff]
        %v348 = vld [vmem:[%s216 + $0x130] sm:$0xff]
        %v349 = vld [vmem:[%s216 + $0x138] sm:$0xff]
        %v350 = vld [vmem:[%s216 + $0x140] sm:$0xff]
        %v351 = vld [vmem:[%s216 + $0x148] sm:$0xff]
        %v352 = vld [vmem:[%s216 + $0x150] sm:$0xff]
        %v353 = vld [vmem:[%s216 + $0x158] sm:$0xff]
        %v354 = vld [vmem:[%s216 + $0x160] sm:$0xff]
        %v355 = vld [vmem:[%s216 + $0x168] sm:$0xff]
        %v356 = vld [vmem:[%s216 + $0x170] sm:$0xff]
        %v357 = vld [vmem:[%s216 + $0x178] sm:$0xff]
        %v358 = vld [vmem:[%s216 + $0x180] sm:$0xff]
        %v359 = vld [vmem:[%s216 + $0x188] sm:$0xff]
        %v360 = vld [vmem:[%s216 + $0x190] sm:$0xff]
        %v361 = vld [vmem:[%s216 + $0x198] sm:$0xff]
        %v362 = vld [vmem:[%s216 + $0x1a0] sm:$0xff]
        %v363 = vld [vmem:[%s216 + $0x1a8] sm:$0xff]
        %v364 = vld [vmem:[%s216 + $0x1b0] sm:$0xff]
        %v365 = vld [vmem:[%s216 + $0x1b8] sm:$0xff]
        %v366 = vld [vmem:[%s216 + $0x1c0] sm:$0xff]
        %v367 = vld [vmem:[%s216 + $0x1c8] sm:$0xff]
        %v368 = vld [vmem:[%s216 + $0x1d0] sm:$0xff]
        %v369 = vld [vmem:[%s216 + $0x1d8] sm:$0xff]
        %v370 = vld [vmem:[%s216 + $0x1e0] sm:$0xff]
        %v371 = vld [vmem:[%s216 + $0x1e8] sm:$0xff]
        %v372 = vld [vmem:[%s216 + $0x1f0] sm:$0xff]
        %v373 = vld [vmem:[%s216 + $0x1f8] sm:$0xff]
        %v374 = vld [vmem:[%s216 + $0x200] sm:$0xff]
        %v375 = vld [vmem:[%s216 + $0x208] sm:$0xff]
        %v376 = vld [vmem:[%s216 + $0x210] sm:$0xff]
        %v377 = vld [vmem:[%s216 + $0x218] sm:$0xff]
        %v378 = vld [vmem:[%s216 + $0x220] sm:$0xff]
        %v379 = vld [vmem:[%s216 + $0x228] sm:$0xff]
        %v380 = vld [vmem:[%s216 + $0x230] sm:$0xff]
        %v381 = vld [vmem:[%s216 + $0x238] sm:$0xff]
        %v382 = vld [vmem:[%s216 + $0x240] sm:$0xff]
        %v383 = vld [vmem:[%s216 + $0x248] sm:$0xff]
        %v384 = vld [vmem:[%s216 + $0x250] sm:$0xff]
        %v385 = vld [vmem:[%s216 + $0x258] sm:$0xff]
        %v386 = vld [vmem:[%s216 + $0x260] sm:$0xff]
        %v387 = vld [vmem:[%s216 + $0x268] sm:$0xff]
        %v388 = vld [vmem:[%s216 + $0x270] sm:$0xff]
        %v389 = vld [vmem:[%s216 + $0x278] sm:$0xff]
        %v390 = vld [vmem:[%s216 + $0x280] sm:$0xff]
        %v391 = vld [vmem:[%s216 + $0x288] sm:$0xff]
        %v392 = vld [vmem:[%s216 + $0x290] sm:$0xff]
        %v393 = vld [vmem:[%s216 + $0x298] sm:$0xff]
        %v394 = vld [vmem:[%s216 + $0x2a0] sm:$0xff]
        %v395 = vld [vmem:[%s216 + $0x2a8] sm:$0xff]
        %v396 = vld [vmem:[%s216 + $0x2b0] sm:$0xff]
        %v397 = vld [vmem:[%s216 + $0x2b8] sm:$0xff]
        %v398 = vld [vmem:[%s216 + $0x2c0] sm:$0xff]
        %v399 = vld [vmem:[%s216 + $0x2c8] sm:$0xff]
        %v400 = vld [vmem:[%s216 + $0x2d0] sm:$0xff]
        %v401 = vld [vmem:[%s216 + $0x2d8] sm:$0xff]
        %v402 = vld [vmem:[%s216 + $0x2e0] sm:$0xff]
        %v403 = vld [vmem:[%s216 + $0x2e8] sm:$0xff]
        %v404 = vld [vmem:[%s216 + $0x2f0] sm:$0xff]
        %v405 = vld [vmem:[%s216 + $0x2f8] sm:$0xff]
        %v406 = vld [vmem:[%s216 + $0x300] sm:$0xff]
        %v407 = vld [vmem:[%s216 + $0x308] sm:$0xff]
        %v408 = vld [vmem:[%s216 + $0x310] sm:$0xff]
        %v409 = vld [vmem:[%s216 + $0x318] sm:$0xff]
        %v410 = vld [vmem:[%s216 + $0x320] sm:$0xff]
        %v411 = vld [vmem:[%s216 + $0x328] sm:$0xff]
        %v412 = vld [vmem:[%s216 + $0x330] sm:$0xff]
        %v413 = vld [vmem:[%s216 + $0x338] sm:$0xff]
        %v414 = vld [vmem:[%s216 + $0x340] sm:$0xff]
        %v415 = vld [vmem:[%s216 + $0x348] sm:$0xff]
        %v416 = vld [vmem:[%s216 + $0x350] sm:$0xff]
        %v417 = vld [vmem:[%s216 + $0x358] sm:$0xff]
        %v418 = vld [vmem:[%s216 + $0x360] sm:$0xff]
        %v419 = vld [vmem:[%s216 + $0x368] sm:$0xff]
        %v420 = vld [vmem:[%s216 + $0x370] sm:$0xff]
        %v421 = vld [vmem:[%s216 + $0x378] sm:$0xff]
        %v422 = vld [vmem:[%s216 + $0x380] sm:$0xff]
        %v423 = vld [vmem:[%s216 + $0x388] sm:$0xff]
        %v424 = vld [vmem:[%s216 + $0x390] sm:$0xff]
        %v425 = vld [vmem:[%s216 + $0x398] sm:$0xff]
        %v426 = vld [vmem:[%s216 + $0x3a0] sm:$0xff]
        %v427 = vld [vmem:[%s216 + $0x3a8] sm:$0xff]
        %v428 = vld [vmem:[%s216 + $0x3b0] sm:$0xff]
        %v429 = vld [vmem:[%s216 + $0x3b8] sm:$0xff]
        %v430 = vld [vmem:[%s216 + $0x3c0] sm:$0xff]
        %v431 = vld [vmem:[%s216 + $0x3c8] sm:$0xff]
        %v432 = vld [vmem:[%s216 + $0x3d0] sm:$0xff]
        %v433 = vld [vmem:[%s216 + $0x3d8] sm:$0xff]
        %v434 = vld [vmem:[%s216 + $0x3e0] sm:$0xff]
        %v435 = vld [vmem:[%s216 + $0x3e8] sm:$0xff]
        %v436 = vld [vmem:[%s216 + $0x3f0] sm:$0xff]
        %v437 = vld [vmem:[%s216 + $0x3f8] sm:$0xff]
        %v438 = vld [vmem:[%s216 + $0x400] sm:$0xff]
        %v439 = vld [vmem:[%s216 + $0x408] sm:$0xff]
        %v440 = vld [vmem:[%s216 + $0x410] sm:$0xff]
        %v441 = vld [vmem:[%s216 + $0x418] sm:$0xff]
        %v442 = vld [vmem:[%s216 + $0x420] sm:$0xff]
        %v443 = vld [vmem:[%s216 + $0x428] sm:$0xff]
        %v444 = vld [vmem:[%s216 + $0x430] sm:$0xff]
        %v445 = vld [vmem:[%s216 + $0x438] sm:$0xff]
        %v446 = vld [vmem:[%s216 + $0x440] sm:$0xff]
        %v447 = vld [vmem:[%s216 + $0x448] sm:$0xff]
        %v448 = vld [vmem:[%s216 + $0x450] sm:$0xff]
        %v449 = vld [vmem:[%s216 + $0x458] sm:$0xff]
        %v450 = vld [vmem:[%s216 + $0x460] sm:$0xff]
        %v451 = vld [vmem:[%s216 + $0x468] sm:$0xff]
        %v452 = vld [vmem:[%s216 + $0x470] sm:$0xff]
        %v453 = vld [vmem:[%s216 + $0x478] sm:$0xff]
        %v454 = vld [vmem:[%s216 + $0x480] sm:$0xff]
        %v455 = vld [vmem:[%s216 + $0x488] sm:$0xff]
        %v456 = vld [vmem:[%s216 + $0x490] sm:$0xff]
        %v457 = vld [vmem:[%s216 + $0x498] sm:$0xff]
        %v458 = vld [vmem:[%s216 + $0x4a0] sm:$0xff]
        %v459 = vld [vmem:[%s216 + $0x4a8] sm:$0xff]
        %v460 = vld [vmem:[%s216 + $0x4b0] sm:$0xff]
        %v461 = vld [vmem:[%s216 + $0x4b8] sm:$0xff]
        %v462 = vld [vmem:[%s216 + $0x4c0] sm:$0xff]
        %v463 = vld [vmem:[%s216 + $0x4c8] sm:$0xff]
        %v464 = vld [vmem:[%s216 + $0x4d0] sm:$0xff]
        %v465 = vld [vmem:[%s216 + $0x4d8] sm:$0xff]
        %v466 = vld [vmem:[%s216 + $0x4e0] sm:$0xff]
        %v467 = vld [vmem:[%s216 + $0x4e8] sm:$0xff]
        %v468 = vld [vmem:[%s216 + $0x4f0] sm:$0xff]
        %v469 = vld [vmem:[%s216 + $0x4f8] sm:$0xff]
        %v470 = vld [vmem:[%s216 + $0x500] sm:$0xff]
        %v471 = vld [vmem:[%s216 + $0x508] sm:$0xff]
        %v472 = vld [vmem:[%s216 + $0x510] sm:$0xff]
        %v473 = vld [vmem:[%s216 + $0x518] sm:$0xff]
        %v474 = vld [vmem:[%s216 + $0x520] sm:$0xff]
        %v475 = vld [vmem:[%s216 + $0x528] sm:$0xff]
        %v476 = vld [vmem:[%s216 + $0x530] sm:$0xff]
        %v477 = vld [vmem:[%s216 + $0x538] sm:$0xff]
        %v478 = vld [vmem:[%s216 + $0x540] sm:$0xff]
        %v479 = vld [vmem:[%s216 + $0x548] sm:$0xff]
        %v480 = vld [vmem:[%s216 + $0x550] sm:$0xff]
        %v481 = vld [vmem:[%s216 + $0x558] sm:$0xff]
        %v482 = vld [vmem:[%s216 + $0x560] sm:$0xff]
        %v483 = vld [vmem:[%s216 + $0x568] sm:$0xff]
        %v484 = vld [vmem:[%s216 + $0x570] sm:$0xff]
        %v485 = vld [vmem:[%s216 + $0x578] sm:$0xff]
        %v486 = vld [vmem:[%s216 + $0x580] sm:$0xff]
        %v487 = vld [vmem:[%s216 + $0x588] sm:$0xff]
        %v488 = vld [vmem:[%s216 + $0x590] sm:$0xff]
        %v489 = vld [vmem:[%s216 + $0x598] sm:$0xff]
        %v490 = vld [vmem:[%s216 + $0x5a0] sm:$0xff]
        %v491 = vld [vmem:[%s216 + $0x5a8] sm:$0xff]
        %v492 = vld [vmem:[%s216 + $0x5b0] sm:$0xff]
        %v493 = vld [vmem:[%s216 + $0x5b8] sm:$0xff]
        %v494 = vld [vmem:[%s216 + $0x5c0] sm:$0xff]
        %v495 = vld [vmem:[%s216 + $0x5c8] sm:$0xff]
        %v496 = vld [vmem:[%s216 + $0x5d0] sm:$0xff]
        %v497 = vld [vmem:[%s216 + $0x5d8] sm:$0xff]
        %v498 = vld [vmem:[%s216 + $0x5e0] sm:$0xff]
        %v499 = vld [vmem:[%s216 + $0x5e8] sm:$0xff]
        %v500 = vld [vmem:[%s216 + $0x5f0] sm:$0xff]
        %v501 = vld [vmem:[%s216 + $0x5f8] sm:$0xff]
        %v502 = vld [vmem:[%s216 + $0x600] sm:$0xff]
        %v503 = vld [vmem:[%s216 + $0x608] sm:$0xff]
        %v504 = vld [vmem:[%s216 + $0x610] sm:$0xff]
        %v505 = vld [vmem:[%s216 + $0x618] sm:$0xff]
        %v506 = vld [vmem:[%s216 + $0x620] sm:$0xff]
        %v507 = vld [vmem:[%s216 + $0x628] sm:$0xff]
        %v508 = vld [vmem:[%s216 + $0x630] sm:$0xff]
        %v509 = vld [vmem:[%s216 + $0x638] sm:$0xff]
        %v510 = vld [vmem:[%s216 + $0x640] sm:$0xff]
        %v511 = vld [vmem:[%s216 + $0x648] sm:$0xff]
        %v512 = vld [vmem:[%s216 + $0x650] sm:$0xff]
        %v513 = vld [vmem:[%s216 + $0x658] sm:$0xff]
        %v514 = vld [vmem:[%s216 + $0x660] sm:$0xff]
        %v515 = vld [vmem:[%s216 + $0x668] sm:$0xff]
        %v516 = vld [vmem:[%s216 + $0x670] sm:$0xff]
        %v517 = vld [vmem:[%s216 + $0x678] sm:$0xff]
        %v518 = vld [vmem:[%s216 + $0x680] sm:$0xff]
        %v519 = vld [vmem:[%s216 + $0x688] sm:$0xff]
        %v520 = vld [vmem:[%s216 + $0x690] sm:$0xff]
        %v521 = vld [vmem:[%s216 + $0x698] sm:$0xff]
        %v522 = vld [vmem:[%s216 + $0x6a0] sm:$0xff]
        %v523 = vld [vmem:[%s216 + $0x6a8] sm:$0xff]
        %v524 = vld [vmem:[%s216 + $0x6b0] sm:$0xff]
        %v525 = vld [vmem:[%s216 + $0x6b8] sm:$0xff]
        %v526 = vld [vmem:[%s216 + $0x6c0] sm:$0xff]
        %v527 = vld [vmem:[%s216 + $0x6c8] sm:$0xff]
        %v528 = vld [vmem:[%s216 + $0x6d0] sm:$0xff]
        %v529 = vld [vmem:[%s216 + $0x6d8] sm:$0xff]
        %v530 = vld [vmem:[%s216 + $0x6e0] sm:$0xff]
        %v531 = vld [vmem:[%s216 + $0x6e8] sm:$0xff]
        %v532 = vld [vmem:[%s216 + $0x6f0] sm:$0xff]
        %v533 = vld [vmem:[%s216 + $0x6f8] sm:$0xff]
        %v534 = vld [vmem:[%s216 + $0x700] sm:$0xff]
        %v535 = vld [vmem:[%s216 + $0x708] sm:$0xff]
        %v536 = vld [vmem:[%s216 + $0x710] sm:$0xff]
        %v537 = vld [vmem:[%s216 + $0x718] sm:$0xff]
        %v538 = vld [vmem:[%s216 + $0x720] sm:$0xff]
        %v539 = vld [vmem:[%s216 + $0x728] sm:$0xff]
        %v540 = vld [vmem:[%s216 + $0x730] sm:$0xff]
        %v541 = vld [vmem:[%s216 + $0x738] sm:$0xff]
        %v542 = vld [vmem:[%s216 + $0x740] sm:$0xff]
        %v543 = vld [vmem:[%s216 + $0x748] sm:$0xff]
        %v544 = vld [vmem:[%s216 + $0x750] sm:$0xff]
        %v545 = vld [vmem:[%s216 + $0x758] sm:$0xff]
        %v546 = vld [vmem:[%s216 + $0x760] sm:$0xff]
        %v547 = vld [vmem:[%s216 + $0x768] sm:$0xff]
        %v548 = vld [vmem:[%s216 + $0x770] sm:$0xff]
        %v549 = vld [vmem:[%s216 + $0x778] sm:$0xff]
        %v550 = vld [vmem:[%s216 + $0x780] sm:$0xff]
        %v551 = vld [vmem:[%s216 + $0x788] sm:$0xff]
        %v552 = vld [vmem:[%s216 + $0x790] sm:$0xff]
        %v553 = vld [vmem:[%s216 + $0x798] sm:$0xff]
        %v554 = vld [vmem:[%s216 + $0x7a0] sm:$0xff]
        %v555 = vld [vmem:[%s216 + $0x7a8] sm:$0xff]
        %v556 = vld [vmem:[%s216 + $0x7b0] sm:$0xff]
        %v557 = vld [vmem:[%s216 + $0x7b8] sm:$0xff]
        %v558 = vld [vmem:[%s216 + $0x7c0] sm:$0xff]
        %v559 = vld [vmem:[%s216 + $0x7c8] sm:$0xff]
        %v560 = vld [vmem:[%s216 + $0x7d0] sm:$0xff]
        %v561 = vld [vmem:[%s216 + $0x7d8] sm:$0xff]
        %v562 = vld [vmem:[%s216 + $0x7e0] sm:$0xff]
        %v563 = vld [vmem:[%s216 + $0x7e8] sm:$0xff]
        %v564 = vld [vmem:[%s216 + $0x7f0] sm:$0xff]
        %v565 = vld [vmem:[%s216 + $0x7f8] sm:$0xff]
        %v566 = vld [vmem:[%s216 + $0x800] sm:$0xff]
        %v567 = vld [vmem:[%s216 + $0x808] sm:$0xff]
        %v568 = vld [vmem:[%s216 + $0x810] sm:$0xff]
        %v569 = vld [vmem:[%s216 + $0x818] sm:$0xff]
        %v570 = vld [vmem:[%s216 + $0x820] sm:$0xff]
        %v571 = vld [vmem:[%s216 + $0x828] sm:$0xff]
        %v572 = vld [vmem:[%s216 + $0x830] sm:$0xff]
        %v573 = vld [vmem:[%s216 + $0x838] sm:$0xff]
        %v574 = vld [vmem:[%s216 + $0x840] sm:$0xff]
        %v575 = vld [vmem:[%s216 + $0x848] sm:$0xff]
        %v576 = vld [vmem:[%s216 + $0x850] sm:$0xff]
        %v577 = vld [vmem:[%s216 + $0x858] sm:$0xff]
        %v578 = vld [vmem:[%s216 + $0x860] sm:$0xff]
        %v579 = vld [vmem:[%s216 + $0x868] sm:$0xff]
        %v580 = vld [vmem:[%s216 + $0x870] sm:$0xff]
        %v581 = vld [vmem:[%s216 + $0x878] sm:$0xff]
        %v582 = vld [vmem:[%s216 + $0x880] sm:$0xff]
        %v583 = vld [vmem:[%s216 + $0x888] sm:$0xff]
        %v584 = vld [vmem:[%s216 + $0x890] sm:$0xff]
        %v585 = vld [vmem:[%s216 + $0x898] sm:$0xff]
        %v586 = vld [vmem:[%s216 + $0x8a0] sm:$0xff]
        %v587 = vld [vmem:[%s216 + $0x8a8] sm:$0xff]
        %v588 = vld [vmem:[%s216 + $0x8b0] sm:$0xff]
        %v589 = vld [vmem:[%s216 + $0x8b8] sm:$0xff]
        %v590 = vld [vmem:[%s216 + $0x8c0] sm:$0xff]
        %v591 = vld [vmem:[%s216 + $0x8c8] sm:$0xff]
        %v592 = vld [vmem:[%s216 + $0x8d0] sm:$0xff]
        %v593 = vld [vmem:[%s216 + $0x8d8] sm:$0xff]
        %v594 = vld [vmem:[%s216 + $0x8e0] sm:$0xff]
        %v595 = vld [vmem:[%s216 + $0x8e8] sm:$0xff]
        %v596 = vld [vmem:[%s216 + $0x8f0] sm:$0xff]
        %v597 = vld [vmem:[%s216 + $0x8f8] sm:$0xff]
        %v598 = vld [vmem:[%s216 + $0x900] sm:$0xff]
        %v599 = vld [vmem:[%s216 + $0x908] sm:$0xff]
        %v600 = vld [vmem:[%s216 + $0x910] sm:$0xff]
        %v601 = vld [vmem:[%s216 + $0x918] sm:$0xff]
        %v602 = vld [vmem:[%s216 + $0x920] sm:$0xff]
        %v603 = vld [vmem:[%s216 + $0x928] sm:$0xff]
        %v604 = vld [vmem:[%s216 + $0x930] sm:$0xff]
        %v605 = vld [vmem:[%s216 + $0x938] sm:$0xff]
        %v606 = vld [vmem:[%s216 + $0x940] sm:$0xff]
        %v607 = vld [vmem:[%s216 + $0x948] sm:$0xff]
        %v608 = vld [vmem:[%s216 + $0x950] sm:$0xff]
        %v609 = vld [vmem:[%s216 + $0x958] sm:$0xff]
        %v610 = vld [vmem:[%s216 + $0x960] sm:$0xff]
        %v611 = vld [vmem:[%s216 + $0x968] sm:$0xff]
        %v612 = vld [vmem:[%s216 + $0x970] sm:$0xff]
        %v613 = vld [vmem:[%s216 + $0x978] sm:$0xff]
        %v614 = vld [vmem:[%s216 + $0x980] sm:$0xff]
        %v615 = vld [vmem:[%s216 + $0x988] sm:$0xff]
        %v616 = vld [vmem:[%s216 + $0x990] sm:$0xff]
        %v617 = vld [vmem:[%s216 + $0x998] sm:$0xff]
        %v618 = vld [vmem:[%s216 + $0x9a0] sm:$0xff]
        %v619 = vld [vmem:[%s216 + $0x9a8] sm:$0xff]
        %v620 = vld [vmem:[%s216 + $0x9b0] sm:$0xff]
        %v621 = vld [vmem:[%s216 + $0x9b8] sm:$0xff]
        %v622 = vld [vmem:[%s216 + $0x9c0] sm:$0xff]
        %v623 = vld [vmem:[%s216 + $0x9c8] sm:$0xff]
        %v624 = vld [vmem:[%s216 + $0x9d0] sm:$0xff]
        %v625 = vld [vmem:[%s216 + $0x9d8] sm:$0xff]
        %v626 = vld [vmem:[%s216 + $0x9e0] sm:$0xff]
        %v627 = vld [vmem:[%s216 + $0x9e8] sm:$0xff]
        %v628 = vld [vmem:[%s216 + $0x9f0] sm:$0xff]
        %v629 = vld [vmem:[%s216 + $0x9f8] sm:$0xff]
        %v630 = vld [vmem:[%s216 + $0xa00] sm:$0xff]
        %v631 = vld [vmem:[%s216 + $0xa08] sm:$0xff]
        %v632 = vld [vmem:[%s216 + $0xa10] sm:$0xff]
        %v633 = vld [vmem:[%s216 + $0xa18] sm:$0xff]
        %v634 = vld [vmem:[%s216 + $0xa20] sm:$0xff]
        %v635 = vld [vmem:[%s216 + $0xa28] sm:$0xff]
        %v636 = vld [vmem:[%s216 + $0xa30] sm:$0xff]
        %v637 = vld [vmem:[%s216 + $0xa38] sm:$0xff]
        %v638 = vld [vmem:[%s216 + $0xa40] sm:$0xff]
        %v639 = vld [vmem:[%s216 + $0xa48] sm:$0xff]
        %v640 = vld [vmem:[%s216 + $0xa50] sm:$0xff]
        %v641 = vld [vmem:[%s216 + $0xa58] sm:$0xff]
        %v642 = vld [vmem:[%s216 + $0xa60] sm:$0xff]
        %v643 = vld [vmem:[%s216 + $0xa68] sm:$0xff]
        %v644 = vld [vmem:[%s216 + $0xa70] sm:$0xff]
        %v645 = vld [vmem:[%s216 + $0xa78] sm:$0xff]
        %v646 = vld [vmem:[%s216 + $0xa80] sm:$0xff]
        %v647 = vld [vmem:[%s216 + $0xa88] sm:$0xff]
        %v648 = vld [vmem:[%s216 + $0xa90] sm:$0xff]
        %v649 = vld [vmem:[%s216 + $0xa98] sm:$0xff]
        %v650 = vld [vmem:[%s216 + $0xaa0] sm:$0xff]
        %v651 = vld [vmem:[%s216 + $0xaa8] sm:$0xff]
        %v652 = vld [vmem:[%s216 + $0xab0] sm:$0xff]
        %v653 = vld [vmem:[%s216 + $0xab8] sm:$0xff]
        %v654 = vld [vmem:[%s216 + $0xac0] sm:$0xff]
        %v655 = vld [vmem:[%s216 + $0xac8] sm:$0xff]
        %v656 = vld [vmem:[%s216 + $0xad0] sm:$0xff]
        %v657 = vld [vmem:[%s216 + $0xad8] sm:$0xff]
        %v658 = vld [vmem:[%s216 + $0xae0] sm:$0xff]
        %v659 = vld [vmem:[%s216 + $0xae8] sm:$0xff]
        %v660 = vld [vmem:[%s216 + $0xaf0] sm:$0xff]
        %v661 = vld [vmem:[%s216 + $0xaf8] sm:$0xff]
        %v662 = vld [vmem:[%s216 + $0xb00] sm:$0xff]
        %v663 = vld [vmem:[%s216 + $0xb08] sm:$0xff]
        %v664 = vld [vmem:[%s216 + $0xb10] sm:$0xff]
        %v665 = vld [vmem:[%s216 + $0xb18] sm:$0xff]
        %v666 = vld [vmem:[%s216 + $0xb20] sm:$0xff]
        %v667 = vld [vmem:[%s216 + $0xb28] sm:$0xff]
        %v668 = vld [vmem:[%s216 + $0xb30] sm:$0xff]
        %v669 = vld [vmem:[%s216 + $0xb38] sm:$0xff]
        %v670 = vld [vmem:[%s216 + $0xb40] sm:$0xff]
        %v671 = vld [vmem:[%s216 + $0xb48] sm:$0xff]
        %v672 = vld [vmem:[%s216 + $0xb50] sm:$0xff]
        %v673 = vld [vmem:[%s216 + $0xb58] sm:$0xff]
        %v674 = vld [vmem:[%s216 + $0xb60] sm:$0xff]
        %v675 = vld [vmem:[%s216 + $0xb68] sm:$0xff]
        %v676 = vld [vmem:[%s216 + $0xb70] sm:$0xff]
        %v677 = vld [vmem:[%s216 + $0xb78] sm:$0xff]
        %v678 = vld [vmem:[%s216 + $0xb80] sm:$0xff]
        %v679 = vld [vmem:[%s216 + $0xb88] sm:$0xff]
        %v680 = vld [vmem:[%s216 + $0xb90] sm:$0xff]
        %v681 = vld [vmem:[%s216 + $0xb98] sm:$0xff]
        %v682 = vld [vmem:[%s216 + $0xba0] sm:$0xff]
        %v683 = vld [vmem:[%s216 + $0xba8] sm:$0xff]
        %v684 = vld [vmem:[%s216 + $0xbb0] sm:$0xff]
        %v685 = vld [vmem:[%s216 + $0xbb8] sm:$0xff]
        %v686 = vld [vmem:[%s216 + $0xbc0] sm:$0xff]
        %v687 = vld [vmem:[%s216 + $0xbc8] sm:$0xff]
        %v688 = vld [vmem:[%s216 + $0xbd0] sm:$0xff]
        %v689 = vld [vmem:[%s216 + $0xbd8] sm:$0xff]
        %v690 = vld [vmem:[%s216 + $0xbe0] sm:$0xff]
        %v691 = vld [vmem:[%s216 + $0xbe8] sm:$0xff]
        %v692 = vld [vmem:[%s216 + $0xbf0] sm:$0xff]
        %v693 = vld [vmem:[%s216 + $0xbf8] sm:$0xff]
        %v694 = vld [vmem:[%s216 + $0xc00] sm:$0xff]
        %v695 = vld [vmem:[%s216 + $0xc08] sm:$0xff]
        %v696 = vld [vmem:[%s216 + $0xc10] sm:$0xff]
        %v697 = vld [vmem:[%s216 + $0xc18] sm:$0xff]
        %v698 = vld [vmem:[%s216 + $0xc20] sm:$0xff]
        %v699 = vld [vmem:[%s216 + $0xc28] sm:$0xff]
        %v700 = vld [vmem:[%s216 + $0xc30] sm:$0xff]
        %v701 = vld [vmem:[%s216 + $0xc38] sm:$0xff]
        %v702 = vld [vmem:[%s216 + $0xc40] sm:$0xff]
        %v703 = vld [vmem:[%s216 + $0xc48] sm:$0xff]
        %v704 = vld [vmem:[%s216 + $0xc50] sm:$0xff]
        %v705 = vld [vmem:[%s216 + $0xc58] sm:$0xff]
        %v706 = vld [vmem:[%s216 + $0xc60] sm:$0xff]
        %v707 = vld [vmem:[%s216 + $0xc68] sm:$0xff]
        %v708 = vld [vmem:[%s216 + $0xc70] sm:$0xff]
        %v709 = vld [vmem:[%s216 + $0xc78] sm:$0xff]
        %v710 = vld [vmem:[%s216 + $0xc80] sm:$0xff]
        %v711 = vld [vmem:[%s216 + $0xc88] sm:$0xff]
        %v712 = vld [vmem:[%s216 + $0xc90] sm:$0xff]
        %v713 = vld [vmem:[%s216 + $0xc98] sm:$0xff]
        %v714 = vld [vmem:[%s216 + $0xca0] sm:$0xff]
        %v715 = vld [vmem:[%s216 + $0xca8] sm:$0xff]
        %v716 = vld [vmem:[%s216 + $0xcb0] sm:$0xff]
        %v717 = vld [vmem:[%s216 + $0xcb8] sm:$0xff]
        %v718 = vld [vmem:[%s216 + $0xcc0] sm:$0xff]
        %v719 = vld [vmem:[%s216 + $0xcc8] sm:$0xff]
        %v720 = vld [vmem:[%s216 + $0xcd0] sm:$0xff]
        %v721 = vld [vmem:[%s216 + $0xcd8] sm:$0xff]
        %v722 = vld [vmem:[%s216 + $0xce0] sm:$0xff]
        %v723 = vld [vmem:[%s216 + $0xce8] sm:$0xff]
        %v724 = vld [vmem:[%s216 + $0xcf0] sm:$0xff]
        %v725 = vld [vmem:[%s216 + $0xcf8] sm:$0xff]
        %v726 = vld [vmem:[%s216 + $0xd00] sm:$0xff]
        %v727 = vld [vmem:[%s216 + $0xd08] sm:$0xff]
        %v728 = vld [vmem:[%s216 + $0xd10] sm:$0xff]
        %v729 = vld [vmem:[%s216 + $0xd18] sm:$0xff]
        %v730 = vld [vmem:[%s216 + $0xd20] sm:$0xff]
        %v731 = vld [vmem:[%s216 + $0xd28] sm:$0xff]
        %v732 = vld [vmem:[%s216 + $0xd30] sm:$0xff]
        %v733 = vld [vmem:[%s216 + $0xd38] sm:$0xff]
        %v734 = vld [vmem:[%s216 + $0xd40] sm:$0xff]
        %v735 = vld [vmem:[%s216 + $0xd48] sm:$0xff]
        %v736 = vld [vmem:[%s216 + $0xd50] sm:$0xff]
        %v737 = vld [vmem:[%s216 + $0xd58] sm:$0xff]
        %v738 = vld [vmem:[%s216 + $0xd60] sm:$0xff]
        %v739 = vld [vmem:[%s216 + $0xd68] sm:$0xff]
        %v740 = vld [vmem:[%s216 + $0xd70] sm:$0xff]
        %v741 = vld [vmem:[%s216 + $0xd78] sm:$0xff]
        %v742 = vld [vmem:[%s216 + $0xd80] sm:$0xff]
        %v743 = vld [vmem:[%s216 + $0xd88] sm:$0xff]
        %v744 = vld [vmem:[%s216 + $0xd90] sm:$0xff]
        %v745 = vld [vmem:[%s216 + $0xd98] sm:$0xff]
        %v746 = vld [vmem:[%s216 + $0xda0] sm:$0xff]
        %v747 = vld [vmem:[%s216 + $0xda8] sm:$0xff]
        %v748 = vld [vmem:[%s216 + $0xdb0] sm:$0xff]
        %v749 = vld [vmem:[%s216 + $0xdb8] sm:$0xff]
        %v750 = vld [vmem:[%s216 + $0xdc0] sm:$0xff]
        %v751 = vld [vmem:[%s216 + $0xdc8] sm:$0xff]
        %v752 = vld [vmem:[%s216 + $0xdd0] sm:$0xff]
        %v753 = vld [vmem:[%s216 + $0xdd8] sm:$0xff]
        %v754 = vld [vmem:[%s216 + $0xde0] sm:$0xff]
        %v755 = vld [vmem:[%s216 + $0xde8] sm:$0xff]
        %v756 = vld [vmem:[%s216 + $0xdf0] sm:$0xff]
        %v757 = vld [vmem:[%s216 + $0xdf8] sm:$0xff]
        %v758 = vld [vmem:[%s216 + $0xe00] sm:$0xff]
        %v759 = vld [vmem:[%s216 + $0xe08] sm:$0xff]
        %v760 = vld [vmem:[%s216 + $0xe10] sm:$0xff]
        %v761 = vld [vmem:[%s216 + $0xe18] sm:$0xff]
        %v762 = vld [vmem:[%s216 + $0xe20] sm:$0xff]
        %v763 = vld [vmem:[%s216 + $0xe28] sm:$0xff]
        %v764 = vld [vmem:[%s216 + $0xe30] sm:$0xff]
        %v765 = vld [vmem:[%s216 + $0xe38] sm:$0xff]
        %v766 = vld [vmem:[%s216 + $0xe40] sm:$0xff]
        %v767 = vld [vmem:[%s216 + $0xe48] sm:$0xff]
        %v768 = vld [vmem:[%s216 + $0xe50] sm:$0xff]
        %v769 = vld [vmem:[%s216 + $0xe58] sm:$0xff]
        %v770 = vld [vmem:[%s216 + $0xe60] sm:$0xff]
        %v771 = vld [vmem:[%s216 + $0xe68] sm:$0xff]
        %v772 = vld [vmem:[%s216 + $0xe70] sm:$0xff]
        %v773 = vld [vmem:[%s216 + $0xe78] sm:$0xff]
        %v774 = vld [vmem:[%s216 + $0xe80] sm:$0xff]
        %v775 = vld [vmem:[%s216 + $0xe88] sm:$0xff]
        %v776 = vld [vmem:[%s216 + $0xe90] sm:$0xff]
        %v777 = vld [vmem:[%s216 + $0xe98] sm:$0xff]
        %v778 = vld [vmem:[%s216 + $0xea0] sm:$0xff]
        %v779 = vld [vmem:[%s216 + $0xea8] sm:$0xff]
        %v780 = vld [vmem:[%s216 + $0xeb0] sm:$0xff]
        %v781 = vld [vmem:[%s216 + $0xeb8] sm:$0xff]
        %v782 = vld [vmem:[%s216 + $0xec0] sm:$0xff]
        %v783 = vld [vmem:[%s216 + $0xec8] sm:$0xff]
        %v784 = vld [vmem:[%s216 + $0xed0] sm:$0xff]
        %v785 = vld [vmem:[%s216 + $0xed8] sm:$0xff]
        %v786 = vld [vmem:[%s216 + $0xee0] sm:$0xff]
        %v787 = vld [vmem:[%s216 + $0xee8] sm:$0xff]
        %v788 = vld [vmem:[%s216 + $0xef0] sm:$0xff]
        %v789 = vld [vmem:[%s216 + $0xef8] sm:$0xff]
        %v790 = vld [vmem:[%s216 + $0xf00] sm:$0xff]
        %v791 = vld [vmem:[%s216 + $0xf08] sm:$0xff]
        %v792 = vld [vmem:[%s216 + $0xf10] sm:$0xff]
        %v793 = vld [vmem:[%s216 + $0xf18] sm:$0xff]
        %v794 = vld [vmem:[%s216 + $0xf20] sm:$0xff]
        %v795 = vld [vmem:[%s216 + $0xf28] sm:$0xff]
        %v796 = vld [vmem:[%s216 + $0xf30] sm:$0xff]
        %v797 = vld [vmem:[%s216 + $0xf38] sm:$0xff]
        %v798 = vld [vmem:[%s216 + $0xf40] sm:$0xff]
        %v799 = vld [vmem:[%s216 + $0xf48] sm:$0xff]
        %v800 = vld [vmem:[%s216 + $0xf50] sm:$0xff]
        %v801 = vld [vmem:[%s216 + $0xf58] sm:$0xff]
        %v802 = vld [vmem:[%s216 + $0xf60] sm:$0xff]
        %v803 = vld [vmem:[%s216 + $0xf68] sm:$0xff]
        %v804 = vld [vmem:[%s216 + $0xf70] sm:$0xff]
        %v805 = vld [vmem:[%s216 + $0xf78] sm:$0xff]
        %v806 = vld [vmem:[%s216 + $0xf80] sm:$0xff]
        %v807 = vld [vmem:[%s216 + $0xf88] sm:$0xff]
        %v808 = vld [vmem:[%s216 + $0xf90] sm:$0xff]
        %v809 = vld [vmem:[%s216 + $0xf98] sm:$0xff]
        %v810 = vld [vmem:[%s216 + $0xfa0] sm:$0xff]
        %v811 = vld [vmem:[%s216 + $0xfa8] sm:$0xff]
        %v812 = vld [vmem:[%s216 + $0xfb0] sm:$0xff]
        %v813 = vld [vmem:[%s216 + $0xfb8] sm:$0xff]
        %v814 = vld [vmem:[%s216 + $0xfc0] sm:$0xff]
        %v815 = vld [vmem:[%s216 + $0xfc8] sm:$0xff]
        %v816 = vld [vmem:[%s216 + $0xfd0] sm:$0xff]
        %v817 = vld [vmem:[%s216 + $0xfd8] sm:$0xff]
        %v818 = vld [vmem:[%s216 + $0xfe0] sm:$0xff]
        %v819 = vld [vmem:[%s216 + $0xfe8] sm:$0xff]
        %v820 = vld [vmem:[%s216 + $0xff0] sm:$0xff]
        %v821 = vld [vmem:[%s216 + $0xff8] sm:$0xff]
        %v822 = vld [vmem:[%s216 + $0x1000] sm:$0xff]
        %v823 = vld [vmem:[%s216 + $0x1008] sm:$0xff]
        %v824 = vld [vmem:[%s216 + $0x1010] sm:$0xff]
        %v825 = vld [vmem:[%s216 + $0x1018] sm:$0xff]
        %v826 = vld [vmem:[%s216 + $0x1020] sm:$0xff]
        %v827 = vld [vmem:[%s216 + $0x1028] sm:$0xff]
        %v828 = vld [vmem:[%s216 + $0x1030] sm:$0xff]
        %v829 = vld [vmem:[%s216 + $0x1038] sm:$0xff]
        %v830 = vld [vmem:[%s216 + $0x1040] sm:$0xff]
        %v831 = vld [vmem:[%s216 + $0x1048] sm:$0xff]
        %v832 = vld [vmem:[%s216 + $0x1050] sm:$0xff]
        %v833 = vld [vmem:[%s216 + $0x1058] sm:$0xff]
        %v834 = vld [vmem:[%s216 + $0x1060] sm:$0xff]
        %v835 = vld [vmem:[%s216 + $0x1068] sm:$0xff]
        %v836 = vld [vmem:[%s216 + $0x1070] sm:$0xff]
        %v837 = vld [vmem:[%s216 + $0x1078] sm:$0xff]
        %v838 = vld [vmem:[%s216 + $0x1080] sm:$0xff]
        %v839 = vld [vmem:[%s216 + $0x1088] sm:$0xff]
        %v840 = vld [vmem:[%s216 + $0x1090] sm:$0xff]
        %v841 = vld [vmem:[%s216 + $0x1098] sm:$0xff]
        %v842 = vld [vmem:[%s216 + $0x10a0] sm:$0xff]
        %v843 = vld [vmem:[%s216 + $0x10a8] sm:$0xff]
        %v844 = vld [vmem:[%s216 + $0x10b0] sm:$0xff]
        %v845 = vld [vmem:[%s216 + $0x10b8] sm:$0xff]
        %v846 = vld [vmem:[%s216 + $0x10c0] sm:$0xff]
        %v847 = vld [vmem:[%s216 + $0x10c8] sm:$0xff]
        %v848 = vld [vmem:[%s216 + $0x10d0] sm:$0xff]
        %v849 = vld [vmem:[%s216 + $0x10d8] sm:$0xff]
        %v850 = vld [vmem:[%s216 + $0x10e0] sm:$0xff]
        %v851 = vld [vmem:[%s216 + $0x10e8] sm:$0xff]
        %v852 = vld [vmem:[%s216 + $0x10f0] sm:$0xff]
        %v853 = vld [vmem:[%s216 + $0x10f8] sm:$0xff]
        %v854 = vld [vmem:[%s216 + $0x1100] sm:$0xff]
        %v855 = vld [vmem:[%s216 + $0x1108] sm:$0xff]
        %v856 = vld [vmem:[%s216 + $0x1110] sm:$0xff]
        %v857 = vld [vmem:[%s216 + $0x1118] sm:$0xff]
        %v858 = vld [vmem:[%s216 + $0x1120] sm:$0xff]
        %v859 = vld [vmem:[%s216 + $0x1128] sm:$0xff]
        %v860 = vld [vmem:[%s216 + $0x1130] sm:$0xff]
        %v861 = vld [vmem:[%s216 + $0x1138] sm:$0xff]
        %v862 = vld [vmem:[%s216 + $0x1140] sm:$0xff]
        %v863 = vld [vmem:[%s216 + $0x1148] sm:$0xff]
        %v864 = vld [vmem:[%s216 + $0x1150] sm:$0xff]
        %v865 = vld [vmem:[%s216 + $0x1158] sm:$0xff]
        %v866 = vld [vmem:[%s216 + $0x1160] sm:$0xff]
        %v867 = vld [vmem:[%s216 + $0x1168] sm:$0xff]
        %v868 = vld [vmem:[%s216 + $0x1170] sm:$0xff]
        %v869 = vld [vmem:[%s216 + $0x1178] sm:$0xff]
        %v870 = vld [vmem:[%s216 + $0x1180] sm:$0xff]
        %v871 = vld [vmem:[%s216 + $0x1188] sm:$0xff]
        %v872 = vld [vmem:[%s216 + $0x1190] sm:$0xff]
        %v873 = vld [vmem:[%s216 + $0x1198] sm:$0xff]
        %v874 = vld [vmem:[%s216 + $0x11a0] sm:$0xff]
        %v875 = vld [vmem:[%s216 + $0x11a8] sm:$0xff]
        %v876 = vld [vmem:[%s216 + $0x11b0] sm:$0xff]
        %v877 = vld [vmem:[%s216 + $0x11b8] sm:$0xff]
        %v878 = vld [vmem:[%s216 + $0x11c0] sm:$0xff]
        %v879 = vld [vmem:[%s216 + $0x11c8] sm:$0xff]
        %v880 = vld [vmem:[%s216 + $0x11d0] sm:$0xff]
        %v881 = vld [vmem:[%s216 + $0x11d8] sm:$0xff]
        %v882 = vld [vmem:[%s216 + $0x11e0] sm:$0xff]
        %v883 = vld [vmem:[%s216 + $0x11e8] sm:$0xff]
        %v884 = vld [vmem:[%s216 + $0x11f0] sm:$0xff]
        %v885 = vld [vmem:[%s216 + $0x11f8] sm:$0xff]
        %v886 = vld [vmem:[%s216 + $0x1200] sm:$0xff]
        %v887 = vld [vmem:[%s216 + $0x1208] sm:$0xff]
        %v888 = vld [vmem:[%s216 + $0x1210] sm:$0xff]
        %v889 = vld [vmem:[%s216 + $0x1218] sm:$0xff]
        %v890 = vld [vmem:[%s216 + $0x1220] sm:$0xff]
        %v891 = vld [vmem:[%s216 + $0x1228] sm:$0xff]
        %v892 = vld [vmem:[%s216 + $0x1230] sm:$0xff]
        %v893 = vld [vmem:[%s216 + $0x1238] sm:$0xff]
        %v894 = vld [vmem:[%s216 + $0x1240] sm:$0xff]
        %v895 = vld [vmem:[%s216 + $0x1248] sm:$0xff]
        %v896 = vld [vmem:[%s216 + $0x1250] sm:$0xff]
        %v897 = vld [vmem:[%s216 + $0x1258] sm:$0xff]
        %v898 = vld [vmem:[%s216 + $0x1260] sm:$0xff]
        %v899 = vld [vmem:[%s216 + $0x1268] sm:$0xff]
        %v900 = vld [vmem:[%s216 + $0x1270] sm:$0xff]
        %v901 = vld [vmem:[%s216 + $0x1278] sm:$0xff]
        %v902 = vld [vmem:[%s216 + $0x1280] sm:$0xff]
        %v903 = vld [vmem:[%s216 + $0x1288] sm:$0xff]
        %v904 = vld [vmem:[%s216 + $0x1290] sm:$0xff]
        %v905 = vld [vmem:[%s216 + $0x1298] sm:$0xff]
        %v906 = vld [vmem:[%s216 + $0x12a0] sm:$0xff]
        %v907 = vld [vmem:[%s216 + $0x12a8] sm:$0xff]
        %v908 = vld [vmem:[%s216 + $0x12b0] sm:$0xff]
        %v909 = vld [vmem:[%s216 + $0x12b8] sm:$0xff]
        %v910 = vld [vmem:[%s216 + $0x12c0] sm:$0xff]
        %v911 = vld [vmem:[%s216 + $0x12c8] sm:$0xff]
        %v912 = vld [vmem:[%s216 + $0x12d0] sm:$0xff]
        %v913 = vld [vmem:[%s216 + $0x12d8] sm:$0xff]
        %v914 = vld [vmem:[%s216 + $0x12e0] sm:$0xff]
        %v915 = vld [vmem:[%s216 + $0x12e8] sm:$0xff]
        %v916 = vld [vmem:[%s216 + $0x12f0] sm:$0xff]
        %v917 = vld [vmem:[%s216 + $0x12f8] sm:$0xff]
        %v918 = vld [vmem:[%s216 + $0x1300] sm:$0xff]
        %v919 = vld [vmem:[%s216 + $0x1308] sm:$0xff]
        %v920 = vld [vmem:[%s216 + $0x1310] sm:$0xff]
        %v921 = vld [vmem:[%s216 + $0x1318] sm:$0xff]
        %v922 = vld [vmem:[%s216 + $0x1320] sm:$0xff]
        %v923 = vld [vmem:[%s216 + $0x1328] sm:$0xff]
        %v924 = vld [vmem:[%s216 + $0x1330] sm:$0xff]
        %v925 = vld [vmem:[%s216 + $0x1338] sm:$0xff]
        %v926 = vld [vmem:[%s216 + $0x1340] sm:$0xff]
        %v927 = vld [vmem:[%s216 + $0x1348] sm:$0xff]
        %v928 = vld [vmem:[%s216 + $0x1350] sm:$0xff]
        %v929 = vld [vmem:[%s216 + $0x1358] sm:$0xff]
        %v930 = vld [vmem:[%s216 + $0x1360] sm:$0xff]
        %v931 = vld [vmem:[%s216 + $0x1368] sm:$0xff]
        %v932 = vld [vmem:[%s216 + $0x1370] sm:$0xff]
        %v933 = vld [vmem:[%s216 + $0x1378] sm:$0xff]
        %v934 = vld [vmem:[%s216 + $0x1380] sm:$0xff]
        %v935 = vld [vmem:[%s216 + $0x1388] sm:$0xff]
        %v936 = vld [vmem:[%s216 + $0x1390] sm:$0xff]
        %v937 = vld [vmem:[%s216 + $0x1398] sm:$0xff]
        %v938 = vld [vmem:[%s216 + $0x13a0] sm:$0xff]
        %v939 = vld [vmem:[%s216 + $0x13a8] sm:$0xff]
        %v940 = vld [vmem:[%s216 + $0x13b0] sm:$0xff]
        %v941 = vld [vmem:[%s216 + $0x13b8] sm:$0xff]
        %v942 = vld [vmem:[%s216 + $0x13c0] sm:$0xff]
        %v943 = vld [vmem:[%s216 + $0x13c8] sm:$0xff]
        %v944 = vld [vmem:[%s216 + $0x13d0] sm:$0xff]
        %v945 = vld [vmem:[%s216 + $0x13d8] sm:$0xff]
        %v946 = vld [vmem:[%s216 + $0x13e0] sm:$0xff]
        %v947 = vld [vmem:[%s216 + $0x13e8] sm:$0xff]
        %v948 = vld [vmem:[%s216 + $0x13f0] sm:$0xff]
        %v949 = vld [vmem:[%s216 + $0x13f8] sm:$0xff]
        %v950 = vld [vmem:[%s216 + $0x1400] sm:$0xff]
        %v951 = vld [vmem:[%s216 + $0x1408] sm:$0xff]
        %v952 = vld [vmem:[%s216 + $0x1410] sm:$0xff]
        %v953 = vld [vmem:[%s216 + $0x1418] sm:$0xff]
        %v954 = vld [vmem:[%s216 + $0x1420] sm:$0xff]
        %v955 = vld [vmem:[%s216 + $0x1428] sm:$0xff]
        %v956 = vld [vmem:[%s216 + $0x1430] sm:$0xff]
        %v957 = vld [vmem:[%s216 + $0x1438] sm:$0xff]
        %v958 = vld [vmem:[%s216 + $0x1440] sm:$0xff]
        %v959 = vld [vmem:[%s216 + $0x1448] sm:$0xff]
        %v960 = vld [vmem:[%s216 + $0x1450] sm:$0xff]
        %v961 = vld [vmem:[%s216 + $0x1458] sm:$0xff]
        %v962 = vld [vmem:[%s216 + $0x1460] sm:$0xff]
        %v963 = vld [vmem:[%s216 + $0x1468] sm:$0xff]
        %v964 = vld [vmem:[%s216 + $0x1470] sm:$0xff]
        %v965 = vld [vmem:[%s216 + $0x1478] sm:$0xff]
        %v966 = vld [vmem:[%s216 + $0x1480] sm:$0xff]
        %v967 = vld [vmem:[%s216 + $0x1488] sm:$0xff]
        %v968 = vld [vmem:[%s216 + $0x1490] sm:$0xff]
        %v969 = vld [vmem:[%s216 + $0x1498] sm:$0xff]
        %v970 = vld [vmem:[%s216 + $0x14a0] sm:$0xff]
        %v971 = vld [vmem:[%s216 + $0x14a8] sm:$0xff]
        %v972 = vld [vmem:[%s216 + $0x14b0] sm:$0xff]
        %v973 = vld [vmem:[%s216 + $0x14b8] sm:$0xff]
        %v974 = vld [vmem:[%s216 + $0x14c0] sm:$0xff]
        %v975 = vld [vmem:[%s216 + $0x14c8] sm:$0xff]
        %v976 = vld [vmem:[%s216 + $0x14d0] sm:$0xff]
        %v977 = vld [vmem:[%s216 + $0x14d8] sm:$0xff]
        %v978 = vld [vmem:[%s216 + $0x14e0] sm:$0xff]
        %v979 = vld [vmem:[%s216 + $0x14e8] sm:$0xff]
        %v980 = vld [vmem:[%s216 + $0x14f0] sm:$0xff]
        %v981 = vld [vmem:[%s216 + $0x14f8] sm:$0xff]
        %v982 = vld [vmem:[%s216 + $0x1500] sm:$0xff]
        %v983 = vld [vmem:[%s216 + $0x1508] sm:$0xff]
        %v984 = vld [vmem:[%s216 + $0x1510] sm:$0xff]
        %v985 = vld [vmem:[%s216 + $0x1518] sm:$0xff]
        %v986 = vld [vmem:[%s216 + $0x1520] sm:$0xff]
        %v987 = vld [vmem:[%s216 + $0x1528] sm:$0xff]
        %v988 = vld [vmem:[%s216 + $0x1530] sm:$0xff]
        %v989 = vld [vmem:[%s216 + $0x1538] sm:$0xff]
        %v990 = vld [vmem:[%s216 + $0x1540] sm:$0xff]
        %v991 = vld [vmem:[%s216 + $0x1548] sm:$0xff]
        %v992 = vld [vmem:[%s216 + $0x1550] sm:$0xff]
        %v993 = vld [vmem:[%s216 + $0x1558] sm:$0xff]
        %v994 = vld [vmem:[%s216 + $0x1560] sm:$0xff]
        %v995 = vld [vmem:[%s216 + $0x1568] sm:$0xff]
        %v996 = vld [vmem:[%s216 + $0x1570] sm:$0xff]
        %v997 = vld [vmem:[%s216 + $0x1578] sm:$0xff]
        %v998 = vld [vmem:[%s216 + $0x1580] sm:$0xff]
        %v999 = vld [vmem:[%s216 + $0x1588] sm:$0xff]
        %v1000 = vld [vmem:[%s216 + $0x1590] sm:$0xff]
        %v1001 = vld [vmem:[%s216 + $0x1598] sm:$0xff]
        %v1002 = vld [vmem:[%s216 + $0x15a0] sm:$0xff]
        %v1003 = vld [vmem:[%s216 + $0x15a8] sm:$0xff]
        %v1004 = vld [vmem:[%s216 + $0x15b0] sm:$0xff]
        %v1005 = vld [vmem:[%s216 + $0x15b8] sm:$0xff]
        %v1006 = vld [vmem:[%s216 + $0x15c0] sm:$0xff]
        %v1007 = vld [vmem:[%s216 + $0x15c8] sm:$0xff]
        %v1008 = vld [vmem:[%s216 + $0x15d0] sm:$0xff]
        %v1009 = vld [vmem:[%s216 + $0x15d8] sm:$0xff]
        %v1010 = vld [vmem:[%s216 + $0x15e0] sm:$0xff]
        %v1011 = vld [vmem:[%s216 + $0x15e8] sm:$0xff]
        %v1012 = vld [vmem:[%s216 + $0x15f0] sm:$0xff]
        %v1013 = vld [vmem:[%s216 + $0x15f8] sm:$0xff]
        %v1014 = vld [vmem:[%s216 + $0x1600] sm:$0xff]
        %v1015 = vld [vmem:[%s216 + $0x1608] sm:$0xff]
        %v1016 = vld [vmem:[%s216 + $0x1610] sm:$0xff]
        %v1017 = vld [vmem:[%s216 + $0x1618] sm:$0xff]
        %v1018 = vld [vmem:[%s216 + $0x1620] sm:$0xff]
        %v1019 = vld [vmem:[%s216 + $0x1628] sm:$0xff]
        %v1020 = vld [vmem:[%s216 + $0x1630] sm:$0xff]
        %v1021 = vld [vmem:[%s216 + $0x1638] sm:$0xff]
        %v1022 = vld [vmem:[%s216 + $0x1640] sm:$0xff]
        %v1023 = vld [vmem:[%s216 + $0x1648] sm:$0xff]
        %v1024 = vld [vmem:[%s216 + $0x1650] sm:$0xff]
        %v1025 = vld [vmem:[%s216 + $0x1658] sm:$0xff]
        %v1026 = vld [vmem:[%s216 + $0x1660] sm:$0xff]
        %v1027 = vld [vmem:[%s216 + $0x1668] sm:$0xff]
        %v1028 = vld [vmem:[%s216 + $0x1670] sm:$0xff]
        %v1029 = vld [vmem:[%s216 + $0x1678] sm:$0xff]
        %v1030 = vld [vmem:[%s216 + $0x1680] sm:$0xff]
        %v1031 = vld [vmem:[%s216 + $0x1688] sm:$0xff]
        %v1032 = vld [vmem:[%s216 + $0x1690] sm:$0xff]
        %v1033 = vld [vmem:[%s216 + $0x1698] sm:$0xff]
        %v1034 = vld [vmem:[%s216 + $0x16a0] sm:$0xff]
        %v1035 = vld [vmem:[%s216 + $0x16a8] sm:$0xff]
        %v1036 = vld [vmem:[%s216 + $0x16b0] sm:$0xff]
        %v1037 = vld [vmem:[%s216 + $0x16b8] sm:$0xff]
        %v1038 = vld [vmem:[%s216 + $0x16c0] sm:$0xff]
        %v1039 = vld [vmem:[%s216 + $0x16c8] sm:$0xff]
        %v1040 = vld [vmem:[%s216 + $0x16d0] sm:$0xff]
        %v1041 = vld [vmem:[%s216 + $0x16d8] sm:$0xff]
        %v1042 = vld [vmem:[%s216 + $0x16e0] sm:$0xff]
        %v1043 = vld [vmem:[%s216 + $0x16e8] sm:$0xff]
        %v1044 = vld [vmem:[%s216 + $0x16f0] sm:$0xff]
        %v1045 = vld [vmem:[%s216 + $0x16f8] sm:$0xff]
        %v1046 = vld [vmem:[%s216 + $0x1700] sm:$0xff]
        %v1047 = vld [vmem:[%s216 + $0x1708] sm:$0xff]
        %v1048 = vld [vmem:[%s216 + $0x1710] sm:$0xff]
        %v1049 = vld [vmem:[%s216 + $0x1718] sm:$0xff]
        %v1050 = vld [vmem:[%s216 + $0x1720] sm:$0xff]
        %v1051 = vld [vmem:[%s216 + $0x1728] sm:$0xff]
        %v1052 = vld [vmem:[%s216 + $0x1730] sm:$0xff]
        %v1053 = vld [vmem:[%s216 + $0x1738] sm:$0xff]
        %v1054 = vld [vmem:[%s216 + $0x1740] sm:$0xff]
        %v1055 = vld [vmem:[%s216 + $0x1748] sm:$0xff]
        %v1056 = vld [vmem:[%s216 + $0x1750] sm:$0xff]
        %v1057 = vld [vmem:[%s216 + $0x1758] sm:$0xff]
        %v1058 = vld [vmem:[%s216 + $0x1760] sm:$0xff]
        %v1059 = vld [vmem:[%s216 + $0x1768] sm:$0xff]
        %v1060 = vld [vmem:[%s216 + $0x1770] sm:$0xff]
        %v1061 = vld [vmem:[%s216 + $0x1778] sm:$0xff]
        %v1062 = vld [vmem:[%s216 + $0x1780] sm:$0xff]
        %v1063 = vld [vmem:[%s216 + $0x1788] sm:$0xff]
        %v1064 = vld [vmem:[%s216 + $0x1790] sm:$0xff]
        %v1065 = vld [vmem:[%s216 + $0x1798] sm:$0xff]
        %v1066 = vld [vmem:[%s216 + $0x17a0] sm:$0xff]
        %v1067 = vld [vmem:[%s216 + $0x17a8] sm:$0xff]
        %v1068 = vld [vmem:[%s216 + $0x17b0] sm:$0xff]
        %v1069 = vld [vmem:[%s216 + $0x17b8] sm:$0xff]
        %v1070 = vld [vmem:[%s216 + $0x17c0] sm:$0xff]
        %v1071 = vld [vmem:[%s216 + $0x17c8] sm:$0xff]
        %v1072 = vld [vmem:[%s216 + $0x17d0] sm:$0xff]
        %v1073 = vld [vmem:[%s216 + $0x17d8] sm:$0xff]
        %v1074 = vld [vmem:[%s216 + $0x17e0] sm:$0xff]
        %v1075 = vld [vmem:[%s216 + $0x17e8] sm:$0xff]
        %v1076 = vld [vmem:[%s216 + $0x17f0] sm:$0xff]
        %v1077 = vld [vmem:[%s216 + $0x17f8] sm:$0xff]
        %v1102 = vunpack.c.l.b16 %v286
        %v1103 = vunpack.c.h.b16 %v286
        %v1104 = vunpack.c.l.b16 %v287
        %v1105 = vunpack.c.h.b16 %v287
        %v1106 = vunpack.c.l.b16 %v288
        %v1107 = vunpack.c.h.b16 %v288
        %v1108 = vunpack.c.l.b16 %v289
        %v1109 = vunpack.c.h.b16 %v289
        %v1110 = vunpack.c.l.b16 %v290
        %v1111 = vunpack.c.h.b16 %v290
        %v1112 = vunpack.c.l.b16 %v291
        %v1113 = vunpack.c.h.b16 %v291
        %v1114 = vunpack.c.l.b16 %v292
        %v1115 = vunpack.c.h.b16 %v292
        %v1116 = vunpack.c.l.b16 %v293
        %v1117 = vunpack.c.h.b16 %v293
        %v1118 = vunpack.c.l.b16 %v294
        %v1119 = vunpack.c.h.b16 %v294
        %v1120 = vunpack.c.l.b16 %v295
        %v1121 = vunpack.c.h.b16 %v295
        %v1122 = vunpack.c.l.b16 %v296
        %v1123 = vunpack.c.h.b16 %v296
        %v1124 = vunpack.c.l.b16 %v297
        %v1125 = vunpack.c.h.b16 %v297
        %v1126 = vunpack.c.l.b16 %v298
        %v1127 = vunpack.c.h.b16 %v298
        %v1128 = vunpack.c.l.b16 %v299
        %v1129 = vunpack.c.h.b16 %v299
        %v1130 = vunpack.c.l.b16 %v300
        %v1131 = vunpack.c.h.b16 %v300
        %v1132 = vunpack.c.l.b16 %v301
        %v1133 = vunpack.c.h.b16 %v301
        %v1134 = vunpack.c.l.b16 %v302
        %v1135 = vunpack.c.h.b16 %v302
        %v1136 = vunpack.c.l.b16 %v303
        %v1137 = vunpack.c.h.b16 %v303
        %v1138 = vunpack.c.l.b16 %v304
        %v1139 = vunpack.c.h.b16 %v304
        %v1140 = vunpack.c.l.b16 %v305
        %v1141 = vunpack.c.h.b16 %v305
        %v1142 = vunpack.c.l.b16 %v306
        %v1143 = vunpack.c.h.b16 %v306
        %v1144 = vunpack.c.l.b16 %v307
        %v1145 = vunpack.c.h.b16 %v307
        %v1146 = vunpack.c.l.b16 %v308
        %v1147 = vunpack.c.h.b16 %v308
        %v1148 = vunpack.c.l.b16 %v309
        %v1149 = vunpack.c.h.b16 %v309
        %v1150 = vpack.c.b16 %v1126, %v1102
        %v1151 = vpack.c.b16 %v1127, %v1103
        %v1152 = vpack.c.b16 %v1128, %v1104
        %v1153 = vpack.c.b16 %v1129, %v1105
        %v1154 = vpack.c.b16 %v1130, %v1106
        %v1155 = vpack.c.b16 %v1131, %v1107
        %v1156 = vpack.c.b16 %v1132, %v1108
        %v1157 = vpack.c.b16 %v1133, %v1109
        %v1158 = vpack.c.b16 %v1134, %v1110
        %v1159 = vpack.c.b16 %v1135, %v1111
        %v1160 = vpack.c.b16 %v1136, %v1112
        %v1161 = vpack.c.b16 %v1137, %v1113
        %v1162 = vpack.c.b16 %v1138, %v1114
        %v1163 = vpack.c.b16 %v1139, %v1115
        %v1164 = vpack.c.b16 %v1140, %v1116
        %v1165 = vpack.c.b16 %v1141, %v1117
        %v1166 = vpack.c.b16 %v1142, %v1118
        %v1167 = vpack.c.b16 %v1143, %v1119
        %v1168 = vpack.c.b16 %v1144, %v1120
        %v1169 = vpack.c.b16 %v1145, %v1121
        %v1170 = vpack.c.b16 %v1146, %v1122
        %v1171 = vpack.c.b16 %v1147, %v1123
        %v1172 = vpack.c.b16 %v1148, %v1124
        %v1173 = vpack.c.b16 %v1149, %v1125
        %v1966 = vunpack.c.l.b16 %v310
        %v1967 = vunpack.c.h.b16 %v310
        %v1968 = vunpack.c.l.b16 %v311
        %v1969 = vunpack.c.h.b16 %v311
        %v1970 = vunpack.c.l.b16 %v312
        %v1971 = vunpack.c.h.b16 %v312
        %v1972 = vunpack.c.l.b16 %v313
        %v1973 = vunpack.c.h.b16 %v313
        %v1974 = vunpack.c.l.b16 %v314
        %v1975 = vunpack.c.h.b16 %v314
        %v1976 = vunpack.c.l.b16 %v315
        %v1977 = vunpack.c.h.b16 %v315
        %v1978 = vunpack.c.l.b16 %v316
        %v1979 = vunpack.c.h.b16 %v316
        %v1980 = vunpack.c.l.b16 %v317
        %v1981 = vunpack.c.h.b16 %v317
        %v1982 = vunpack.c.l.b16 %v318
        %v1983 = vunpack.c.h.b16 %v318
        %v1984 = vunpack.c.l.b16 %v319
        %v1985 = vunpack.c.h.b16 %v319
        %v1986 = vunpack.c.l.b16 %v320
        %v1987 = vunpack.c.h.b16 %v320
        %v1988 = vunpack.c.l.b16 %v321
        %v1989 = vunpack.c.h.b16 %v321
        %v1990 = vunpack.c.l.b16 %v322
        %v1991 = vunpack.c.h.b16 %v322
        %v1992 = vunpack.c.l.b16 %v323
        %v1993 = vunpack.c.h.b16 %v323
        %v1994 = vunpack.c.l.b16 %v324
        %v1995 = vunpack.c.h.b16 %v324
        %v1996 = vunpack.c.l.b16 %v325
        %v1997 = vunpack.c.h.b16 %v325
        %v1998 = vunpack.c.l.b16 %v326
        %v1999 = vunpack.c.h.b16 %v326
        %v2000 = vunpack.c.l.b16 %v327
        %v2001 = vunpack.c.h.b16 %v327
        %v2002 = vunpack.c.l.b16 %v328
        %v2003 = vunpack.c.h.b16 %v328
        %v2004 = vunpack.c.l.b16 %v329
        %v2005 = vunpack.c.h.b16 %v329
        %v2006 = vunpack.c.l.b16 %v330
        %v2007 = vunpack.c.h.b16 %v330
        %v2008 = vunpack.c.l.b16 %v331
        %v2009 = vunpack.c.h.b16 %v331
        %v2010 = vunpack.c.l.b16 %v332
        %v2011 = vunpack.c.h.b16 %v332
        %v2012 = vunpack.c.l.b16 %v333
        %v2013 = vunpack.c.h.b16 %v333
        %v2014 = vunpack.c.l.b16 %v334
        %v2015 = vunpack.c.h.b16 %v334
        %v2016 = vunpack.c.l.b16 %v335
        %v2017 = vunpack.c.h.b16 %v335
        %v2018 = vunpack.c.l.b16 %v336
        %v2019 = vunpack.c.h.b16 %v336
        %v2020 = vunpack.c.l.b16 %v337
        %v2021 = vunpack.c.h.b16 %v337
        %v2022 = vunpack.c.l.b16 %v338
        %v2023 = vunpack.c.h.b16 %v338
        %v2024 = vunpack.c.l.b16 %v339
        %v2025 = vunpack.c.h.b16 %v339
        %v2026 = vunpack.c.l.b16 %v340
        %v2027 = vunpack.c.h.b16 %v340
        %v2028 = vunpack.c.l.b16 %v341
        %v2029 = vunpack.c.h.b16 %v341
        %v2030 = vunpack.c.l.b16 %v342
        %v2031 = vunpack.c.h.b16 %v342
        %v2032 = vunpack.c.l.b16 %v343
        %v2033 = vunpack.c.h.b16 %v343
        %v2034 = vunpack.c.l.b16 %v344
        %v2035 = vunpack.c.h.b16 %v344
        %v2036 = vunpack.c.l.b16 %v345
        %v2037 = vunpack.c.h.b16 %v345
        %v2038 = vunpack.c.l.b16 %v346
        %v2039 = vunpack.c.h.b16 %v346
        %v2040 = vunpack.c.l.b16 %v347
        %v2041 = vunpack.c.h.b16 %v347
        %v2042 = vunpack.c.l.b16 %v348
        %v2043 = vunpack.c.h.b16 %v348
        %v2044 = vunpack.c.l.b16 %v349
        %v2045 = vunpack.c.h.b16 %v349
        %v2046 = vunpack.c.l.b16 %v350
        %v2047 = vunpack.c.h.b16 %v350
        %v2048 = vunpack.c.l.b16 %v351
        %v2049 = vunpack.c.h.b16 %v351
        %v2050 = vunpack.c.l.b16 %v352
        %v2051 = vunpack.c.h.b16 %v352
        %v2052 = vunpack.c.l.b16 %v353
        %v2053 = vunpack.c.h.b16 %v353
        %v2054 = vunpack.c.l.b16 %v354
        %v2055 = vunpack.c.h.b16 %v354
        %v2056 = vunpack.c.l.b16 %v355
        %v2057 = vunpack.c.h.b16 %v355
        %v2058 = vunpack.c.l.b16 %v356
        %v2059 = vunpack.c.h.b16 %v356
        %v2060 = vunpack.c.l.b16 %v357
        %v2061 = vunpack.c.h.b16 %v357
        %v2062 = vunpack.c.l.b16 %v358
        %v2063 = vunpack.c.h.b16 %v358
        %v2064 = vunpack.c.l.b16 %v359
        %v2065 = vunpack.c.h.b16 %v359
        %v2066 = vunpack.c.l.b16 %v360
        %v2067 = vunpack.c.h.b16 %v360
        %v2068 = vunpack.c.l.b16 %v361
        %v2069 = vunpack.c.h.b16 %v361
        %v2070 = vunpack.c.l.b16 %v362
        %v2071 = vunpack.c.h.b16 %v362
        %v2072 = vunpack.c.l.b16 %v363
        %v2073 = vunpack.c.h.b16 %v363
        %v2074 = vunpack.c.l.b16 %v364
        %v2075 = vunpack.c.h.b16 %v364
        %v2076 = vunpack.c.l.b16 %v365
        %v2077 = vunpack.c.h.b16 %v365
        %v2078 = vunpack.c.l.b16 %v366
        %v2079 = vunpack.c.h.b16 %v366
        %v2080 = vunpack.c.l.b16 %v367
        %v2081 = vunpack.c.h.b16 %v367
        %v2082 = vunpack.c.l.b16 %v368
        %v2083 = vunpack.c.h.b16 %v368
        %v2084 = vunpack.c.l.b16 %v369
        %v2085 = vunpack.c.h.b16 %v369
        %v2086 = vunpack.c.l.b16 %v370
        %v2087 = vunpack.c.h.b16 %v370
        %v2088 = vunpack.c.l.b16 %v371
        %v2089 = vunpack.c.h.b16 %v371
        %v2090 = vunpack.c.l.b16 %v372
        %v2091 = vunpack.c.h.b16 %v372
        %v2092 = vunpack.c.l.b16 %v373
        %v2093 = vunpack.c.h.b16 %v373
        %v2094 = vunpack.c.l.b16 %v374
        %v2095 = vunpack.c.h.b16 %v374
        %v2096 = vunpack.c.l.b16 %v375
        %v2097 = vunpack.c.h.b16 %v375
        %v2098 = vunpack.c.l.b16 %v376
        %v2099 = vunpack.c.h.b16 %v376
        %v2100 = vunpack.c.l.b16 %v377
        %v2101 = vunpack.c.h.b16 %v377
        %v2102 = vunpack.c.l.b16 %v378
        %v2103 = vunpack.c.h.b16 %v378
        %v2104 = vunpack.c.l.b16 %v379
        %v2105 = vunpack.c.h.b16 %v379
        %v2106 = vunpack.c.l.b16 %v380
        %v2107 = vunpack.c.h.b16 %v380
        %v2108 = vunpack.c.l.b16 %v381
        %v2109 = vunpack.c.h.b16 %v381
        %v2110 = vunpack.c.l.b16 %v382
        %v2111 = vunpack.c.h.b16 %v382
        %v2112 = vunpack.c.l.b16 %v383
        %v2113 = vunpack.c.h.b16 %v383
        %v2114 = vunpack.c.l.b16 %v384
        %v2115 = vunpack.c.h.b16 %v384
        %v2116 = vunpack.c.l.b16 %v385
        %v2117 = vunpack.c.h.b16 %v385
        %v2118 = vunpack.c.l.b16 %v386
        %v2119 = vunpack.c.h.b16 %v386
        %v2120 = vunpack.c.l.b16 %v387
        %v2121 = vunpack.c.h.b16 %v387
        %v2122 = vunpack.c.l.b16 %v388
        %v2123 = vunpack.c.h.b16 %v388
        %v2124 = vunpack.c.l.b16 %v389
        %v2125 = vunpack.c.h.b16 %v389
        %v2126 = vunpack.c.l.b16 %v390
        %v2127 = vunpack.c.h.b16 %v390
        %v2128 = vunpack.c.l.b16 %v391
        %v2129 = vunpack.c.h.b16 %v391
        %v2130 = vunpack.c.l.b16 %v392
        %v2131 = vunpack.c.h.b16 %v392
        %v2132 = vunpack.c.l.b16 %v393
        %v2133 = vunpack.c.h.b16 %v393
        %v2134 = vunpack.c.l.b16 %v394
        %v2135 = vunpack.c.h.b16 %v394
        %v2136 = vunpack.c.l.b16 %v395
        %v2137 = vunpack.c.h.b16 %v395
        %v2138 = vunpack.c.l.b16 %v396
        %v2139 = vunpack.c.h.b16 %v396
        %v2140 = vunpack.c.l.b16 %v397
        %v2141 = vunpack.c.h.b16 %v397
        %v2142 = vunpack.c.l.b16 %v398
        %v2143 = vunpack.c.h.b16 %v398
        %v2144 = vunpack.c.l.b16 %v399
        %v2145 = vunpack.c.h.b16 %v399
        %v2146 = vunpack.c.l.b16 %v400
        %v2147 = vunpack.c.h.b16 %v400
        %v2148 = vunpack.c.l.b16 %v401
        %v2149 = vunpack.c.h.b16 %v401
        %v2150 = vunpack.c.l.b16 %v402
        %v2151 = vunpack.c.h.b16 %v402
        %v2152 = vunpack.c.l.b16 %v403
        %v2153 = vunpack.c.h.b16 %v403
        %v2154 = vunpack.c.l.b16 %v404
        %v2155 = vunpack.c.h.b16 %v404
        %v2156 = vunpack.c.l.b16 %v405
        %v2157 = vunpack.c.h.b16 %v405
        %v2158 = vunpack.c.l.b16 %v406
        %v2159 = vunpack.c.h.b16 %v406
        %v2160 = vunpack.c.l.b16 %v407
        %v2161 = vunpack.c.h.b16 %v407
        %v2162 = vunpack.c.l.b16 %v408
        %v2163 = vunpack.c.h.b16 %v408
        %v2164 = vunpack.c.l.b16 %v409
        %v2165 = vunpack.c.h.b16 %v409
        %v2166 = vunpack.c.l.b16 %v410
        %v2167 = vunpack.c.h.b16 %v410
        %v2168 = vunpack.c.l.b16 %v411
        %v2169 = vunpack.c.h.b16 %v411
        %v2170 = vunpack.c.l.b16 %v412
        %v2171 = vunpack.c.h.b16 %v412
        %v2172 = vunpack.c.l.b16 %v413
        %v2173 = vunpack.c.h.b16 %v413
        %v2174 = vunpack.c.l.b16 %v414
        %v2175 = vunpack.c.h.b16 %v414
        %v2176 = vunpack.c.l.b16 %v415
        %v2177 = vunpack.c.h.b16 %v415
        %v2178 = vunpack.c.l.b16 %v416
        %v2179 = vunpack.c.h.b16 %v416
        %v2180 = vunpack.c.l.b16 %v417
        %v2181 = vunpack.c.h.b16 %v417
        %v2182 = vunpack.c.l.b16 %v418
        %v2183 = vunpack.c.h.b16 %v418
        %v2184 = vunpack.c.l.b16 %v419
        %v2185 = vunpack.c.h.b16 %v419
        %v2186 = vunpack.c.l.b16 %v420
        %v2187 = vunpack.c.h.b16 %v420
        %v2188 = vunpack.c.l.b16 %v421
        %v2189 = vunpack.c.h.b16 %v421
        %v2190 = vunpack.c.l.b16 %v422
        %v2191 = vunpack.c.h.b16 %v422
        %v2192 = vunpack.c.l.b16 %v423
        %v2193 = vunpack.c.h.b16 %v423
        %v2194 = vunpack.c.l.b16 %v424
        %v2195 = vunpack.c.h.b16 %v424
        %v2196 = vunpack.c.l.b16 %v425
        %v2197 = vunpack.c.h.b16 %v425
        %v2198 = vunpack.c.l.b16 %v426
        %v2199 = vunpack.c.h.b16 %v426
        %v2200 = vunpack.c.l.b16 %v427
        %v2201 = vunpack.c.h.b16 %v427
        %v2202 = vunpack.c.l.b16 %v428
        %v2203 = vunpack.c.h.b16 %v428
        %v2204 = vunpack.c.l.b16 %v429
        %v2205 = vunpack.c.h.b16 %v429
        %v2206 = vunpack.c.l.b16 %v430
        %v2207 = vunpack.c.h.b16 %v430
        %v2208 = vunpack.c.l.b16 %v431
        %v2209 = vunpack.c.h.b16 %v431
        %v2210 = vunpack.c.l.b16 %v432
        %v2211 = vunpack.c.h.b16 %v432
        %v2212 = vunpack.c.l.b16 %v433
        %v2213 = vunpack.c.h.b16 %v433
        %v2214 = vunpack.c.l.b16 %v434
        %v2215 = vunpack.c.h.b16 %v434
        %v2216 = vunpack.c.l.b16 %v435
        %v2217 = vunpack.c.h.b16 %v435
        %v2218 = vunpack.c.l.b16 %v436
        %v2219 = vunpack.c.h.b16 %v436
        %v2220 = vunpack.c.l.b16 %v437
        %v2221 = vunpack.c.h.b16 %v437
        %v2222 = vunpack.c.l.b16 %v438
        %v2223 = vunpack.c.h.b16 %v438
        %v2224 = vunpack.c.l.b16 %v439
        %v2225 = vunpack.c.h.b16 %v439
        %v2226 = vunpack.c.l.b16 %v440
        %v2227 = vunpack.c.h.b16 %v440
        %v2228 = vunpack.c.l.b16 %v441
        %v2229 = vunpack.c.h.b16 %v441
        %v2230 = vunpack.c.l.b16 %v442
        %v2231 = vunpack.c.h.b16 %v442
        %v2232 = vunpack.c.l.b16 %v443
        %v2233 = vunpack.c.h.b16 %v443
        %v2234 = vunpack.c.l.b16 %v444
        %v2235 = vunpack.c.h.b16 %v444
        %v2236 = vunpack.c.l.b16 %v445
        %v2237 = vunpack.c.h.b16 %v445
        %v2238 = vunpack.c.l.b16 %v446
        %v2239 = vunpack.c.h.b16 %v446
        %v2240 = vunpack.c.l.b16 %v447
        %v2241 = vunpack.c.h.b16 %v447
        %v2242 = vunpack.c.l.b16 %v448
        %v2243 = vunpack.c.h.b16 %v448
        %v2244 = vunpack.c.l.b16 %v449
        %v2245 = vunpack.c.h.b16 %v449
        %v2246 = vunpack.c.l.b16 %v450
        %v2247 = vunpack.c.h.b16 %v450
        %v2248 = vunpack.c.l.b16 %v451
        %v2249 = vunpack.c.h.b16 %v451
        %v2250 = vunpack.c.l.b16 %v452
        %v2251 = vunpack.c.h.b16 %v452
        %v2252 = vunpack.c.l.b16 %v453
        %v2253 = vunpack.c.h.b16 %v453
        %v2254 = vunpack.c.l.b16 %v454
        %v2255 = vunpack.c.h.b16 %v454
        %v2256 = vunpack.c.l.b16 %v455
        %v2257 = vunpack.c.h.b16 %v455
        %v2258 = vunpack.c.l.b16 %v456
        %v2259 = vunpack.c.h.b16 %v456
        %v2260 = vunpack.c.l.b16 %v457
        %v2261 = vunpack.c.h.b16 %v457
        %v2262 = vunpack.c.l.b16 %v458
        %v2263 = vunpack.c.h.b16 %v458
        %v2264 = vunpack.c.l.b16 %v459
        %v2265 = vunpack.c.h.b16 %v459
        %v2266 = vunpack.c.l.b16 %v460
        %v2267 = vunpack.c.h.b16 %v460
        %v2268 = vunpack.c.l.b16 %v461
        %v2269 = vunpack.c.h.b16 %v461
        %v2270 = vunpack.c.l.b16 %v462
        %v2271 = vunpack.c.h.b16 %v462
        %v2272 = vunpack.c.l.b16 %v463
        %v2273 = vunpack.c.h.b16 %v463
        %v2274 = vunpack.c.l.b16 %v464
        %v2275 = vunpack.c.h.b16 %v464
        %v2276 = vunpack.c.l.b16 %v465
        %v2277 = vunpack.c.h.b16 %v465
        %v2278 = vunpack.c.l.b16 %v466
        %v2279 = vunpack.c.h.b16 %v466
        %v2280 = vunpack.c.l.b16 %v467
        %v2281 = vunpack.c.h.b16 %v467
        %v2282 = vunpack.c.l.b16 %v468
        %v2283 = vunpack.c.h.b16 %v468
        %v2284 = vunpack.c.l.b16 %v469
        %v2285 = vunpack.c.h.b16 %v469
        %v2286 = vunpack.c.l.b16 %v470
        %v2287 = vunpack.c.h.b16 %v470
        %v2288 = vunpack.c.l.b16 %v471
        %v2289 = vunpack.c.h.b16 %v471
        %v2290 = vunpack.c.l.b16 %v472
        %v2291 = vunpack.c.h.b16 %v472
        %v2292 = vunpack.c.l.b16 %v473
        %v2293 = vunpack.c.h.b16 %v473
        %v2294 = vunpack.c.l.b16 %v474
        %v2295 = vunpack.c.h.b16 %v474
        %v2296 = vunpack.c.l.b16 %v475
        %v2297 = vunpack.c.h.b16 %v475
        %v2298 = vunpack.c.l.b16 %v476
        %v2299 = vunpack.c.h.b16 %v476
        %v2300 = vunpack.c.l.b16 %v477
        %v2301 = vunpack.c.h.b16 %v477
        %v2302 = vunpack.c.l.b16 %v478
        %v2303 = vunpack.c.h.b16 %v478
        %v2304 = vunpack.c.l.b16 %v479
        %v2305 = vunpack.c.h.b16 %v479
        %v2306 = vunpack.c.l.b16 %v480
        %v2307 = vunpack.c.h.b16 %v480
        %v2308 = vunpack.c.l.b16 %v481
        %v2309 = vunpack.c.h.b16 %v481
        %v2310 = vunpack.c.l.b16 %v482
        %v2311 = vunpack.c.h.b16 %v482
        %v2312 = vunpack.c.l.b16 %v483
        %v2313 = vunpack.c.h.b16 %v483
        %v2314 = vunpack.c.l.b16 %v484
        %v2315 = vunpack.c.h.b16 %v484
        %v2316 = vunpack.c.l.b16 %v485
        %v2317 = vunpack.c.h.b16 %v485
        %v2318 = vunpack.c.l.b16 %v486
        %v2319 = vunpack.c.h.b16 %v486
        %v2320 = vunpack.c.l.b16 %v487
        %v2321 = vunpack.c.h.b16 %v487
        %v2322 = vunpack.c.l.b16 %v488
        %v2323 = vunpack.c.h.b16 %v488
        %v2324 = vunpack.c.l.b16 %v489
        %v2325 = vunpack.c.h.b16 %v489
        %v2326 = vunpack.c.l.b16 %v490
        %v2327 = vunpack.c.h.b16 %v490
        %v2328 = vunpack.c.l.b16 %v491
        %v2329 = vunpack.c.h.b16 %v491
        %v2330 = vunpack.c.l.b16 %v492
        %v2331 = vunpack.c.h.b16 %v492
        %v2332 = vunpack.c.l.b16 %v493
        %v2333 = vunpack.c.h.b16 %v493
        %v2334 = vunpack.c.l.b16 %v494
        %v2335 = vunpack.c.h.b16 %v494
        %v2336 = vunpack.c.l.b16 %v495
        %v2337 = vunpack.c.h.b16 %v495
        %v2338 = vunpack.c.l.b16 %v496
        %v2339 = vunpack.c.h.b16 %v496
        %v2340 = vunpack.c.l.b16 %v497
        %v2341 = vunpack.c.h.b16 %v497
        %v2342 = vunpack.c.l.b16 %v498
        %v2343 = vunpack.c.h.b16 %v498
        %v2344 = vunpack.c.l.b16 %v499
        %v2345 = vunpack.c.h.b16 %v499
        %v2346 = vunpack.c.l.b16 %v500
        %v2347 = vunpack.c.h.b16 %v500
        %v2348 = vunpack.c.l.b16 %v501
        %v2349 = vunpack.c.h.b16 %v501
        %v2350 = vunpack.c.l.b16 %v502
        %v2351 = vunpack.c.h.b16 %v502
        %v2352 = vunpack.c.l.b16 %v503
        %v2353 = vunpack.c.h.b16 %v503
        %v2354 = vunpack.c.l.b16 %v504
        %v2355 = vunpack.c.h.b16 %v504
        %v2356 = vunpack.c.l.b16 %v505
        %v2357 = vunpack.c.h.b16 %v505
        %v2358 = vunpack.c.l.b16 %v506
        %v2359 = vunpack.c.h.b16 %v506
        %v2360 = vunpack.c.l.b16 %v507
        %v2361 = vunpack.c.h.b16 %v507
        %v2362 = vunpack.c.l.b16 %v508
        %v2363 = vunpack.c.h.b16 %v508
        %v2364 = vunpack.c.l.b16 %v509
        %v2365 = vunpack.c.h.b16 %v509
        %v2366 = vunpack.c.l.b16 %v510
        %v2367 = vunpack.c.h.b16 %v510
        %v2368 = vunpack.c.l.b16 %v511
        %v2369 = vunpack.c.h.b16 %v511
        %v2370 = vunpack.c.l.b16 %v512
        %v2371 = vunpack.c.h.b16 %v512
        %v2372 = vunpack.c.l.b16 %v513
        %v2373 = vunpack.c.h.b16 %v513
        %v2374 = vunpack.c.l.b16 %v514
        %v2375 = vunpack.c.h.b16 %v514
        %v2376 = vunpack.c.l.b16 %v515
        %v2377 = vunpack.c.h.b16 %v515
        %v2378 = vunpack.c.l.b16 %v516
        %v2379 = vunpack.c.h.b16 %v516
        %v2380 = vunpack.c.l.b16 %v517
        %v2381 = vunpack.c.h.b16 %v517
        %v2382 = vunpack.c.l.b16 %v518
        %v2383 = vunpack.c.h.b16 %v518
        %v2384 = vunpack.c.l.b16 %v519
        %v2385 = vunpack.c.h.b16 %v519
        %v2386 = vunpack.c.l.b16 %v520
        %v2387 = vunpack.c.h.b16 %v520
        %v2388 = vunpack.c.l.b16 %v521
        %v2389 = vunpack.c.h.b16 %v521
        %v2390 = vunpack.c.l.b16 %v522
        %v2391 = vunpack.c.h.b16 %v522
        %v2392 = vunpack.c.l.b16 %v523
        %v2393 = vunpack.c.h.b16 %v523
        %v2394 = vunpack.c.l.b16 %v524
        %v2395 = vunpack.c.h.b16 %v524
        %v2396 = vunpack.c.l.b16 %v525
        %v2397 = vunpack.c.h.b16 %v525
        %v2398 = vunpack.c.l.b16 %v526
        %v2399 = vunpack.c.h.b16 %v526
        %v2400 = vunpack.c.l.b16 %v527
        %v2401 = vunpack.c.h.b16 %v527
        %v2402 = vunpack.c.l.b16 %v528
        %v2403 = vunpack.c.h.b16 %v528
        %v2404 = vunpack.c.l.b16 %v529
        %v2405 = vunpack.c.h.b16 %v529
        %v2406 = vunpack.c.l.b16 %v530
        %v2407 = vunpack.c.h.b16 %v530
        %v2408 = vunpack.c.l.b16 %v531
        %v2409 = vunpack.c.h.b16 %v531
        %v2410 = vunpack.c.l.b16 %v532
        %v2411 = vunpack.c.h.b16 %v532
        %v2412 = vunpack.c.l.b16 %v533
        %v2413 = vunpack.c.h.b16 %v533
        %v2414 = vunpack.c.l.b16 %v534
        %v2415 = vunpack.c.h.b16 %v534
        %v2416 = vunpack.c.l.b16 %v535
        %v2417 = vunpack.c.h.b16 %v535
        %v2418 = vunpack.c.l.b16 %v536
        %v2419 = vunpack.c.h.b16 %v536
        %v2420 = vunpack.c.l.b16 %v537
        %v2421 = vunpack.c.h.b16 %v537
        %v2422 = vunpack.c.l.b16 %v538
        %v2423 = vunpack.c.h.b16 %v538
        %v2424 = vunpack.c.l.b16 %v539
        %v2425 = vunpack.c.h.b16 %v539
        %v2426 = vunpack.c.l.b16 %v540
        %v2427 = vunpack.c.h.b16 %v540
        %v2428 = vunpack.c.l.b16 %v541
        %v2429 = vunpack.c.h.b16 %v541
        %v2430 = vunpack.c.l.b16 %v542
        %v2431 = vunpack.c.h.b16 %v542
        %v2432 = vunpack.c.l.b16 %v543
        %v2433 = vunpack.c.h.b16 %v543
        %v2434 = vunpack.c.l.b16 %v544
        %v2435 = vunpack.c.h.b16 %v544
        %v2436 = vunpack.c.l.b16 %v545
        %v2437 = vunpack.c.h.b16 %v545
        %v2438 = vunpack.c.l.b16 %v546
        %v2439 = vunpack.c.h.b16 %v546
        %v2440 = vunpack.c.l.b16 %v547
        %v2441 = vunpack.c.h.b16 %v547
        %v2442 = vunpack.c.l.b16 %v548
        %v2443 = vunpack.c.h.b16 %v548
        %v2444 = vunpack.c.l.b16 %v549
        %v2445 = vunpack.c.h.b16 %v549
        %v2446 = vunpack.c.l.b16 %v550
        %v2447 = vunpack.c.h.b16 %v550
        %v2448 = vunpack.c.l.b16 %v551
        %v2449 = vunpack.c.h.b16 %v551
        %v2450 = vunpack.c.l.b16 %v552
        %v2451 = vunpack.c.h.b16 %v552
        %v2452 = vunpack.c.l.b16 %v553
        %v2453 = vunpack.c.h.b16 %v553
        %v2454 = vunpack.c.l.b16 %v554
        %v2455 = vunpack.c.h.b16 %v554
        %v2456 = vunpack.c.l.b16 %v555
        %v2457 = vunpack.c.h.b16 %v555
        %v2458 = vunpack.c.l.b16 %v556
        %v2459 = vunpack.c.h.b16 %v556
        %v2460 = vunpack.c.l.b16 %v557
        %v2461 = vunpack.c.h.b16 %v557
        %v2462 = vunpack.c.l.b16 %v558
        %v2463 = vunpack.c.h.b16 %v558
        %v2464 = vunpack.c.l.b16 %v559
        %v2465 = vunpack.c.h.b16 %v559
        %v2466 = vunpack.c.l.b16 %v560
        %v2467 = vunpack.c.h.b16 %v560
        %v2468 = vunpack.c.l.b16 %v561
        %v2469 = vunpack.c.h.b16 %v561
        %v2470 = vunpack.c.l.b16 %v562
        %v2471 = vunpack.c.h.b16 %v562
        %v2472 = vunpack.c.l.b16 %v563
        %v2473 = vunpack.c.h.b16 %v563
        %v2474 = vunpack.c.l.b16 %v564
        %v2475 = vunpack.c.h.b16 %v564
        %v2476 = vunpack.c.l.b16 %v565
        %v2477 = vunpack.c.h.b16 %v565
        %v2478 = vunpack.c.l.b16 %v566
        %v2479 = vunpack.c.h.b16 %v566
        %v2480 = vunpack.c.l.b16 %v567
        %v2481 = vunpack.c.h.b16 %v567
        %v2482 = vunpack.c.l.b16 %v568
        %v2483 = vunpack.c.h.b16 %v568
        %v2484 = vunpack.c.l.b16 %v569
        %v2485 = vunpack.c.h.b16 %v569
        %v2486 = vunpack.c.l.b16 %v570
        %v2487 = vunpack.c.h.b16 %v570
        %v2488 = vunpack.c.l.b16 %v571
        %v2489 = vunpack.c.h.b16 %v571
        %v2490 = vunpack.c.l.b16 %v572
        %v2491 = vunpack.c.h.b16 %v572
        %v2492 = vunpack.c.l.b16 %v573
        %v2493 = vunpack.c.h.b16 %v573
        %v2494 = vunpack.c.l.b16 %v574
        %v2495 = vunpack.c.h.b16 %v574
        %v2496 = vunpack.c.l.b16 %v575
        %v2497 = vunpack.c.h.b16 %v575
        %v2498 = vunpack.c.l.b16 %v576
        %v2499 = vunpack.c.h.b16 %v576
        %v2500 = vunpack.c.l.b16 %v577
        %v2501 = vunpack.c.h.b16 %v577
        %v2502 = vunpack.c.l.b16 %v578
        %v2503 = vunpack.c.h.b16 %v578
        %v2504 = vunpack.c.l.b16 %v579
        %v2505 = vunpack.c.h.b16 %v579
        %v2506 = vunpack.c.l.b16 %v580
        %v2507 = vunpack.c.h.b16 %v580
        %v2508 = vunpack.c.l.b16 %v581
        %v2509 = vunpack.c.h.b16 %v581
        %v2510 = vunpack.c.l.b16 %v582
        %v2511 = vunpack.c.h.b16 %v582
        %v2512 = vunpack.c.l.b16 %v583
        %v2513 = vunpack.c.h.b16 %v583
        %v2514 = vunpack.c.l.b16 %v584
        %v2515 = vunpack.c.h.b16 %v584
        %v2516 = vunpack.c.l.b16 %v585
        %v2517 = vunpack.c.h.b16 %v585
        %v2518 = vunpack.c.l.b16 %v586
        %v2519 = vunpack.c.h.b16 %v586
        %v2520 = vunpack.c.l.b16 %v587
        %v2521 = vunpack.c.h.b16 %v587
        %v2522 = vunpack.c.l.b16 %v588
        %v2523 = vunpack.c.h.b16 %v588
        %v2524 = vunpack.c.l.b16 %v589
        %v2525 = vunpack.c.h.b16 %v589
        %v2526 = vunpack.c.l.b16 %v590
        %v2527 = vunpack.c.h.b16 %v590
        %v2528 = vunpack.c.l.b16 %v591
        %v2529 = vunpack.c.h.b16 %v591
        %v2530 = vunpack.c.l.b16 %v592
        %v2531 = vunpack.c.h.b16 %v592
        %v2532 = vunpack.c.l.b16 %v593
        %v2533 = vunpack.c.h.b16 %v593
        %v2534 = vunpack.c.l.b16 %v594
        %v2535 = vunpack.c.h.b16 %v594
        %v2536 = vunpack.c.l.b16 %v595
        %v2537 = vunpack.c.h.b16 %v595
        %v2538 = vunpack.c.l.b16 %v596
        %v2539 = vunpack.c.h.b16 %v596
        %v2540 = vunpack.c.l.b16 %v597
        %v2541 = vunpack.c.h.b16 %v597
        %v2542 = vunpack.c.l.b16 %v598
        %v2543 = vunpack.c.h.b16 %v598
        %v2544 = vunpack.c.l.b16 %v599
        %v2545 = vunpack.c.h.b16 %v599
        %v2546 = vunpack.c.l.b16 %v600
        %v2547 = vunpack.c.h.b16 %v600
        %v2548 = vunpack.c.l.b16 %v601
        %v2549 = vunpack.c.h.b16 %v601
        %v2550 = vunpack.c.l.b16 %v602
        %v2551 = vunpack.c.h.b16 %v602
        %v2552 = vunpack.c.l.b16 %v603
        %v2553 = vunpack.c.h.b16 %v603
        %v2554 = vunpack.c.l.b16 %v604
        %v2555 = vunpack.c.h.b16 %v604
        %v2556 = vunpack.c.l.b16 %v605
        %v2557 = vunpack.c.h.b16 %v605
        %v2558 = vunpack.c.l.b16 %v606
        %v2559 = vunpack.c.h.b16 %v606
        %v2560 = vunpack.c.l.b16 %v607
        %v2561 = vunpack.c.h.b16 %v607
        %v2562 = vunpack.c.l.b16 %v608
        %v2563 = vunpack.c.h.b16 %v608
        %v2564 = vunpack.c.l.b16 %v609
        %v2565 = vunpack.c.h.b16 %v609
        %v2566 = vunpack.c.l.b16 %v610
        %v2567 = vunpack.c.h.b16 %v610
        %v2568 = vunpack.c.l.b16 %v611
        %v2569 = vunpack.c.h.b16 %v611
        %v2570 = vunpack.c.l.b16 %v612
        %v2571 = vunpack.c.h.b16 %v612
        %v2572 = vunpack.c.l.b16 %v613
        %v2573 = vunpack.c.h.b16 %v613
        %v2574 = vunpack.c.l.b16 %v614
        %v2575 = vunpack.c.h.b16 %v614
        %v2576 = vunpack.c.l.b16 %v615
        %v2577 = vunpack.c.h.b16 %v615
        %v2578 = vunpack.c.l.b16 %v616
        %v2579 = vunpack.c.h.b16 %v616
        %v2580 = vunpack.c.l.b16 %v617
        %v2581 = vunpack.c.h.b16 %v617
        %v2582 = vunpack.c.l.b16 %v618
        %v2583 = vunpack.c.h.b16 %v618
        %v2584 = vunpack.c.l.b16 %v619
        %v2585 = vunpack.c.h.b16 %v619
        %v2586 = vunpack.c.l.b16 %v620
        %v2587 = vunpack.c.h.b16 %v620
        %v2588 = vunpack.c.l.b16 %v621
        %v2589 = vunpack.c.h.b16 %v621
        %v2590 = vunpack.c.l.b16 %v622
        %v2591 = vunpack.c.h.b16 %v622
        %v2592 = vunpack.c.l.b16 %v623
        %v2593 = vunpack.c.h.b16 %v623
        %v2594 = vunpack.c.l.b16 %v624
        %v2595 = vunpack.c.h.b16 %v624
        %v2596 = vunpack.c.l.b16 %v625
        %v2597 = vunpack.c.h.b16 %v625
        %v2598 = vunpack.c.l.b16 %v626
        %v2599 = vunpack.c.h.b16 %v626
        %v2600 = vunpack.c.l.b16 %v627
        %v2601 = vunpack.c.h.b16 %v627
        %v2602 = vunpack.c.l.b16 %v628
        %v2603 = vunpack.c.h.b16 %v628
        %v2604 = vunpack.c.l.b16 %v629
        %v2605 = vunpack.c.h.b16 %v629
        %v2606 = vunpack.c.l.b16 %v630
        %v2607 = vunpack.c.h.b16 %v630
        %v2608 = vunpack.c.l.b16 %v631
        %v2609 = vunpack.c.h.b16 %v631
        %v2610 = vunpack.c.l.b16 %v632
        %v2611 = vunpack.c.h.b16 %v632
        %v2612 = vunpack.c.l.b16 %v633
        %v2613 = vunpack.c.h.b16 %v633
        %v2614 = vunpack.c.l.b16 %v634
        %v2615 = vunpack.c.h.b16 %v634
        %v2616 = vunpack.c.l.b16 %v635
        %v2617 = vunpack.c.h.b16 %v635
        %v2618 = vunpack.c.l.b16 %v636
        %v2619 = vunpack.c.h.b16 %v636
        %v2620 = vunpack.c.l.b16 %v637
        %v2621 = vunpack.c.h.b16 %v637
        %v2622 = vunpack.c.l.b16 %v638
        %v2623 = vunpack.c.h.b16 %v638
        %v2624 = vunpack.c.l.b16 %v639
        %v2625 = vunpack.c.h.b16 %v639
        %v2626 = vunpack.c.l.b16 %v640
        %v2627 = vunpack.c.h.b16 %v640
        %v2628 = vunpack.c.l.b16 %v641
        %v2629 = vunpack.c.h.b16 %v641
        %v2630 = vunpack.c.l.b16 %v642
        %v2631 = vunpack.c.h.b16 %v642
        %v2632 = vunpack.c.l.b16 %v643
        %v2633 = vunpack.c.h.b16 %v643
        %v2634 = vunpack.c.l.b16 %v644
        %v2635 = vunpack.c.h.b16 %v644
        %v2636 = vunpack.c.l.b16 %v645
        %v2637 = vunpack.c.h.b16 %v645
        %v2638 = vunpack.c.l.b16 %v646
        %v2639 = vunpack.c.h.b16 %v646
        %v2640 = vunpack.c.l.b16 %v647
        %v2641 = vunpack.c.h.b16 %v647
        %v2642 = vunpack.c.l.b16 %v648
        %v2643 = vunpack.c.h.b16 %v648
        %v2644 = vunpack.c.l.b16 %v649
        %v2645 = vunpack.c.h.b16 %v649
        %v2646 = vunpack.c.l.b16 %v650
        %v2647 = vunpack.c.h.b16 %v650
        %v2648 = vunpack.c.l.b16 %v651
        %v2649 = vunpack.c.h.b16 %v651
        %v2650 = vunpack.c.l.b16 %v652
        %v2651 = vunpack.c.h.b16 %v652
        %v2652 = vunpack.c.l.b16 %v653
        %v2653 = vunpack.c.h.b16 %v653
        %v2654 = vunpack.c.l.b16 %v654
        %v2655 = vunpack.c.h.b16 %v654
        %v2656 = vunpack.c.l.b16 %v655
        %v2657 = vunpack.c.h.b16 %v655
        %v2658 = vunpack.c.l.b16 %v656
        %v2659 = vunpack.c.h.b16 %v656
        %v2660 = vunpack.c.l.b16 %v657
        %v2661 = vunpack.c.h.b16 %v657
        %v2662 = vunpack.c.l.b16 %v658
        %v2663 = vunpack.c.h.b16 %v658
        %v2664 = vunpack.c.l.b16 %v659
        %v2665 = vunpack.c.h.b16 %v659
        %v2666 = vunpack.c.l.b16 %v660
        %v2667 = vunpack.c.h.b16 %v660
        %v2668 = vunpack.c.l.b16 %v661
        %v2669 = vunpack.c.h.b16 %v661
        %v2670 = vunpack.c.l.b16 %v662
        %v2671 = vunpack.c.h.b16 %v662
        %v2672 = vunpack.c.l.b16 %v663
        %v2673 = vunpack.c.h.b16 %v663
        %v2674 = vunpack.c.l.b16 %v664
        %v2675 = vunpack.c.h.b16 %v664
        %v2676 = vunpack.c.l.b16 %v665
        %v2677 = vunpack.c.h.b16 %v665
        %v2678 = vunpack.c.l.b16 %v666
        %v2679 = vunpack.c.h.b16 %v666
        %v2680 = vunpack.c.l.b16 %v667
        %v2681 = vunpack.c.h.b16 %v667
        %v2682 = vunpack.c.l.b16 %v668
        %v2683 = vunpack.c.h.b16 %v668
        %v2684 = vunpack.c.l.b16 %v669
        %v2685 = vunpack.c.h.b16 %v669
        %v2686 = vunpack.c.l.b16 %v670
        %v2687 = vunpack.c.h.b16 %v670
        %v2688 = vunpack.c.l.b16 %v671
        %v2689 = vunpack.c.h.b16 %v671
        %v2690 = vunpack.c.l.b16 %v672
        %v2691 = vunpack.c.h.b16 %v672
        %v2692 = vunpack.c.l.b16 %v673
        %v2693 = vunpack.c.h.b16 %v673
        %v2694 = vunpack.c.l.b16 %v674
        %v2695 = vunpack.c.h.b16 %v674
        %v2696 = vunpack.c.l.b16 %v675
        %v2697 = vunpack.c.h.b16 %v675
        %v2698 = vunpack.c.l.b16 %v676
        %v2699 = vunpack.c.h.b16 %v676
        %v2700 = vunpack.c.l.b16 %v677
        %v2701 = vunpack.c.h.b16 %v677
        %v2702 = vunpack.c.l.b16 %v678
        %v2703 = vunpack.c.h.b16 %v678
        %v2704 = vunpack.c.l.b16 %v679
        %v2705 = vunpack.c.h.b16 %v679
        %v2706 = vunpack.c.l.b16 %v680
        %v2707 = vunpack.c.h.b16 %v680
        %v2708 = vunpack.c.l.b16 %v681
        %v2709 = vunpack.c.h.b16 %v681
        %v2710 = vunpack.c.l.b16 %v682
        %v2711 = vunpack.c.h.b16 %v682
        %v2712 = vunpack.c.l.b16 %v683
        %v2713 = vunpack.c.h.b16 %v683
        %v2714 = vunpack.c.l.b16 %v684
        %v2715 = vunpack.c.h.b16 %v684
        %v2716 = vunpack.c.l.b16 %v685
        %v2717 = vunpack.c.h.b16 %v685
        %v2718 = vunpack.c.l.b16 %v686
        %v2719 = vunpack.c.h.b16 %v686
        %v2720 = vunpack.c.l.b16 %v687
        %v2721 = vunpack.c.h.b16 %v687
        %v2722 = vunpack.c.l.b16 %v688
        %v2723 = vunpack.c.h.b16 %v688
        %v2724 = vunpack.c.l.b16 %v689
        %v2725 = vunpack.c.h.b16 %v689
        %v2726 = vunpack.c.l.b16 %v690
        %v2727 = vunpack.c.h.b16 %v690
        %v2728 = vunpack.c.l.b16 %v691
        %v2729 = vunpack.c.h.b16 %v691
        %v2730 = vunpack.c.l.b16 %v692
        %v2731 = vunpack.c.h.b16 %v692
        %v2732 = vunpack.c.l.b16 %v693
        %v2733 = vunpack.c.h.b16 %v693
        %v2734 = vunpack.c.l.b16 %v694
        %v2735 = vunpack.c.h.b16 %v694
        %v2736 = vunpack.c.l.b16 %v695
        %v2737 = vunpack.c.h.b16 %v695
        %v2738 = vunpack.c.l.b16 %v696
        %v2739 = vunpack.c.h.b16 %v696
        %v2740 = vunpack.c.l.b16 %v697
        %v2741 = vunpack.c.h.b16 %v697
        %v2742 = vunpack.c.l.b16 %v698
        %v2743 = vunpack.c.h.b16 %v698
        %v2744 = vunpack.c.l.b16 %v699
        %v2745 = vunpack.c.h.b16 %v699
        %v2746 = vunpack.c.l.b16 %v700
        %v2747 = vunpack.c.h.b16 %v700
        %v2748 = vunpack.c.l.b16 %v701
        %v2749 = vunpack.c.h.b16 %v701
        %v2750 = vunpack.c.l.b16 %v702
        %v2751 = vunpack.c.h.b16 %v702
        %v2752 = vunpack.c.l.b16 %v703
        %v2753 = vunpack.c.h.b16 %v703
        %v2754 = vunpack.c.l.b16 %v704
        %v2755 = vunpack.c.h.b16 %v704
        %v2756 = vunpack.c.l.b16 %v705
        %v2757 = vunpack.c.h.b16 %v705
        %v2758 = vunpack.c.l.b16 %v706
        %v2759 = vunpack.c.h.b16 %v706
        %v2760 = vunpack.c.l.b16 %v707
        %v2761 = vunpack.c.h.b16 %v707
        %v2762 = vunpack.c.l.b16 %v708
        %v2763 = vunpack.c.h.b16 %v708
        %v2764 = vunpack.c.l.b16 %v709
        %v2765 = vunpack.c.h.b16 %v709
        %v2766 = vunpack.c.l.b16 %v710
        %v2767 = vunpack.c.h.b16 %v710
        %v2768 = vunpack.c.l.b16 %v711
        %v2769 = vunpack.c.h.b16 %v711
        %v2770 = vunpack.c.l.b16 %v712
        %v2771 = vunpack.c.h.b16 %v712
        %v2772 = vunpack.c.l.b16 %v713
        %v2773 = vunpack.c.h.b16 %v713
        %v2774 = vunpack.c.l.b16 %v714
        %v2775 = vunpack.c.h.b16 %v714
        %v2776 = vunpack.c.l.b16 %v715
        %v2777 = vunpack.c.h.b16 %v715
        %v2778 = vunpack.c.l.b16 %v716
        %v2779 = vunpack.c.h.b16 %v716
        %v2780 = vunpack.c.l.b16 %v717
        %v2781 = vunpack.c.h.b16 %v717
        %v2782 = vunpack.c.l.b16 %v718
        %v2783 = vunpack.c.h.b16 %v718
        %v2784 = vunpack.c.l.b16 %v719
        %v2785 = vunpack.c.h.b16 %v719
        %v2786 = vunpack.c.l.b16 %v720
        %v2787 = vunpack.c.h.b16 %v720
        %v2788 = vunpack.c.l.b16 %v721
        %v2789 = vunpack.c.h.b16 %v721
        %v2790 = vunpack.c.l.b16 %v722
        %v2791 = vunpack.c.h.b16 %v722
        %v2792 = vunpack.c.l.b16 %v723
        %v2793 = vunpack.c.h.b16 %v723
        %v2794 = vunpack.c.l.b16 %v724
        %v2795 = vunpack.c.h.b16 %v724
        %v2796 = vunpack.c.l.b16 %v725
        %v2797 = vunpack.c.h.b16 %v725
        %v2798 = vunpack.c.l.b16 %v726
        %v2799 = vunpack.c.h.b16 %v726
        %v2800 = vunpack.c.l.b16 %v727
        %v2801 = vunpack.c.h.b16 %v727
        %v2802 = vunpack.c.l.b16 %v728
        %v2803 = vunpack.c.h.b16 %v728
        %v2804 = vunpack.c.l.b16 %v729
        %v2805 = vunpack.c.h.b16 %v729
        %v2806 = vunpack.c.l.b16 %v730
        %v2807 = vunpack.c.h.b16 %v730
        %v2808 = vunpack.c.l.b16 %v731
        %v2809 = vunpack.c.h.b16 %v731
        %v2810 = vunpack.c.l.b16 %v732
        %v2811 = vunpack.c.h.b16 %v732
        %v2812 = vunpack.c.l.b16 %v733
        %v2813 = vunpack.c.h.b16 %v733
        %v2814 = vunpack.c.l.b16 %v734
        %v2815 = vunpack.c.h.b16 %v734
        %v2816 = vunpack.c.l.b16 %v735
        %v2817 = vunpack.c.h.b16 %v735
        %v2818 = vunpack.c.l.b16 %v736
        %v2819 = vunpack.c.h.b16 %v736
        %v2820 = vunpack.c.l.b16 %v737
        %v2821 = vunpack.c.h.b16 %v737
        %v2822 = vunpack.c.l.b16 %v738
        %v2823 = vunpack.c.h.b16 %v738
        %v2824 = vunpack.c.l.b16 %v739
        %v2825 = vunpack.c.h.b16 %v739
        %v2826 = vunpack.c.l.b16 %v740
        %v2827 = vunpack.c.h.b16 %v740
        %v2828 = vunpack.c.l.b16 %v741
        %v2829 = vunpack.c.h.b16 %v741
        %v2830 = vunpack.c.l.b16 %v742
        %v2831 = vunpack.c.h.b16 %v742
        %v2832 = vunpack.c.l.b16 %v743
        %v2833 = vunpack.c.h.b16 %v743
        %v2834 = vunpack.c.l.b16 %v744
        %v2835 = vunpack.c.h.b16 %v744
        %v2836 = vunpack.c.l.b16 %v745
        %v2837 = vunpack.c.h.b16 %v745
        %v2838 = vunpack.c.l.b16 %v746
        %v2839 = vunpack.c.h.b16 %v746
        %v2840 = vunpack.c.l.b16 %v747
        %v2841 = vunpack.c.h.b16 %v747
        %v2842 = vunpack.c.l.b16 %v748
        %v2843 = vunpack.c.h.b16 %v748
        %v2844 = vunpack.c.l.b16 %v749
        %v2845 = vunpack.c.h.b16 %v749
        %v2846 = vunpack.c.l.b16 %v750
        %v2847 = vunpack.c.h.b16 %v750
        %v2848 = vunpack.c.l.b16 %v751
        %v2849 = vunpack.c.h.b16 %v751
        %v2850 = vunpack.c.l.b16 %v752
        %v2851 = vunpack.c.h.b16 %v752
        %v2852 = vunpack.c.l.b16 %v753
        %v2853 = vunpack.c.h.b16 %v753
        %v2854 = vunpack.c.l.b16 %v754
        %v2855 = vunpack.c.h.b16 %v754
        %v2856 = vunpack.c.l.b16 %v755
        %v2857 = vunpack.c.h.b16 %v755
        %v2858 = vunpack.c.l.b16 %v756
        %v2859 = vunpack.c.h.b16 %v756
        %v2860 = vunpack.c.l.b16 %v757
        %v2861 = vunpack.c.h.b16 %v757
        %v2862 = vunpack.c.l.b16 %v758
        %v2863 = vunpack.c.h.b16 %v758
        %v2864 = vunpack.c.l.b16 %v759
        %v2865 = vunpack.c.h.b16 %v759
        %v2866 = vunpack.c.l.b16 %v760
        %v2867 = vunpack.c.h.b16 %v760
        %v2868 = vunpack.c.l.b16 %v761
        %v2869 = vunpack.c.h.b16 %v761
        %v2870 = vunpack.c.l.b16 %v762
        %v2871 = vunpack.c.h.b16 %v762
        %v2872 = vunpack.c.l.b16 %v763
        %v2873 = vunpack.c.h.b16 %v763
        %v2874 = vunpack.c.l.b16 %v764
        %v2875 = vunpack.c.h.b16 %v764
        %v2876 = vunpack.c.l.b16 %v765
        %v2877 = vunpack.c.h.b16 %v765
        %v2878 = vunpack.c.l.b16 %v766
        %v2879 = vunpack.c.h.b16 %v766
        %v2880 = vunpack.c.l.b16 %v767
        %v2881 = vunpack.c.h.b16 %v767
        %v2882 = vunpack.c.l.b16 %v768
        %v2883 = vunpack.c.h.b16 %v768
        %v2884 = vunpack.c.l.b16 %v769
        %v2885 = vunpack.c.h.b16 %v769
        %v2886 = vunpack.c.l.b16 %v770
        %v2887 = vunpack.c.h.b16 %v770
        %v2888 = vunpack.c.l.b16 %v771
        %v2889 = vunpack.c.h.b16 %v771
        %v2890 = vunpack.c.l.b16 %v772
        %v2891 = vunpack.c.h.b16 %v772
        %v2892 = vunpack.c.l.b16 %v773
        %v2893 = vunpack.c.h.b16 %v773
        %v2894 = vunpack.c.l.b16 %v774
        %v2895 = vunpack.c.h.b16 %v774
        %v2896 = vunpack.c.l.b16 %v775
        %v2897 = vunpack.c.h.b16 %v775
        %v2898 = vunpack.c.l.b16 %v776
        %v2899 = vunpack.c.h.b16 %v776
        %v2900 = vunpack.c.l.b16 %v777
        %v2901 = vunpack.c.h.b16 %v777
        %v2902 = vunpack.c.l.b16 %v778
        %v2903 = vunpack.c.h.b16 %v778
        %v2904 = vunpack.c.l.b16 %v779
        %v2905 = vunpack.c.h.b16 %v779
        %v2906 = vunpack.c.l.b16 %v780
        %v2907 = vunpack.c.h.b16 %v780
        %v2908 = vunpack.c.l.b16 %v781
        %v2909 = vunpack.c.h.b16 %v781
        %v2910 = vunpack.c.l.b16 %v782
        %v2911 = vunpack.c.h.b16 %v782
        %v2912 = vunpack.c.l.b16 %v783
        %v2913 = vunpack.c.h.b16 %v783
        %v2914 = vunpack.c.l.b16 %v784
        %v2915 = vunpack.c.h.b16 %v784
        %v2916 = vunpack.c.l.b16 %v785
        %v2917 = vunpack.c.h.b16 %v785
        %v2918 = vunpack.c.l.b16 %v786
        %v2919 = vunpack.c.h.b16 %v786
        %v2920 = vunpack.c.l.b16 %v787
        %v2921 = vunpack.c.h.b16 %v787
        %v2922 = vunpack.c.l.b16 %v788
        %v2923 = vunpack.c.h.b16 %v788
        %v2924 = vunpack.c.l.b16 %v789
        %v2925 = vunpack.c.h.b16 %v789
        %v2926 = vunpack.c.l.b16 %v790
        %v2927 = vunpack.c.h.b16 %v790
        %v2928 = vunpack.c.l.b16 %v791
        %v2929 = vunpack.c.h.b16 %v791
        %v2930 = vunpack.c.l.b16 %v792
        %v2931 = vunpack.c.h.b16 %v792
        %v2932 = vunpack.c.l.b16 %v793
        %v2933 = vunpack.c.h.b16 %v793
        %v2934 = vunpack.c.l.b16 %v794
        %v2935 = vunpack.c.h.b16 %v794
        %v2936 = vunpack.c.l.b16 %v795
        %v2937 = vunpack.c.h.b16 %v795
        %v2938 = vunpack.c.l.b16 %v796
        %v2939 = vunpack.c.h.b16 %v796
        %v2940 = vunpack.c.l.b16 %v797
        %v2941 = vunpack.c.h.b16 %v797
        %v2942 = vunpack.c.l.b16 %v798
        %v2943 = vunpack.c.h.b16 %v798
        %v2944 = vunpack.c.l.b16 %v799
        %v2945 = vunpack.c.h.b16 %v799
        %v2946 = vunpack.c.l.b16 %v800
        %v2947 = vunpack.c.h.b16 %v800
        %v2948 = vunpack.c.l.b16 %v801
        %v2949 = vunpack.c.h.b16 %v801
        %v2950 = vunpack.c.l.b16 %v802
        %v2951 = vunpack.c.h.b16 %v802
        %v2952 = vunpack.c.l.b16 %v803
        %v2953 = vunpack.c.h.b16 %v803
        %v2954 = vunpack.c.l.b16 %v804
        %v2955 = vunpack.c.h.b16 %v804
        %v2956 = vunpack.c.l.b16 %v805
        %v2957 = vunpack.c.h.b16 %v805
        %v2958 = vunpack.c.l.b16 %v806
        %v2959 = vunpack.c.h.b16 %v806
        %v2960 = vunpack.c.l.b16 %v807
        %v2961 = vunpack.c.h.b16 %v807
        %v2962 = vunpack.c.l.b16 %v808
        %v2963 = vunpack.c.h.b16 %v808
        %v2964 = vunpack.c.l.b16 %v809
        %v2965 = vunpack.c.h.b16 %v809
        %v2966 = vunpack.c.l.b16 %v810
        %v2967 = vunpack.c.h.b16 %v810
        %v2968 = vunpack.c.l.b16 %v811
        %v2969 = vunpack.c.h.b16 %v811
        %v2970 = vunpack.c.l.b16 %v812
        %v2971 = vunpack.c.h.b16 %v812
        %v2972 = vunpack.c.l.b16 %v813
        %v2973 = vunpack.c.h.b16 %v813
        %v2974 = vunpack.c.l.b16 %v814
        %v2975 = vunpack.c.h.b16 %v814
        %v2976 = vunpack.c.l.b16 %v815
        %v2977 = vunpack.c.h.b16 %v815
        %v2978 = vunpack.c.l.b16 %v816
        %v2979 = vunpack.c.h.b16 %v816
        %v2980 = vunpack.c.l.b16 %v817
        %v2981 = vunpack.c.h.b16 %v817
        %v2982 = vunpack.c.l.b16 %v818
        %v2983 = vunpack.c.h.b16 %v818
        %v2984 = vunpack.c.l.b16 %v819
        %v2985 = vunpack.c.h.b16 %v819
        %v2986 = vunpack.c.l.b16 %v820
        %v2987 = vunpack.c.h.b16 %v820
        %v2988 = vunpack.c.l.b16 %v821
        %v2989 = vunpack.c.h.b16 %v821
        %v2990 = vunpack.c.l.b16 %v822
        %v2991 = vunpack.c.h.b16 %v822
        %v2992 = vunpack.c.l.b16 %v823
        %v2993 = vunpack.c.h.b16 %v823
        %v2994 = vunpack.c.l.b16 %v824
        %v2995 = vunpack.c.h.b16 %v824
        %v2996 = vunpack.c.l.b16 %v825
        %v2997 = vunpack.c.h.b16 %v825
        %v2998 = vunpack.c.l.b16 %v826
        %v2999 = vunpack.c.h.b16 %v826
        %v3000 = vunpack.c.l.b16 %v827
        %v3001 = vunpack.c.h.b16 %v827
        %v3002 = vunpack.c.l.b16 %v828
        %v3003 = vunpack.c.h.b16 %v828
        %v3004 = vunpack.c.l.b16 %v829
        %v3005 = vunpack.c.h.b16 %v829
        %v3006 = vunpack.c.l.b16 %v830
        %v3007 = vunpack.c.h.b16 %v830
        %v3008 = vunpack.c.l.b16 %v831
        %v3009 = vunpack.c.h.b16 %v831
        %v3010 = vunpack.c.l.b16 %v832
        %v3011 = vunpack.c.h.b16 %v832
        %v3012 = vunpack.c.l.b16 %v833
        %v3013 = vunpack.c.h.b16 %v833
        %v3014 = vunpack.c.l.b16 %v834
        %v3015 = vunpack.c.h.b16 %v834
        %v3016 = vunpack.c.l.b16 %v835
        %v3017 = vunpack.c.h.b16 %v835
        %v3018 = vunpack.c.l.b16 %v836
        %v3019 = vunpack.c.h.b16 %v836
        %v3020 = vunpack.c.l.b16 %v837
        %v3021 = vunpack.c.h.b16 %v837
        %v3022 = vunpack.c.l.b16 %v838
        %v3023 = vunpack.c.h.b16 %v838
        %v3024 = vunpack.c.l.b16 %v839
        %v3025 = vunpack.c.h.b16 %v839
        %v3026 = vunpack.c.l.b16 %v840
        %v3027 = vunpack.c.h.b16 %v840
        %v3028 = vunpack.c.l.b16 %v841
        %v3029 = vunpack.c.h.b16 %v841
        %v3030 = vunpack.c.l.b16 %v842
        %v3031 = vunpack.c.h.b16 %v842
        %v3032 = vunpack.c.l.b16 %v843
        %v3033 = vunpack.c.h.b16 %v843
        %v3034 = vunpack.c.l.b16 %v844
        %v3035 = vunpack.c.h.b16 %v844
        %v3036 = vunpack.c.l.b16 %v845
        %v3037 = vunpack.c.h.b16 %v845
        %v3038 = vunpack.c.l.b16 %v846
        %v3039 = vunpack.c.h.b16 %v846
        %v3040 = vunpack.c.l.b16 %v847
        %v3041 = vunpack.c.h.b16 %v847
        %v3042 = vunpack.c.l.b16 %v848
        %v3043 = vunpack.c.h.b16 %v848
        %v3044 = vunpack.c.l.b16 %v849
        %v3045 = vunpack.c.h.b16 %v849
        %v3046 = vunpack.c.l.b16 %v850
        %v3047 = vunpack.c.h.b16 %v850
        %v3048 = vunpack.c.l.b16 %v851
        %v3049 = vunpack.c.h.b16 %v851
        %v3050 = vunpack.c.l.b16 %v852
        %v3051 = vunpack.c.h.b16 %v852
        %v3052 = vunpack.c.l.b16 %v853
        %v3053 = vunpack.c.h.b16 %v853
        %v3054 = vunpack.c.l.b16 %v854
        %v3055 = vunpack.c.h.b16 %v854
        %v3056 = vunpack.c.l.b16 %v855
        %v3057 = vunpack.c.h.b16 %v855
        %v3058 = vunpack.c.l.b16 %v856
        %v3059 = vunpack.c.h.b16 %v856
        %v3060 = vunpack.c.l.b16 %v857
        %v3061 = vunpack.c.h.b16 %v857
        %v3062 = vunpack.c.l.b16 %v858
        %v3063 = vunpack.c.h.b16 %v858
        %v3064 = vunpack.c.l.b16 %v859
        %v3065 = vunpack.c.h.b16 %v859
        %v3066 = vunpack.c.l.b16 %v860
        %v3067 = vunpack.c.h.b16 %v860
        %v3068 = vunpack.c.l.b16 %v861
        %v3069 = vunpack.c.h.b16 %v861
        %v3070 = vunpack.c.l.b16 %v862
        %v3071 = vunpack.c.h.b16 %v862
        %v3072 = vunpack.c.l.b16 %v863
        %v3073 = vunpack.c.h.b16 %v863
        %v3074 = vunpack.c.l.b16 %v864
        %v3075 = vunpack.c.h.b16 %v864
        %v3076 = vunpack.c.l.b16 %v865
        %v3077 = vunpack.c.h.b16 %v865
        %v3078 = vunpack.c.l.b16 %v866
        %v3079 = vunpack.c.h.b16 %v866
        %v3080 = vunpack.c.l.b16 %v867
        %v3081 = vunpack.c.h.b16 %v867
        %v3082 = vunpack.c.l.b16 %v868
        %v3083 = vunpack.c.h.b16 %v868
        %v3084 = vunpack.c.l.b16 %v869
        %v3085 = vunpack.c.h.b16 %v869
        %v3086 = vunpack.c.l.b16 %v870
        %v3087 = vunpack.c.h.b16 %v870
        %v3088 = vunpack.c.l.b16 %v871
        %v3089 = vunpack.c.h.b16 %v871
        %v3090 = vunpack.c.l.b16 %v872
        %v3091 = vunpack.c.h.b16 %v872
        %v3092 = vunpack.c.l.b16 %v873
        %v3093 = vunpack.c.h.b16 %v873
        %v3094 = vunpack.c.l.b16 %v874
        %v3095 = vunpack.c.h.b16 %v874
        %v3096 = vunpack.c.l.b16 %v875
        %v3097 = vunpack.c.h.b16 %v875
        %v3098 = vunpack.c.l.b16 %v876
        %v3099 = vunpack.c.h.b16 %v876
        %v3100 = vunpack.c.l.b16 %v877
        %v3101 = vunpack.c.h.b16 %v877
        %v3102 = vunpack.c.l.b16 %v878
        %v3103 = vunpack.c.h.b16 %v878
        %v3104 = vunpack.c.l.b16 %v879
        %v3105 = vunpack.c.h.b16 %v879
        %v3106 = vunpack.c.l.b16 %v880
        %v3107 = vunpack.c.h.b16 %v880
        %v3108 = vunpack.c.l.b16 %v881
        %v3109 = vunpack.c.h.b16 %v881
        %v3110 = vunpack.c.l.b16 %v882
        %v3111 = vunpack.c.h.b16 %v882
        %v3112 = vunpack.c.l.b16 %v883
        %v3113 = vunpack.c.h.b16 %v883
        %v3114 = vunpack.c.l.b16 %v884
        %v3115 = vunpack.c.h.b16 %v884
        %v3116 = vunpack.c.l.b16 %v885
        %v3117 = vunpack.c.h.b16 %v885
        %v3118 = vunpack.c.l.b16 %v886
        %v3119 = vunpack.c.h.b16 %v886
        %v3120 = vunpack.c.l.b16 %v887
        %v3121 = vunpack.c.h.b16 %v887
        %v3122 = vunpack.c.l.b16 %v888
        %v3123 = vunpack.c.h.b16 %v888
        %v3124 = vunpack.c.l.b16 %v889
        %v3125 = vunpack.c.h.b16 %v889
        %v3126 = vunpack.c.l.b16 %v890
        %v3127 = vunpack.c.h.b16 %v890
        %v3128 = vunpack.c.l.b16 %v891
        %v3129 = vunpack.c.h.b16 %v891
        %v3130 = vunpack.c.l.b16 %v892
        %v3131 = vunpack.c.h.b16 %v892
        %v3132 = vunpack.c.l.b16 %v893
        %v3133 = vunpack.c.h.b16 %v893
        %v3134 = vunpack.c.l.b16 %v894
        %v3135 = vunpack.c.h.b16 %v894
        %v3136 = vunpack.c.l.b16 %v895
        %v3137 = vunpack.c.h.b16 %v895
        %v3138 = vunpack.c.l.b16 %v896
        %v3139 = vunpack.c.h.b16 %v896
        %v3140 = vunpack.c.l.b16 %v897
        %v3141 = vunpack.c.h.b16 %v897
        %v3142 = vunpack.c.l.b16 %v898
        %v3143 = vunpack.c.h.b16 %v898
        %v3144 = vunpack.c.l.b16 %v899
        %v3145 = vunpack.c.h.b16 %v899
        %v3146 = vunpack.c.l.b16 %v900
        %v3147 = vunpack.c.h.b16 %v900
        %v3148 = vunpack.c.l.b16 %v901
        %v3149 = vunpack.c.h.b16 %v901
        %v3150 = vunpack.c.l.b16 %v902
        %v3151 = vunpack.c.h.b16 %v902
        %v3152 = vunpack.c.l.b16 %v903
        %v3153 = vunpack.c.h.b16 %v903
        %v3154 = vunpack.c.l.b16 %v904
        %v3155 = vunpack.c.h.b16 %v904
        %v3156 = vunpack.c.l.b16 %v905
        %v3157 = vunpack.c.h.b16 %v905
        %v3158 = vunpack.c.l.b16 %v906
        %v3159 = vunpack.c.h.b16 %v906
        %v3160 = vunpack.c.l.b16 %v907
        %v3161 = vunpack.c.h.b16 %v907
        %v3162 = vunpack.c.l.b16 %v908
        %v3163 = vunpack.c.h.b16 %v908
        %v3164 = vunpack.c.l.b16 %v909
        %v3165 = vunpack.c.h.b16 %v909
        %v3166 = vunpack.c.l.b16 %v910
        %v3167 = vunpack.c.h.b16 %v910
        %v3168 = vunpack.c.l.b16 %v911
        %v3169 = vunpack.c.h.b16 %v911
        %v3170 = vunpack.c.l.b16 %v912
        %v3171 = vunpack.c.h.b16 %v912
        %v3172 = vunpack.c.l.b16 %v913
        %v3173 = vunpack.c.h.b16 %v913
        %v3174 = vunpack.c.l.b16 %v914
        %v3175 = vunpack.c.h.b16 %v914
        %v3176 = vunpack.c.l.b16 %v915
        %v3177 = vunpack.c.h.b16 %v915
        %v3178 = vunpack.c.l.b16 %v916
        %v3179 = vunpack.c.h.b16 %v916
        %v3180 = vunpack.c.l.b16 %v917
        %v3181 = vunpack.c.h.b16 %v917
        %v3182 = vunpack.c.l.b16 %v918
        %v3183 = vunpack.c.h.b16 %v918
        %v3184 = vunpack.c.l.b16 %v919
        %v3185 = vunpack.c.h.b16 %v919
        %v3186 = vunpack.c.l.b16 %v920
        %v3187 = vunpack.c.h.b16 %v920
        %v3188 = vunpack.c.l.b16 %v921
        %v3189 = vunpack.c.h.b16 %v921
        %v3190 = vunpack.c.l.b16 %v922
        %v3191 = vunpack.c.h.b16 %v922
        %v3192 = vunpack.c.l.b16 %v923
        %v3193 = vunpack.c.h.b16 %v923
        %v3194 = vunpack.c.l.b16 %v924
        %v3195 = vunpack.c.h.b16 %v924
        %v3196 = vunpack.c.l.b16 %v925
        %v3197 = vunpack.c.h.b16 %v925
        %v3198 = vunpack.c.l.b16 %v926
        %v3199 = vunpack.c.h.b16 %v926
        %v3200 = vunpack.c.l.b16 %v927
        %v3201 = vunpack.c.h.b16 %v927
        %v3202 = vunpack.c.l.b16 %v928
        %v3203 = vunpack.c.h.b16 %v928
        %v3204 = vunpack.c.l.b16 %v929
        %v3205 = vunpack.c.h.b16 %v929
        %v3206 = vunpack.c.l.b16 %v930
        %v3207 = vunpack.c.h.b16 %v930
        %v3208 = vunpack.c.l.b16 %v931
        %v3209 = vunpack.c.h.b16 %v931
        %v3210 = vunpack.c.l.b16 %v932
        %v3211 = vunpack.c.h.b16 %v932
        %v3212 = vunpack.c.l.b16 %v933
        %v3213 = vunpack.c.h.b16 %v933
        %v3214 = vunpack.c.l.b16 %v934
        %v3215 = vunpack.c.h.b16 %v934
        %v3216 = vunpack.c.l.b16 %v935
        %v3217 = vunpack.c.h.b16 %v935
        %v3218 = vunpack.c.l.b16 %v936
        %v3219 = vunpack.c.h.b16 %v936
        %v3220 = vunpack.c.l.b16 %v937
        %v3221 = vunpack.c.h.b16 %v937
        %v3222 = vunpack.c.l.b16 %v938
        %v3223 = vunpack.c.h.b16 %v938
        %v3224 = vunpack.c.l.b16 %v939
        %v3225 = vunpack.c.h.b16 %v939
        %v3226 = vunpack.c.l.b16 %v940
        %v3227 = vunpack.c.h.b16 %v940
        %v3228 = vunpack.c.l.b16 %v941
        %v3229 = vunpack.c.h.b16 %v941
        %v3230 = vunpack.c.l.b16 %v942
        %v3231 = vunpack.c.h.b16 %v942
        %v3232 = vunpack.c.l.b16 %v943
        %v3233 = vunpack.c.h.b16 %v943
        %v3234 = vunpack.c.l.b16 %v944
        %v3235 = vunpack.c.h.b16 %v944
        %v3236 = vunpack.c.l.b16 %v945
        %v3237 = vunpack.c.h.b16 %v945
        %v3238 = vunpack.c.l.b16 %v946
        %v3239 = vunpack.c.h.b16 %v946
        %v3240 = vunpack.c.l.b16 %v947
        %v3241 = vunpack.c.h.b16 %v947
        %v3242 = vunpack.c.l.b16 %v948
        %v3243 = vunpack.c.h.b16 %v948
        %v3244 = vunpack.c.l.b16 %v949
        %v3245 = vunpack.c.h.b16 %v949
        %v3246 = vunpack.c.l.b16 %v950
        %v3247 = vunpack.c.h.b16 %v950
        %v3248 = vunpack.c.l.b16 %v951
        %v3249 = vunpack.c.h.b16 %v951
        %v3250 = vunpack.c.l.b16 %v952
        %v3251 = vunpack.c.h.b16 %v952
        %v3252 = vunpack.c.l.b16 %v953
        %v3253 = vunpack.c.h.b16 %v953
        %v3254 = vunpack.c.l.b16 %v954
        %v3255 = vunpack.c.h.b16 %v954
        %v3256 = vunpack.c.l.b16 %v955
        %v3257 = vunpack.c.h.b16 %v955
        %v3258 = vunpack.c.l.b16 %v956
        %v3259 = vunpack.c.h.b16 %v956
        %v3260 = vunpack.c.l.b16 %v957
        %v3261 = vunpack.c.h.b16 %v957
        %v3262 = vunpack.c.l.b16 %v958
        %v3263 = vunpack.c.h.b16 %v958
        %v3264 = vunpack.c.l.b16 %v959
        %v3265 = vunpack.c.h.b16 %v959
        %v3266 = vunpack.c.l.b16 %v960
        %v3267 = vunpack.c.h.b16 %v960
        %v3268 = vunpack.c.l.b16 %v961
        %v3269 = vunpack.c.h.b16 %v961
        %v3270 = vunpack.c.l.b16 %v962
        %v3271 = vunpack.c.h.b16 %v962
        %v3272 = vunpack.c.l.b16 %v963
        %v3273 = vunpack.c.h.b16 %v963
        %v3274 = vunpack.c.l.b16 %v964
        %v3275 = vunpack.c.h.b16 %v964
        %v3276 = vunpack.c.l.b16 %v965
        %v3277 = vunpack.c.h.b16 %v965
        %v3278 = vunpack.c.l.b16 %v966
        %v3279 = vunpack.c.h.b16 %v966
        %v3280 = vunpack.c.l.b16 %v967
        %v3281 = vunpack.c.h.b16 %v967
        %v3282 = vunpack.c.l.b16 %v968
        %v3283 = vunpack.c.h.b16 %v968
        %v3284 = vunpack.c.l.b16 %v969
        %v3285 = vunpack.c.h.b16 %v969
        %v3286 = vunpack.c.l.b16 %v970
        %v3287 = vunpack.c.h.b16 %v970
        %v3288 = vunpack.c.l.b16 %v971
        %v3289 = vunpack.c.h.b16 %v971
        %v3290 = vunpack.c.l.b16 %v972
        %v3291 = vunpack.c.h.b16 %v972
        %v3292 = vunpack.c.l.b16 %v973
        %v3293 = vunpack.c.h.b16 %v973
        %v3294 = vunpack.c.l.b16 %v974
        %v3295 = vunpack.c.h.b16 %v974
        %v3296 = vunpack.c.l.b16 %v975
        %v3297 = vunpack.c.h.b16 %v975
        %v3298 = vunpack.c.l.b16 %v976
        %v3299 = vunpack.c.h.b16 %v976
        %v3300 = vunpack.c.l.b16 %v977
        %v3301 = vunpack.c.h.b16 %v977
        %v3302 = vunpack.c.l.b16 %v978
        %v3303 = vunpack.c.h.b16 %v978
        %v3304 = vunpack.c.l.b16 %v979
        %v3305 = vunpack.c.h.b16 %v979
        %v3306 = vunpack.c.l.b16 %v980
        %v3307 = vunpack.c.h.b16 %v980
        %v3308 = vunpack.c.l.b16 %v981
        %v3309 = vunpack.c.h.b16 %v981
        %v3310 = vunpack.c.l.b16 %v982
        %v3311 = vunpack.c.h.b16 %v982
        %v3312 = vunpack.c.l.b16 %v983
        %v3313 = vunpack.c.h.b16 %v983
        %v3314 = vunpack.c.l.b16 %v984
        %v3315 = vunpack.c.h.b16 %v984
        %v3316 = vunpack.c.l.b16 %v985
        %v3317 = vunpack.c.h.b16 %v985
        %v3318 = vunpack.c.l.b16 %v986
        %v3319 = vunpack.c.h.b16 %v986
        %v3320 = vunpack.c.l.b16 %v987
        %v3321 = vunpack.c.h.b16 %v987
        %v3322 = vunpack.c.l.b16 %v988
        %v3323 = vunpack.c.h.b16 %v988
        %v3324 = vunpack.c.l.b16 %v989
        %v3325 = vunpack.c.h.b16 %v989
        %v3326 = vunpack.c.l.b16 %v990
        %v3327 = vunpack.c.h.b16 %v990
        %v3328 = vunpack.c.l.b16 %v991
        %v3329 = vunpack.c.h.b16 %v991
        %v3330 = vunpack.c.l.b16 %v992
        %v3331 = vunpack.c.h.b16 %v992
        %v3332 = vunpack.c.l.b16 %v993
        %v3333 = vunpack.c.h.b16 %v993
        %v3334 = vunpack.c.l.b16 %v994
        %v3335 = vunpack.c.h.b16 %v994
        %v3336 = vunpack.c.l.b16 %v995
        %v3337 = vunpack.c.h.b16 %v995
        %v3338 = vunpack.c.l.b16 %v996
        %v3339 = vunpack.c.h.b16 %v996
        %v3340 = vunpack.c.l.b16 %v997
        %v3341 = vunpack.c.h.b16 %v997
        %v3342 = vunpack.c.l.b16 %v998
        %v3343 = vunpack.c.h.b16 %v998
        %v3344 = vunpack.c.l.b16 %v999
        %v3345 = vunpack.c.h.b16 %v999
        %v3346 = vunpack.c.l.b16 %v1000
        %v3347 = vunpack.c.h.b16 %v1000
        %v3348 = vunpack.c.l.b16 %v1001
        %v3349 = vunpack.c.h.b16 %v1001
        %v3350 = vunpack.c.l.b16 %v1002
        %v3351 = vunpack.c.h.b16 %v1002
        %v3352 = vunpack.c.l.b16 %v1003
        %v3353 = vunpack.c.h.b16 %v1003
        %v3354 = vunpack.c.l.b16 %v1004
        %v3355 = vunpack.c.h.b16 %v1004
        %v3356 = vunpack.c.l.b16 %v1005
        %v3357 = vunpack.c.h.b16 %v1005
        %v3358 = vunpack.c.l.b16 %v1006
        %v3359 = vunpack.c.h.b16 %v1006
        %v3360 = vunpack.c.l.b16 %v1007
        %v3361 = vunpack.c.h.b16 %v1007
        %v3362 = vunpack.c.l.b16 %v1008
        %v3363 = vunpack.c.h.b16 %v1008
        %v3364 = vunpack.c.l.b16 %v1009
        %v3365 = vunpack.c.h.b16 %v1009
        %v3366 = vunpack.c.l.b16 %v1010
        %v3367 = vunpack.c.h.b16 %v1010
        %v3368 = vunpack.c.l.b16 %v1011
        %v3369 = vunpack.c.h.b16 %v1011
        %v3370 = vunpack.c.l.b16 %v1012
        %v3371 = vunpack.c.h.b16 %v1012
        %v3372 = vunpack.c.l.b16 %v1013
        %v3373 = vunpack.c.h.b16 %v1013
        %v3374 = vunpack.c.l.b16 %v1014
        %v3375 = vunpack.c.h.b16 %v1014
        %v3376 = vunpack.c.l.b16 %v1015
        %v3377 = vunpack.c.h.b16 %v1015
        %v3378 = vunpack.c.l.b16 %v1016
        %v3379 = vunpack.c.h.b16 %v1016
        %v3380 = vunpack.c.l.b16 %v1017
        %v3381 = vunpack.c.h.b16 %v1017
        %v3382 = vunpack.c.l.b16 %v1018
        %v3383 = vunpack.c.h.b16 %v1018
        %v3384 = vunpack.c.l.b16 %v1019
        %v3385 = vunpack.c.h.b16 %v1019
        %v3386 = vunpack.c.l.b16 %v1020
        %v3387 = vunpack.c.h.b16 %v1020
        %v3388 = vunpack.c.l.b16 %v1021
        %v3389 = vunpack.c.h.b16 %v1021
        %v3390 = vunpack.c.l.b16 %v1022
        %v3391 = vunpack.c.h.b16 %v1022
        %v3392 = vunpack.c.l.b16 %v1023
        %v3393 = vunpack.c.h.b16 %v1023
        %v3394 = vunpack.c.l.b16 %v1024
        %v3395 = vunpack.c.h.b16 %v1024
        %v3396 = vunpack.c.l.b16 %v1025
        %v3397 = vunpack.c.h.b16 %v1025
        %v3398 = vunpack.c.l.b16 %v1026
        %v3399 = vunpack.c.h.b16 %v1026
        %v3400 = vunpack.c.l.b16 %v1027
        %v3401 = vunpack.c.h.b16 %v1027
        %v3402 = vunpack.c.l.b16 %v1028
        %v3403 = vunpack.c.h.b16 %v1028
        %v3404 = vunpack.c.l.b16 %v1029
        %v3405 = vunpack.c.h.b16 %v1029
        %v3406 = vunpack.c.l.b16 %v1030
        %v3407 = vunpack.c.h.b16 %v1030
        %v3408 = vunpack.c.l.b16 %v1031
        %v3409 = vunpack.c.h.b16 %v1031
        %v3410 = vunpack.c.l.b16 %v1032
        %v3411 = vunpack.c.h.b16 %v1032
        %v3412 = vunpack.c.l.b16 %v1033
        %v3413 = vunpack.c.h.b16 %v1033
        %v3414 = vunpack.c.l.b16 %v1034
        %v3415 = vunpack.c.h.b16 %v1034
        %v3416 = vunpack.c.l.b16 %v1035
        %v3417 = vunpack.c.h.b16 %v1035
        %v3418 = vunpack.c.l.b16 %v1036
        %v3419 = vunpack.c.h.b16 %v1036
        %v3420 = vunpack.c.l.b16 %v1037
        %v3421 = vunpack.c.h.b16 %v1037
        %v3422 = vunpack.c.l.b16 %v1038
        %v3423 = vunpack.c.h.b16 %v1038
        %v3424 = vunpack.c.l.b16 %v1039
        %v3425 = vunpack.c.h.b16 %v1039
        %v3426 = vunpack.c.l.b16 %v1040
        %v3427 = vunpack.c.h.b16 %v1040
        %v3428 = vunpack.c.l.b16 %v1041
        %v3429 = vunpack.c.h.b16 %v1041
        %v3430 = vunpack.c.l.b16 %v1042
        %v3431 = vunpack.c.h.b16 %v1042
        %v3432 = vunpack.c.l.b16 %v1043
        %v3433 = vunpack.c.h.b16 %v1043
        %v3434 = vunpack.c.l.b16 %v1044
        %v3435 = vunpack.c.h.b16 %v1044
        %v3436 = vunpack.c.l.b16 %v1045
        %v3437 = vunpack.c.h.b16 %v1045
        %v3438 = vunpack.c.l.b16 %v1046
        %v3439 = vunpack.c.h.b16 %v1046
        %v3440 = vunpack.c.l.b16 %v1047
        %v3441 = vunpack.c.h.b16 %v1047
        %v3442 = vunpack.c.l.b16 %v1048
        %v3443 = vunpack.c.h.b16 %v1048
        %v3444 = vunpack.c.l.b16 %v1049
        %v3445 = vunpack.c.h.b16 %v1049
        %v3446 = vunpack.c.l.b16 %v1050
        %v3447 = vunpack.c.h.b16 %v1050
        %v3448 = vunpack.c.l.b16 %v1051
        %v3449 = vunpack.c.h.b16 %v1051
        %v3450 = vunpack.c.l.b16 %v1052
        %v3451 = vunpack.c.h.b16 %v1052
        %v3452 = vunpack.c.l.b16 %v1053
        %v3453 = vunpack.c.h.b16 %v1053
        %v3454 = vunpack.c.l.b16 %v1054
        %v3455 = vunpack.c.h.b16 %v1054
        %v3456 = vunpack.c.l.b16 %v1055
        %v3457 = vunpack.c.h.b16 %v1055
        %v3458 = vunpack.c.l.b16 %v1056
        %v3459 = vunpack.c.h.b16 %v1056
        %v3460 = vunpack.c.l.b16 %v1057
        %v3461 = vunpack.c.h.b16 %v1057
        %v3462 = vunpack.c.l.b16 %v1058
        %v3463 = vunpack.c.h.b16 %v1058
        %v3464 = vunpack.c.l.b16 %v1059
        %v3465 = vunpack.c.h.b16 %v1059
        %v3466 = vunpack.c.l.b16 %v1060
        %v3467 = vunpack.c.h.b16 %v1060
        %v3468 = vunpack.c.l.b16 %v1061
        %v3469 = vunpack.c.h.b16 %v1061
        %v3470 = vunpack.c.l.b16 %v1062
        %v3471 = vunpack.c.h.b16 %v1062
        %v3472 = vunpack.c.l.b16 %v1063
        %v3473 = vunpack.c.h.b16 %v1063
        %v3474 = vunpack.c.l.b16 %v1064
        %v3475 = vunpack.c.h.b16 %v1064
        %v3476 = vunpack.c.l.b16 %v1065
        %v3477 = vunpack.c.h.b16 %v1065
        %v3478 = vunpack.c.l.b16 %v1066
        %v3479 = vunpack.c.h.b16 %v1066
        %v3480 = vunpack.c.l.b16 %v1067
        %v3481 = vunpack.c.h.b16 %v1067
        %v3482 = vunpack.c.l.b16 %v1068
        %v3483 = vunpack.c.h.b16 %v1068
        %v3484 = vunpack.c.l.b16 %v1069
        %v3485 = vunpack.c.h.b16 %v1069
        %v3486 = vunpack.c.l.b16 %v1070
        %v3487 = vunpack.c.h.b16 %v1070
        %v3488 = vunpack.c.l.b16 %v1071
        %v3489 = vunpack.c.h.b16 %v1071
        %v3490 = vunpack.c.l.b16 %v1072
        %v3491 = vunpack.c.h.b16 %v1072
        %v3492 = vunpack.c.l.b16 %v1073
        %v3493 = vunpack.c.h.b16 %v1073
        %v3494 = vunpack.c.l.b16 %v1074
        %v3495 = vunpack.c.h.b16 %v1074
        %v3496 = vunpack.c.l.b16 %v1075
        %v3497 = vunpack.c.h.b16 %v1075
        %v3498 = vunpack.c.l.b16 %v1076
        %v3499 = vunpack.c.h.b16 %v1076
        %v3500 = vunpack.c.l.b16 %v1077
        %v3501 = vunpack.c.h.b16 %v1077
        %v3502 = vpack.c.b16 %v1970, %v1966
        %v3503 = vpack.c.b16 %v1971, %v1967
        %v3504 = vpack.c.b16 %v1972, %v1968
        %v3505 = vpack.c.b16 %v1973, %v1969
        %v3506 = vpack.c.b16 %v1978, %v1974
        %v3507 = vpack.c.b16 %v1979, %v1975
        %v3508 = vpack.c.b16 %v1980, %v1976
        %v3509 = vpack.c.b16 %v1981, %v1977
        %v3510 = vpack.c.b16 %v1986, %v1982
        %v3511 = vpack.c.b16 %v1987, %v1983
        %v3512 = vpack.c.b16 %v1988, %v1984
        %v3513 = vpack.c.b16 %v1989, %v1985
        %v3514 = vpack.c.b16 %v1994, %v1990
        %v3515 = vpack.c.b16 %v1995, %v1991
        %v3516 = vpack.c.b16 %v1996, %v1992
        %v3517 = vpack.c.b16 %v1997, %v1993
        %v3518 = vpack.c.b16 %v2002, %v1998
        %v3519 = vpack.c.b16 %v2003, %v1999
        %v3520 = vpack.c.b16 %v2004, %v2000
        %v3521 = vpack.c.b16 %v2005, %v2001
        %v3522 = vpack.c.b16 %v2010, %v2006
        %v3523 = vpack.c.b16 %v2011, %v2007
        %v3524 = vpack.c.b16 %v2012, %v2008
        %v3525 = vpack.c.b16 %v2013, %v2009
        %v3526 = vpack.c.b16 %v2018, %v2014
        %v3527 = vpack.c.b16 %v2019, %v2015
        %v3528 = vpack.c.b16 %v2020, %v2016
        %v3529 = vpack.c.b16 %v2021, %v2017
        %v3530 = vpack.c.b16 %v2026, %v2022
        %v3531 = vpack.c.b16 %v2027, %v2023
        %v3532 = vpack.c.b16 %v2028, %v2024
        %v3533 = vpack.c.b16 %v2029, %v2025
        %v3534 = vpack.c.b16 %v2034, %v2030
        %v3535 = vpack.c.b16 %v2035, %v2031
        %v3536 = vpack.c.b16 %v2036, %v2032
        %v3537 = vpack.c.b16 %v2037, %v2033
        %v3538 = vpack.c.b16 %v2042, %v2038
        %v3539 = vpack.c.b16 %v2043, %v2039
        %v3540 = vpack.c.b16 %v2044, %v2040
        %v3541 = vpack.c.b16 %v2045, %v2041
        %v3542 = vpack.c.b16 %v2050, %v2046
        %v3543 = vpack.c.b16 %v2051, %v2047
        %v3544 = vpack.c.b16 %v2052, %v2048
        %v3545 = vpack.c.b16 %v2053, %v2049
        %v3546 = vpack.c.b16 %v2058, %v2054
        %v3547 = vpack.c.b16 %v2059, %v2055
        %v3548 = vpack.c.b16 %v2060, %v2056
        %v3549 = vpack.c.b16 %v2061, %v2057
        %v3550 = vpack.c.b16 %v2066, %v2062
        %v3551 = vpack.c.b16 %v2067, %v2063
        %v3552 = vpack.c.b16 %v2068, %v2064
        %v3553 = vpack.c.b16 %v2069, %v2065
        %v3554 = vpack.c.b16 %v2074, %v2070
        %v3555 = vpack.c.b16 %v2075, %v2071
        %v3556 = vpack.c.b16 %v2076, %v2072
        %v3557 = vpack.c.b16 %v2077, %v2073
        %v3558 = vpack.c.b16 %v2082, %v2078
        %v3559 = vpack.c.b16 %v2083, %v2079
        %v3560 = vpack.c.b16 %v2084, %v2080
        %v3561 = vpack.c.b16 %v2085, %v2081
        %v3562 = vpack.c.b16 %v2090, %v2086
        %v3563 = vpack.c.b16 %v2091, %v2087
        %v3564 = vpack.c.b16 %v2092, %v2088
        %v3565 = vpack.c.b16 %v2093, %v2089
        %v3566 = vpack.c.b16 %v2098, %v2094
        %v3567 = vpack.c.b16 %v2099, %v2095
        %v3568 = vpack.c.b16 %v2100, %v2096
        %v3569 = vpack.c.b16 %v2101, %v2097
        %v3570 = vpack.c.b16 %v2106, %v2102
        %v3571 = vpack.c.b16 %v2107, %v2103
        %v3572 = vpack.c.b16 %v2108, %v2104
        %v3573 = vpack.c.b16 %v2109, %v2105
        %v3574 = vpack.c.b16 %v2114, %v2110
        %v3575 = vpack.c.b16 %v2115, %v2111
        %v3576 = vpack.c.b16 %v2116, %v2112
        %v3577 = vpack.c.b16 %v2117, %v2113
        %v3578 = vpack.c.b16 %v2122, %v2118
        %v3579 = vpack.c.b16 %v2123, %v2119
        %v3580 = vpack.c.b16 %v2124, %v2120
        %v3581 = vpack.c.b16 %v2125, %v2121
        %v3582 = vpack.c.b16 %v2130, %v2126
        %v3583 = vpack.c.b16 %v2131, %v2127
        %v3584 = vpack.c.b16 %v2132, %v2128
        %v3585 = vpack.c.b16 %v2133, %v2129
        %v3586 = vpack.c.b16 %v2138, %v2134
        %v3587 = vpack.c.b16 %v2139, %v2135
        %v3588 = vpack.c.b16 %v2140, %v2136
        %v3589 = vpack.c.b16 %v2141, %v2137
        %v3590 = vpack.c.b16 %v2146, %v2142
        %v3591 = vpack.c.b16 %v2147, %v2143
        %v3592 = vpack.c.b16 %v2148, %v2144
        %v3593 = vpack.c.b16 %v2149, %v2145
        %v3594 = vpack.c.b16 %v2154, %v2150
        %v3595 = vpack.c.b16 %v2155, %v2151
        %v3596 = vpack.c.b16 %v2156, %v2152
        %v3597 = vpack.c.b16 %v2157, %v2153
        %v3598 = vpack.c.b16 %v2162, %v2158
        %v3599 = vpack.c.b16 %v2163, %v2159
        %v3600 = vpack.c.b16 %v2164, %v2160
        %v3601 = vpack.c.b16 %v2165, %v2161
        %v3602 = vpack.c.b16 %v2170, %v2166
        %v3603 = vpack.c.b16 %v2171, %v2167
        %v3604 = vpack.c.b16 %v2172, %v2168
        %v3605 = vpack.c.b16 %v2173, %v2169
        %v3606 = vpack.c.b16 %v2178, %v2174
        %v3607 = vpack.c.b16 %v2179, %v2175
        %v3608 = vpack.c.b16 %v2180, %v2176
        %v3609 = vpack.c.b16 %v2181, %v2177
        %v3610 = vpack.c.b16 %v2186, %v2182
        %v3611 = vpack.c.b16 %v2187, %v2183
        %v3612 = vpack.c.b16 %v2188, %v2184
        %v3613 = vpack.c.b16 %v2189, %v2185
        %v3614 = vpack.c.b16 %v2194, %v2190
        %v3615 = vpack.c.b16 %v2195, %v2191
        %v3616 = vpack.c.b16 %v2196, %v2192
        %v3617 = vpack.c.b16 %v2197, %v2193
        %v3618 = vpack.c.b16 %v2202, %v2198
        %v3619 = vpack.c.b16 %v2203, %v2199
        %v3620 = vpack.c.b16 %v2204, %v2200
        %v3621 = vpack.c.b16 %v2205, %v2201
        %v3622 = vpack.c.b16 %v2210, %v2206
        %v3623 = vpack.c.b16 %v2211, %v2207
        %v3624 = vpack.c.b16 %v2212, %v2208
        %v3625 = vpack.c.b16 %v2213, %v2209
        %v3626 = vpack.c.b16 %v2218, %v2214
        %v3627 = vpack.c.b16 %v2219, %v2215
        %v3628 = vpack.c.b16 %v2220, %v2216
        %v3629 = vpack.c.b16 %v2221, %v2217
        %v3630 = vpack.c.b16 %v2226, %v2222
        %v3631 = vpack.c.b16 %v2227, %v2223
        %v3632 = vpack.c.b16 %v2228, %v2224
        %v3633 = vpack.c.b16 %v2229, %v2225
        %v3634 = vpack.c.b16 %v2234, %v2230
        %v3635 = vpack.c.b16 %v2235, %v2231
        %v3636 = vpack.c.b16 %v2236, %v2232
        %v3637 = vpack.c.b16 %v2237, %v2233
        %v3638 = vpack.c.b16 %v2242, %v2238
        %v3639 = vpack.c.b16 %v2243, %v2239
        %v3640 = vpack.c.b16 %v2244, %v2240
        %v3641 = vpack.c.b16 %v2245, %v2241
        %v3642 = vpack.c.b16 %v2250, %v2246
        %v3643 = vpack.c.b16 %v2251, %v2247
        %v3644 = vpack.c.b16 %v2252, %v2248
        %v3645 = vpack.c.b16 %v2253, %v2249
        %v3646 = vpack.c.b16 %v2258, %v2254
        %v3647 = vpack.c.b16 %v2259, %v2255
        %v3648 = vpack.c.b16 %v2260, %v2256
        %v3649 = vpack.c.b16 %v2261, %v2257
        %v3650 = vpack.c.b16 %v2266, %v2262
        %v3651 = vpack.c.b16 %v2267, %v2263
        %v3652 = vpack.c.b16 %v2268, %v2264
        %v3653 = vpack.c.b16 %v2269, %v2265
        %v3654 = vpack.c.b16 %v2274, %v2270
        %v3655 = vpack.c.b16 %v2275, %v2271
        %v3656 = vpack.c.b16 %v2276, %v2272
        %v3657 = vpack.c.b16 %v2277, %v2273
        %v3658 = vpack.c.b16 %v2282, %v2278
        %v3659 = vpack.c.b16 %v2283, %v2279
        %v3660 = vpack.c.b16 %v2284, %v2280
        %v3661 = vpack.c.b16 %v2285, %v2281
        %v3662 = vpack.c.b16 %v2290, %v2286
        %v3663 = vpack.c.b16 %v2291, %v2287
        %v3664 = vpack.c.b16 %v2292, %v2288
        %v3665 = vpack.c.b16 %v2293, %v2289
        %v3666 = vpack.c.b16 %v2298, %v2294
        %v3667 = vpack.c.b16 %v2299, %v2295
        %v3668 = vpack.c.b16 %v2300, %v2296
        %v3669 = vpack.c.b16 %v2301, %v2297
        %v3670 = vpack.c.b16 %v2306, %v2302
        %v3671 = vpack.c.b16 %v2307, %v2303
        %v3672 = vpack.c.b16 %v2308, %v2304
        %v3673 = vpack.c.b16 %v2309, %v2305
        %v3674 = vpack.c.b16 %v2314, %v2310
        %v3675 = vpack.c.b16 %v2315, %v2311
        %v3676 = vpack.c.b16 %v2316, %v2312
        %v3677 = vpack.c.b16 %v2317, %v2313
        %v3678 = vpack.c.b16 %v2322, %v2318
        %v3679 = vpack.c.b16 %v2323, %v2319
        %v3680 = vpack.c.b16 %v2324, %v2320
        %v3681 = vpack.c.b16 %v2325, %v2321
        %v3682 = vpack.c.b16 %v2330, %v2326
        %v3683 = vpack.c.b16 %v2331, %v2327
        %v3684 = vpack.c.b16 %v2332, %v2328
        %v3685 = vpack.c.b16 %v2333, %v2329
        %v3686 = vpack.c.b16 %v2338, %v2334
        %v3687 = vpack.c.b16 %v2339, %v2335
        %v3688 = vpack.c.b16 %v2340, %v2336
        %v3689 = vpack.c.b16 %v2341, %v2337
        %v3690 = vpack.c.b16 %v2346, %v2342
        %v3691 = vpack.c.b16 %v2347, %v2343
        %v3692 = vpack.c.b16 %v2348, %v2344
        %v3693 = vpack.c.b16 %v2349, %v2345
        %v3694 = vpack.c.b16 %v2354, %v2350
        %v3695 = vpack.c.b16 %v2355, %v2351
        %v3696 = vpack.c.b16 %v2356, %v2352
        %v3697 = vpack.c.b16 %v2357, %v2353
        %v3698 = vpack.c.b16 %v2362, %v2358
        %v3699 = vpack.c.b16 %v2363, %v2359
        %v3700 = vpack.c.b16 %v2364, %v2360
        %v3701 = vpack.c.b16 %v2365, %v2361
        %v3702 = vpack.c.b16 %v2370, %v2366
        %v3703 = vpack.c.b16 %v2371, %v2367
        %v3704 = vpack.c.b16 %v2372, %v2368
        %v3705 = vpack.c.b16 %v2373, %v2369
        %v3706 = vpack.c.b16 %v2378, %v2374
        %v3707 = vpack.c.b16 %v2379, %v2375
        %v3708 = vpack.c.b16 %v2380, %v2376
        %v3709 = vpack.c.b16 %v2381, %v2377
        %v3710 = vpack.c.b16 %v2386, %v2382
        %v3711 = vpack.c.b16 %v2387, %v2383
        %v3712 = vpack.c.b16 %v2388, %v2384
        %v3713 = vpack.c.b16 %v2389, %v2385
        %v3714 = vpack.c.b16 %v2394, %v2390
        %v3715 = vpack.c.b16 %v2395, %v2391
        %v3716 = vpack.c.b16 %v2396, %v2392
        %v3717 = vpack.c.b16 %v2397, %v2393
        %v3718 = vpack.c.b16 %v2402, %v2398
        %v3719 = vpack.c.b16 %v2403, %v2399
        %v3720 = vpack.c.b16 %v2404, %v2400
        %v3721 = vpack.c.b16 %v2405, %v2401
        %v3722 = vpack.c.b16 %v2410, %v2406
        %v3723 = vpack.c.b16 %v2411, %v2407
        %v3724 = vpack.c.b16 %v2412, %v2408
        %v3725 = vpack.c.b16 %v2413, %v2409
        %v3726 = vpack.c.b16 %v2418, %v2414
        %v3727 = vpack.c.b16 %v2419, %v2415
        %v3728 = vpack.c.b16 %v2420, %v2416
        %v3729 = vpack.c.b16 %v2421, %v2417
        %v3730 = vpack.c.b16 %v2426, %v2422
        %v3731 = vpack.c.b16 %v2427, %v2423
        %v3732 = vpack.c.b16 %v2428, %v2424
        %v3733 = vpack.c.b16 %v2429, %v2425
        %v3734 = vpack.c.b16 %v2434, %v2430
        %v3735 = vpack.c.b16 %v2435, %v2431
        %v3736 = vpack.c.b16 %v2436, %v2432
        %v3737 = vpack.c.b16 %v2437, %v2433
        %v3738 = vpack.c.b16 %v2442, %v2438
        %v3739 = vpack.c.b16 %v2443, %v2439
        %v3740 = vpack.c.b16 %v2444, %v2440
        %v3741 = vpack.c.b16 %v2445, %v2441
        %v3742 = vpack.c.b16 %v2450, %v2446
        %v3743 = vpack.c.b16 %v2451, %v2447
        %v3744 = vpack.c.b16 %v2452, %v2448
        %v3745 = vpack.c.b16 %v2453, %v2449
        %v3746 = vpack.c.b16 %v2458, %v2454
        %v3747 = vpack.c.b16 %v2459, %v2455
        %v3748 = vpack.c.b16 %v2460, %v2456
        %v3749 = vpack.c.b16 %v2461, %v2457
        %v3750 = vpack.c.b16 %v2466, %v2462
        %v3751 = vpack.c.b16 %v2467, %v2463
        %v3752 = vpack.c.b16 %v2468, %v2464
        %v3753 = vpack.c.b16 %v2469, %v2465
        %v3754 = vpack.c.b16 %v2474, %v2470
        %v3755 = vpack.c.b16 %v2475, %v2471
        %v3756 = vpack.c.b16 %v2476, %v2472
        %v3757 = vpack.c.b16 %v2477, %v2473
        %v3758 = vpack.c.b16 %v2482, %v2478
        %v3759 = vpack.c.b16 %v2483, %v2479
        %v3760 = vpack.c.b16 %v2484, %v2480
        %v3761 = vpack.c.b16 %v2485, %v2481
        %v3762 = vpack.c.b16 %v2490, %v2486
        %v3763 = vpack.c.b16 %v2491, %v2487
        %v3764 = vpack.c.b16 %v2492, %v2488
        %v3765 = vpack.c.b16 %v2493, %v2489
        %v3766 = vpack.c.b16 %v2498, %v2494
        %v3767 = vpack.c.b16 %v2499, %v2495
        %v3768 = vpack.c.b16 %v2500, %v2496
        %v3769 = vpack.c.b16 %v2501, %v2497
        %v3770 = vpack.c.b16 %v2506, %v2502
        %v3771 = vpack.c.b16 %v2507, %v2503
        %v3772 = vpack.c.b16 %v2508, %v2504
        %v3773 = vpack.c.b16 %v2509, %v2505
        %v3774 = vpack.c.b16 %v2514, %v2510
        %v3775 = vpack.c.b16 %v2515, %v2511
        %v3776 = vpack.c.b16 %v2516, %v2512
        %v3777 = vpack.c.b16 %v2517, %v2513
        %v3778 = vpack.c.b16 %v2522, %v2518
        %v3779 = vpack.c.b16 %v2523, %v2519
        %v3780 = vpack.c.b16 %v2524, %v2520
        %v3781 = vpack.c.b16 %v2525, %v2521
        %v3782 = vpack.c.b16 %v2530, %v2526
        %v3783 = vpack.c.b16 %v2531, %v2527
        %v3784 = vpack.c.b16 %v2532, %v2528
        %v3785 = vpack.c.b16 %v2533, %v2529
        %v3786 = vpack.c.b16 %v2538, %v2534
        %v3787 = vpack.c.b16 %v2539, %v2535
        %v3788 = vpack.c.b16 %v2540, %v2536
        %v3789 = vpack.c.b16 %v2541, %v2537
        %v3790 = vpack.c.b16 %v2546, %v2542
        %v3791 = vpack.c.b16 %v2547, %v2543
        %v3792 = vpack.c.b16 %v2548, %v2544
        %v3793 = vpack.c.b16 %v2549, %v2545
        %v3794 = vpack.c.b16 %v2554, %v2550
        %v3795 = vpack.c.b16 %v2555, %v2551
        %v3796 = vpack.c.b16 %v2556, %v2552
        %v3797 = vpack.c.b16 %v2557, %v2553
        %v3798 = vpack.c.b16 %v2562, %v2558
        %v3799 = vpack.c.b16 %v2563, %v2559
        %v3800 = vpack.c.b16 %v2564, %v2560
        %v3801 = vpack.c.b16 %v2565, %v2561
        %v3802 = vpack.c.b16 %v2570, %v2566
        %v3803 = vpack.c.b16 %v2571, %v2567
        %v3804 = vpack.c.b16 %v2572, %v2568
        %v3805 = vpack.c.b16 %v2573, %v2569
        %v3806 = vpack.c.b16 %v2578, %v2574
        %v3807 = vpack.c.b16 %v2579, %v2575
        %v3808 = vpack.c.b16 %v2580, %v2576
        %v3809 = vpack.c.b16 %v2581, %v2577
        %v3810 = vpack.c.b16 %v2586, %v2582
        %v3811 = vpack.c.b16 %v2587, %v2583
        %v3812 = vpack.c.b16 %v2588, %v2584
        %v3813 = vpack.c.b16 %v2589, %v2585
        %v3814 = vpack.c.b16 %v2594, %v2590
        %v3815 = vpack.c.b16 %v2595, %v2591
        %v3816 = vpack.c.b16 %v2596, %v2592
        %v3817 = vpack.c.b16 %v2597, %v2593
        %v3818 = vpack.c.b16 %v2602, %v2598
        %v3819 = vpack.c.b16 %v2603, %v2599
        %v3820 = vpack.c.b16 %v2604, %v2600
        %v3821 = vpack.c.b16 %v2605, %v2601
        %v3822 = vpack.c.b16 %v2610, %v2606
        %v3823 = vpack.c.b16 %v2611, %v2607
        %v3824 = vpack.c.b16 %v2612, %v2608
        %v3825 = vpack.c.b16 %v2613, %v2609
        %v3826 = vpack.c.b16 %v2618, %v2614
        %v3827 = vpack.c.b16 %v2619, %v2615
        %v3828 = vpack.c.b16 %v2620, %v2616
        %v3829 = vpack.c.b16 %v2621, %v2617
        %v3830 = vpack.c.b16 %v2626, %v2622
        %v3831 = vpack.c.b16 %v2627, %v2623
        %v3832 = vpack.c.b16 %v2628, %v2624
        %v3833 = vpack.c.b16 %v2629, %v2625
        %v3834 = vpack.c.b16 %v2634, %v2630
        %v3835 = vpack.c.b16 %v2635, %v2631
        %v3836 = vpack.c.b16 %v2636, %v2632
        %v3837 = vpack.c.b16 %v2637, %v2633
        %v3838 = vpack.c.b16 %v2642, %v2638
        %v3839 = vpack.c.b16 %v2643, %v2639
        %v3840 = vpack.c.b16 %v2644, %v2640
        %v3841 = vpack.c.b16 %v2645, %v2641
        %v3842 = vpack.c.b16 %v2650, %v2646
        %v3843 = vpack.c.b16 %v2651, %v2647
        %v3844 = vpack.c.b16 %v2652, %v2648
        %v3845 = vpack.c.b16 %v2653, %v2649
        %v3846 = vpack.c.b16 %v2658, %v2654
        %v3847 = vpack.c.b16 %v2659, %v2655
        %v3848 = vpack.c.b16 %v2660, %v2656
        %v3849 = vpack.c.b16 %v2661, %v2657
        %v3850 = vpack.c.b16 %v2666, %v2662
        %v3851 = vpack.c.b16 %v2667, %v2663
        %v3852 = vpack.c.b16 %v2668, %v2664
        %v3853 = vpack.c.b16 %v2669, %v2665
        %v3854 = vpack.c.b16 %v2674, %v2670
        %v3855 = vpack.c.b16 %v2675, %v2671
        %v3856 = vpack.c.b16 %v2676, %v2672
        %v3857 = vpack.c.b16 %v2677, %v2673
        %v3858 = vpack.c.b16 %v2682, %v2678
        %v3859 = vpack.c.b16 %v2683, %v2679
        %v3860 = vpack.c.b16 %v2684, %v2680
        %v3861 = vpack.c.b16 %v2685, %v2681
        %v3862 = vpack.c.b16 %v2690, %v2686
        %v3863 = vpack.c.b16 %v2691, %v2687
        %v3864 = vpack.c.b16 %v2692, %v2688
        %v3865 = vpack.c.b16 %v2693, %v2689
        %v3866 = vpack.c.b16 %v2698, %v2694
        %v3867 = vpack.c.b16 %v2699, %v2695
        %v3868 = vpack.c.b16 %v2700, %v2696
        %v3869 = vpack.c.b16 %v2701, %v2697
        %v3870 = vpack.c.b16 %v2706, %v2702
        %v3871 = vpack.c.b16 %v2707, %v2703
        %v3872 = vpack.c.b16 %v2708, %v2704
        %v3873 = vpack.c.b16 %v2709, %v2705
        %v3874 = vpack.c.b16 %v2714, %v2710
        %v3875 = vpack.c.b16 %v2715, %v2711
        %v3876 = vpack.c.b16 %v2716, %v2712
        %v3877 = vpack.c.b16 %v2717, %v2713
        %v3878 = vpack.c.b16 %v2722, %v2718
        %v3879 = vpack.c.b16 %v2723, %v2719
        %v3880 = vpack.c.b16 %v2724, %v2720
        %v3881 = vpack.c.b16 %v2725, %v2721
        %v3882 = vpack.c.b16 %v2730, %v2726
        %v3883 = vpack.c.b16 %v2731, %v2727
        %v3884 = vpack.c.b16 %v2732, %v2728
        %v3885 = vpack.c.b16 %v2733, %v2729
        %v3886 = vpack.c.b16 %v2738, %v2734
        %v3887 = vpack.c.b16 %v2739, %v2735
        %v3888 = vpack.c.b16 %v2740, %v2736
        %v3889 = vpack.c.b16 %v2741, %v2737
        %v3890 = vpack.c.b16 %v2746, %v2742
        %v3891 = vpack.c.b16 %v2747, %v2743
        %v3892 = vpack.c.b16 %v2748, %v2744
        %v3893 = vpack.c.b16 %v2749, %v2745
        %v3894 = vpack.c.b16 %v2754, %v2750
        %v3895 = vpack.c.b16 %v2755, %v2751
        %v3896 = vpack.c.b16 %v2756, %v2752
        %v3897 = vpack.c.b16 %v2757, %v2753
        %v3898 = vpack.c.b16 %v2762, %v2758
        %v3899 = vpack.c.b16 %v2763, %v2759
        %v3900 = vpack.c.b16 %v2764, %v2760
        %v3901 = vpack.c.b16 %v2765, %v2761
        %v3902 = vpack.c.b16 %v2770, %v2766
        %v3903 = vpack.c.b16 %v2771, %v2767
        %v3904 = vpack.c.b16 %v2772, %v2768
        %v3905 = vpack.c.b16 %v2773, %v2769
        %v3906 = vpack.c.b16 %v2778, %v2774
        %v3907 = vpack.c.b16 %v2779, %v2775
        %v3908 = vpack.c.b16 %v2780, %v2776
        %v3909 = vpack.c.b16 %v2781, %v2777
        %v3910 = vpack.c.b16 %v2786, %v2782
        %v3911 = vpack.c.b16 %v2787, %v2783
        %v3912 = vpack.c.b16 %v2788, %v2784
        %v3913 = vpack.c.b16 %v2789, %v2785
        %v3914 = vpack.c.b16 %v2794, %v2790
        %v3915 = vpack.c.b16 %v2795, %v2791
        %v3916 = vpack.c.b16 %v2796, %v2792
        %v3917 = vpack.c.b16 %v2797, %v2793
        %v3918 = vpack.c.b16 %v2802, %v2798
        %v3919 = vpack.c.b16 %v2803, %v2799
        %v3920 = vpack.c.b16 %v2804, %v2800
        %v3921 = vpack.c.b16 %v2805, %v2801
        %v3922 = vpack.c.b16 %v2810, %v2806
        %v3923 = vpack.c.b16 %v2811, %v2807
        %v3924 = vpack.c.b16 %v2812, %v2808
        %v3925 = vpack.c.b16 %v2813, %v2809
        %v3926 = vpack.c.b16 %v2818, %v2814
        %v3927 = vpack.c.b16 %v2819, %v2815
        %v3928 = vpack.c.b16 %v2820, %v2816
        %v3929 = vpack.c.b16 %v2821, %v2817
        %v3930 = vpack.c.b16 %v2826, %v2822
        %v3931 = vpack.c.b16 %v2827, %v2823
        %v3932 = vpack.c.b16 %v2828, %v2824
        %v3933 = vpack.c.b16 %v2829, %v2825
        %v3934 = vpack.c.b16 %v2834, %v2830
        %v3935 = vpack.c.b16 %v2835, %v2831
        %v3936 = vpack.c.b16 %v2836, %v2832
        %v3937 = vpack.c.b16 %v2837, %v2833
        %v3938 = vpack.c.b16 %v2842, %v2838
        %v3939 = vpack.c.b16 %v2843, %v2839
        %v3940 = vpack.c.b16 %v2844, %v2840
        %v3941 = vpack.c.b16 %v2845, %v2841
        %v3942 = vpack.c.b16 %v2850, %v2846
        %v3943 = vpack.c.b16 %v2851, %v2847
        %v3944 = vpack.c.b16 %v2852, %v2848
        %v3945 = vpack.c.b16 %v2853, %v2849
        %v3946 = vpack.c.b16 %v2858, %v2854
        %v3947 = vpack.c.b16 %v2859, %v2855
        %v3948 = vpack.c.b16 %v2860, %v2856
        %v3949 = vpack.c.b16 %v2861, %v2857
        %v3950 = vpack.c.b16 %v2866, %v2862
        %v3951 = vpack.c.b16 %v2867, %v2863
        %v3952 = vpack.c.b16 %v2868, %v2864
        %v3953 = vpack.c.b16 %v2869, %v2865
        %v3954 = vpack.c.b16 %v2874, %v2870
        %v3955 = vpack.c.b16 %v2875, %v2871
        %v3956 = vpack.c.b16 %v2876, %v2872
        %v3957 = vpack.c.b16 %v2877, %v2873
        %v3958 = vpack.c.b16 %v2882, %v2878
        %v3959 = vpack.c.b16 %v2883, %v2879
        %v3960 = vpack.c.b16 %v2884, %v2880
        %v3961 = vpack.c.b16 %v2885, %v2881
        %v3962 = vpack.c.b16 %v2890, %v2886
        %v3963 = vpack.c.b16 %v2891, %v2887
        %v3964 = vpack.c.b16 %v2892, %v2888
        %v3965 = vpack.c.b16 %v2893, %v2889
        %v3966 = vpack.c.b16 %v2898, %v2894
        %v3967 = vpack.c.b16 %v2899, %v2895
        %v3968 = vpack.c.b16 %v2900, %v2896
        %v3969 = vpack.c.b16 %v2901, %v2897
        %v3970 = vpack.c.b16 %v2906, %v2902
        %v3971 = vpack.c.b16 %v2907, %v2903
        %v3972 = vpack.c.b16 %v2908, %v2904
        %v3973 = vpack.c.b16 %v2909, %v2905
        %v3974 = vpack.c.b16 %v2914, %v2910
        %v3975 = vpack.c.b16 %v2915, %v2911
        %v3976 = vpack.c.b16 %v2916, %v2912
        %v3977 = vpack.c.b16 %v2917, %v2913
        %v3978 = vpack.c.b16 %v2922, %v2918
        %v3979 = vpack.c.b16 %v2923, %v2919
        %v3980 = vpack.c.b16 %v2924, %v2920
        %v3981 = vpack.c.b16 %v2925, %v2921
        %v3982 = vpack.c.b16 %v2930, %v2926
        %v3983 = vpack.c.b16 %v2931, %v2927
        %v3984 = vpack.c.b16 %v2932, %v2928
        %v3985 = vpack.c.b16 %v2933, %v2929
        %v3986 = vpack.c.b16 %v2938, %v2934
        %v3987 = vpack.c.b16 %v2939, %v2935
        %v3988 = vpack.c.b16 %v2940, %v2936
        %v3989 = vpack.c.b16 %v2941, %v2937
        %v3990 = vpack.c.b16 %v2946, %v2942
        %v3991 = vpack.c.b16 %v2947, %v2943
        %v3992 = vpack.c.b16 %v2948, %v2944
        %v3993 = vpack.c.b16 %v2949, %v2945
        %v3994 = vpack.c.b16 %v2954, %v2950
        %v3995 = vpack.c.b16 %v2955, %v2951
        %v3996 = vpack.c.b16 %v2956, %v2952
        %v3997 = vpack.c.b16 %v2957, %v2953
        %v3998 = vpack.c.b16 %v2962, %v2958
        %v3999 = vpack.c.b16 %v2963, %v2959
        %v4000 = vpack.c.b16 %v2964, %v2960
        %v4001 = vpack.c.b16 %v2965, %v2961
        %v4002 = vpack.c.b16 %v2970, %v2966
        %v4003 = vpack.c.b16 %v2971, %v2967
        %v4004 = vpack.c.b16 %v2972, %v2968
        %v4005 = vpack.c.b16 %v2973, %v2969
        %v4006 = vpack.c.b16 %v2978, %v2974
        %v4007 = vpack.c.b16 %v2979, %v2975
        %v4008 = vpack.c.b16 %v2980, %v2976
        %v4009 = vpack.c.b16 %v2981, %v2977
        %v4010 = vpack.c.b16 %v2986, %v2982
        %v4011 = vpack.c.b16 %v2987, %v2983
        %v4012 = vpack.c.b16 %v2988, %v2984
        %v4013 = vpack.c.b16 %v2989, %v2985
        %v4014 = vpack.c.b16 %v2994, %v2990
        %v4015 = vpack.c.b16 %v2995, %v2991
        %v4016 = vpack.c.b16 %v2996, %v2992
        %v4017 = vpack.c.b16 %v2997, %v2993
        %v4018 = vpack.c.b16 %v3002, %v2998
        %v4019 = vpack.c.b16 %v3003, %v2999
        %v4020 = vpack.c.b16 %v3004, %v3000
        %v4021 = vpack.c.b16 %v3005, %v3001
        %v4022 = vpack.c.b16 %v3010, %v3006
        %v4023 = vpack.c.b16 %v3011, %v3007
        %v4024 = vpack.c.b16 %v3012, %v3008
        %v4025 = vpack.c.b16 %v3013, %v3009
        %v4026 = vpack.c.b16 %v3018, %v3014
        %v4027 = vpack.c.b16 %v3019, %v3015
        %v4028 = vpack.c.b16 %v3020, %v3016
        %v4029 = vpack.c.b16 %v3021, %v3017
        %v4030 = vpack.c.b16 %v3026, %v3022
        %v4031 = vpack.c.b16 %v3027, %v3023
        %v4032 = vpack.c.b16 %v3028, %v3024
        %v4033 = vpack.c.b16 %v3029, %v3025
        %v4034 = vpack.c.b16 %v3034, %v3030
        %v4035 = vpack.c.b16 %v3035, %v3031
        %v4036 = vpack.c.b16 %v3036, %v3032
        %v4037 = vpack.c.b16 %v3037, %v3033
        %v4038 = vpack.c.b16 %v3042, %v3038
        %v4039 = vpack.c.b16 %v3043, %v3039
        %v4040 = vpack.c.b16 %v3044, %v3040
        %v4041 = vpack.c.b16 %v3045, %v3041
        %v4042 = vpack.c.b16 %v3050, %v3046
        %v4043 = vpack.c.b16 %v3051, %v3047
        %v4044 = vpack.c.b16 %v3052, %v3048
        %v4045 = vpack.c.b16 %v3053, %v3049
        %v4046 = vpack.c.b16 %v3058, %v3054
        %v4047 = vpack.c.b16 %v3059, %v3055
        %v4048 = vpack.c.b16 %v3060, %v3056
        %v4049 = vpack.c.b16 %v3061, %v3057
        %v4050 = vpack.c.b16 %v3066, %v3062
        %v4051 = vpack.c.b16 %v3067, %v3063
        %v4052 = vpack.c.b16 %v3068, %v3064
        %v4053 = vpack.c.b16 %v3069, %v3065
        %v4054 = vpack.c.b16 %v3074, %v3070
        %v4055 = vpack.c.b16 %v3075, %v3071
        %v4056 = vpack.c.b16 %v3076, %v3072
        %v4057 = vpack.c.b16 %v3077, %v3073
        %v4058 = vpack.c.b16 %v3082, %v3078
        %v4059 = vpack.c.b16 %v3083, %v3079
        %v4060 = vpack.c.b16 %v3084, %v3080
        %v4061 = vpack.c.b16 %v3085, %v3081
        %v4062 = vpack.c.b16 %v3090, %v3086
        %v4063 = vpack.c.b16 %v3091, %v3087
        %v4064 = vpack.c.b16 %v3092, %v3088
        %v4065 = vpack.c.b16 %v3093, %v3089
        %v4066 = vpack.c.b16 %v3098, %v3094
        %v4067 = vpack.c.b16 %v3099, %v3095
        %v4068 = vpack.c.b16 %v3100, %v3096
        %v4069 = vpack.c.b16 %v3101, %v3097
        %v4070 = vpack.c.b16 %v3106, %v3102
        %v4071 = vpack.c.b16 %v3107, %v3103
        %v4072 = vpack.c.b16 %v3108, %v3104
        %v4073 = vpack.c.b16 %v3109, %v3105
        %v4074 = vpack.c.b16 %v3114, %v3110
        %v4075 = vpack.c.b16 %v3115, %v3111
        %v4076 = vpack.c.b16 %v3116, %v3112
        %v4077 = vpack.c.b16 %v3117, %v3113
        %v4078 = vpack.c.b16 %v3122, %v3118
        %v4079 = vpack.c.b16 %v3123, %v3119
        %v4080 = vpack.c.b16 %v3124, %v3120
        %v4081 = vpack.c.b16 %v3125, %v3121
        %v4082 = vpack.c.b16 %v3130, %v3126
        %v4083 = vpack.c.b16 %v3131, %v3127
        %v4084 = vpack.c.b16 %v3132, %v3128
        %v4085 = vpack.c.b16 %v3133, %v3129
        %v4086 = vpack.c.b16 %v3138, %v3134
        %v4087 = vpack.c.b16 %v3139, %v3135
        %v4088 = vpack.c.b16 %v3140, %v3136
        %v4089 = vpack.c.b16 %v3141, %v3137
        %v4090 = vpack.c.b16 %v3146, %v3142
        %v4091 = vpack.c.b16 %v3147, %v3143
        %v4092 = vpack.c.b16 %v3148, %v3144
        %v4093 = vpack.c.b16 %v3149, %v3145
        %v4094 = vpack.c.b16 %v3154, %v3150
        %v4095 = vpack.c.b16 %v3155, %v3151
        %v4096 = vpack.c.b16 %v3156, %v3152
        %v4097 = vpack.c.b16 %v3157, %v3153
        %v4098 = vpack.c.b16 %v3162, %v3158
        %v4099 = vpack.c.b16 %v3163, %v3159
        %v4100 = vpack.c.b16 %v3164, %v3160
        %v4101 = vpack.c.b16 %v3165, %v3161
        %v4102 = vpack.c.b16 %v3170, %v3166
        %v4103 = vpack.c.b16 %v3171, %v3167
        %v4104 = vpack.c.b16 %v3172, %v3168
        %v4105 = vpack.c.b16 %v3173, %v3169
        %v4106 = vpack.c.b16 %v3178, %v3174
        %v4107 = vpack.c.b16 %v3179, %v3175
        %v4108 = vpack.c.b16 %v3180, %v3176
        %v4109 = vpack.c.b16 %v3181, %v3177
        %v4110 = vpack.c.b16 %v3186, %v3182
        %v4111 = vpack.c.b16 %v3187, %v3183
        %v4112 = vpack.c.b16 %v3188, %v3184
        %v4113 = vpack.c.b16 %v3189, %v3185
        %v4114 = vpack.c.b16 %v3194, %v3190
        %v4115 = vpack.c.b16 %v3195, %v3191
        %v4116 = vpack.c.b16 %v3196, %v3192
        %v4117 = vpack.c.b16 %v3197, %v3193
        %v4118 = vpack.c.b16 %v3202, %v3198
        %v4119 = vpack.c.b16 %v3203, %v3199
        %v4120 = vpack.c.b16 %v3204, %v3200
        %v4121 = vpack.c.b16 %v3205, %v3201
        %v4122 = vpack.c.b16 %v3210, %v3206
        %v4123 = vpack.c.b16 %v3211, %v3207
        %v4124 = vpack.c.b16 %v3212, %v3208
        %v4125 = vpack.c.b16 %v3213, %v3209
        %v4126 = vpack.c.b16 %v3218, %v3214
        %v4127 = vpack.c.b16 %v3219, %v3215
        %v4128 = vpack.c.b16 %v3220, %v3216
        %v4129 = vpack.c.b16 %v3221, %v3217
        %v4130 = vpack.c.b16 %v3226, %v3222
        %v4131 = vpack.c.b16 %v3227, %v3223
        %v4132 = vpack.c.b16 %v3228, %v3224
        %v4133 = vpack.c.b16 %v3229, %v3225
        %v4134 = vpack.c.b16 %v3234, %v3230
        %v4135 = vpack.c.b16 %v3235, %v3231
        %v4136 = vpack.c.b16 %v3236, %v3232
        %v4137 = vpack.c.b16 %v3237, %v3233
        %v4138 = vpack.c.b16 %v3242, %v3238
        %v4139 = vpack.c.b16 %v3243, %v3239
        %v4140 = vpack.c.b16 %v3244, %v3240
        %v4141 = vpack.c.b16 %v3245, %v3241
        %v4142 = vpack.c.b16 %v3250, %v3246
        %v4143 = vpack.c.b16 %v3251, %v3247
        %v4144 = vpack.c.b16 %v3252, %v3248
        %v4145 = vpack.c.b16 %v3253, %v3249
        %v4146 = vpack.c.b16 %v3258, %v3254
        %v4147 = vpack.c.b16 %v3259, %v3255
        %v4148 = vpack.c.b16 %v3260, %v3256
        %v4149 = vpack.c.b16 %v3261, %v3257
        %v4150 = vpack.c.b16 %v3266, %v3262
        %v4151 = vpack.c.b16 %v3267, %v3263
        %v4152 = vpack.c.b16 %v3268, %v3264
        %v4153 = vpack.c.b16 %v3269, %v3265
        %v4154 = vpack.c.b16 %v3274, %v3270
        %v4155 = vpack.c.b16 %v3275, %v3271
        %v4156 = vpack.c.b16 %v3276, %v3272
        %v4157 = vpack.c.b16 %v3277, %v3273
        %v4158 = vpack.c.b16 %v3282, %v3278
        %v4159 = vpack.c.b16 %v3283, %v3279
        %v4160 = vpack.c.b16 %v3284, %v3280
        %v4161 = vpack.c.b16 %v3285, %v3281
        %v4162 = vpack.c.b16 %v3290, %v3286
        %v4163 = vpack.c.b16 %v3291, %v3287
        %v4164 = vpack.c.b16 %v3292, %v3288
        %v4165 = vpack.c.b16 %v3293, %v3289
        %v4166 = vpack.c.b16 %v3298, %v3294
        %v4167 = vpack.c.b16 %v3299, %v3295
        %v4168 = vpack.c.b16 %v3300, %v3296
        %v4169 = vpack.c.b16 %v3301, %v3297
        %v4170 = vpack.c.b16 %v3306, %v3302
        %v4171 = vpack.c.b16 %v3307, %v3303
        %v4172 = vpack.c.b16 %v3308, %v3304
        %v4173 = vpack.c.b16 %v3309, %v3305
        %v4174 = vpack.c.b16 %v3314, %v3310
        %v4175 = vpack.c.b16 %v3315, %v3311
        %v4176 = vpack.c.b16 %v3316, %v3312
        %v4177 = vpack.c.b16 %v3317, %v3313
        %v4178 = vpack.c.b16 %v3322, %v3318
        %v4179 = vpack.c.b16 %v3323, %v3319
        %v4180 = vpack.c.b16 %v3324, %v3320
        %v4181 = vpack.c.b16 %v3325, %v3321
        %v4182 = vpack.c.b16 %v3330, %v3326
        %v4183 = vpack.c.b16 %v3331, %v3327
        %v4184 = vpack.c.b16 %v3332, %v3328
        %v4185 = vpack.c.b16 %v3333, %v3329
        %v4186 = vpack.c.b16 %v3338, %v3334
        %v4187 = vpack.c.b16 %v3339, %v3335
        %v4188 = vpack.c.b16 %v3340, %v3336
        %v4189 = vpack.c.b16 %v3341, %v3337
        %v4190 = vpack.c.b16 %v3346, %v3342
        %v4191 = vpack.c.b16 %v3347, %v3343
        %v4192 = vpack.c.b16 %v3348, %v3344
        %v4193 = vpack.c.b16 %v3349, %v3345
        %v4194 = vpack.c.b16 %v3354, %v3350
        %v4195 = vpack.c.b16 %v3355, %v3351
        %v4196 = vpack.c.b16 %v3356, %v3352
        %v4197 = vpack.c.b16 %v3357, %v3353
        %v4198 = vpack.c.b16 %v3362, %v3358
        %v4199 = vpack.c.b16 %v3363, %v3359
        %v4200 = vpack.c.b16 %v3364, %v3360
        %v4201 = vpack.c.b16 %v3365, %v3361
        %v4202 = vpack.c.b16 %v3370, %v3366
        %v4203 = vpack.c.b16 %v3371, %v3367
        %v4204 = vpack.c.b16 %v3372, %v3368
        %v4205 = vpack.c.b16 %v3373, %v3369
        %v4206 = vpack.c.b16 %v3378, %v3374
        %v4207 = vpack.c.b16 %v3379, %v3375
        %v4208 = vpack.c.b16 %v3380, %v3376
        %v4209 = vpack.c.b16 %v3381, %v3377
        %v4210 = vpack.c.b16 %v3386, %v3382
        %v4211 = vpack.c.b16 %v3387, %v3383
        %v4212 = vpack.c.b16 %v3388, %v3384
        %v4213 = vpack.c.b16 %v3389, %v3385
        %v4214 = vpack.c.b16 %v3394, %v3390
        %v4215 = vpack.c.b16 %v3395, %v3391
        %v4216 = vpack.c.b16 %v3396, %v3392
        %v4217 = vpack.c.b16 %v3397, %v3393
        %v4218 = vpack.c.b16 %v3402, %v3398
        %v4219 = vpack.c.b16 %v3403, %v3399
        %v4220 = vpack.c.b16 %v3404, %v3400
        %v4221 = vpack.c.b16 %v3405, %v3401
        %v4222 = vpack.c.b16 %v3410, %v3406
        %v4223 = vpack.c.b16 %v3411, %v3407
        %v4224 = vpack.c.b16 %v3412, %v3408
        %v4225 = vpack.c.b16 %v3413, %v3409
        %v4226 = vpack.c.b16 %v3418, %v3414
        %v4227 = vpack.c.b16 %v3419, %v3415
        %v4228 = vpack.c.b16 %v3420, %v3416
        %v4229 = vpack.c.b16 %v3421, %v3417
        %v4230 = vpack.c.b16 %v3426, %v3422
        %v4231 = vpack.c.b16 %v3427, %v3423
        %v4232 = vpack.c.b16 %v3428, %v3424
        %v4233 = vpack.c.b16 %v3429, %v3425
        %v4234 = vpack.c.b16 %v3434, %v3430
        %v4235 = vpack.c.b16 %v3435, %v3431
        %v4236 = vpack.c.b16 %v3436, %v3432
        %v4237 = vpack.c.b16 %v3437, %v3433
        %v4238 = vpack.c.b16 %v3442, %v3438
        %v4239 = vpack.c.b16 %v3443, %v3439
        %v4240 = vpack.c.b16 %v3444, %v3440
        %v4241 = vpack.c.b16 %v3445, %v3441
        %v4242 = vpack.c.b16 %v3450, %v3446
        %v4243 = vpack.c.b16 %v3451, %v3447
        %v4244 = vpack.c.b16 %v3452, %v3448
        %v4245 = vpack.c.b16 %v3453, %v3449
        %v4246 = vpack.c.b16 %v3458, %v3454
        %v4247 = vpack.c.b16 %v3459, %v3455
        %v4248 = vpack.c.b16 %v3460, %v3456
        %v4249 = vpack.c.b16 %v3461, %v3457
        %v4250 = vpack.c.b16 %v3466, %v3462
        %v4251 = vpack.c.b16 %v3467, %v3463
        %v4252 = vpack.c.b16 %v3468, %v3464
        %v4253 = vpack.c.b16 %v3469, %v3465
        %v4254 = vpack.c.b16 %v3474, %v3470
        %v4255 = vpack.c.b16 %v3475, %v3471
        %v4256 = vpack.c.b16 %v3476, %v3472
        %v4257 = vpack.c.b16 %v3477, %v3473
        %v4258 = vpack.c.b16 %v3482, %v3478
        %v4259 = vpack.c.b16 %v3483, %v3479
        %v4260 = vpack.c.b16 %v3484, %v3480
        %v4261 = vpack.c.b16 %v3485, %v3481
        %v4262 = vpack.c.b16 %v3490, %v3486
        %v4263 = vpack.c.b16 %v3491, %v3487
        %v4264 = vpack.c.b16 %v3492, %v3488
        %v4265 = vpack.c.b16 %v3493, %v3489
        %v4266 = vpack.c.b16 %v3498, %v3494
        %v4267 = vpack.c.b16 %v3499, %v3495
        %v4268 = vpack.c.b16 %v3500, %v3496
        %v4269 = vpack.c.b16 %v3501, %v3497
        %5038 = vmatpush.bf16.msra.mxu0 %v3530
        %5039 = vmatpush.bf16.msra.mxu0 %v3526
        %5040 = vmatpush.bf16.msra.mxu0 %v3522
        %5041 = vmatpush.bf16.msra.mxu0 %v3518
        %5042 = vmatpush.bf16.msra.mxu0 %v3514
        %5043 = vmatpush.bf16.msra.mxu0 %v3510
        %5044 = vmatpush.bf16.msra.mxu0 %v3506
        %5045 = vmatpush.bf16.msra.mxu0 %v3502
        %5046 = vmatmul.bf16.gmra.mxu0 %v1150
        %v5047 = vpop.f32.mrf.mxu0
        %v5048 = vadd.f32 0.0, %v5047
        %v5049 = vpop.f32.mrf.mxu0
        %v5050 = vadd.f32 0.0, %v5049
        %5051 = vdwg.mxu0
        %5052 = vmatpush.bf16.msra.mxu0 %v3562
        %5053 = vmatpush.bf16.msra.mxu0 %v3558
        %5054 = vmatpush.bf16.msra.mxu0 %v3554
        %5055 = vmatpush.bf16.msra.mxu0 %v3550
        %5056 = vmatpush.bf16.msra.mxu0 %v3546
        %5057 = vmatpush.bf16.msra.mxu0 %v3542
        %5058 = vmatpush.bf16.msra.mxu0 %v3538
        %5059 = vmatpush.bf16.msra.mxu0 %v3534
        %5060 = vmatmul.bf16.gmra.mxu0 %v1151
        %v5061 = vpop.f32.mrf.mxu0
        %v5062 = vadd.f32 %v5048, %v5061
        %v5063 = vpop.f32.mrf.mxu0
        %v5064 = vadd.f32 %v5050, %v5063
        %5065 = vdwg.mxu0
        %5066 = vmatpush.bf16.msra.mxu0 %v3594
        %5067 = vmatpush.bf16.msra.mxu0 %v3590
        %5068 = vmatpush.bf16.msra.mxu0 %v3586
        %5069 = vmatpush.bf16.msra.mxu0 %v3582
        %5070 = vmatpush.bf16.msra.mxu0 %v3578
        %5071 = vmatpush.bf16.msra.mxu0 %v3574
        %5072 = vmatpush.bf16.msra.mxu0 %v3570
        %5073 = vmatpush.bf16.msra.mxu0 %v3566
        %5074 = vmatmul.bf16.gmra.mxu0 %v1152
        %v5075 = vpop.f32.mrf.mxu0
        %v5076 = vadd.f32 %v5062, %v5075
        %v5077 = vpop.f32.mrf.mxu0
        %v5078 = vadd.f32 %v5064, %v5077
        %5079 = vdwg.mxu0
        %5080 = vmatpush.bf16.msra.mxu0 %v3626
        %5081 = vmatpush.bf16.msra.mxu0 %v3622
        %5082 = vmatpush.bf16.msra.mxu0 %v3618
        %5083 = vmatpush.bf16.msra.mxu0 %v3614
        %5084 = vmatpush.bf16.msra.mxu0 %v3610
        %5085 = vmatpush.bf16.msra.mxu0 %v3606
        %5086 = vmatpush.bf16.msra.mxu0 %v3602
        %5087 = vmatpush.bf16.msra.mxu0 %v3598
        %5088 = vmatmul.bf16.gmra.mxu0 %v1153
        %v5089 = vpop.f32.mrf.mxu0
        %v5090 = vadd.f32 %v5076, %v5089
        %v5091 = vpop.f32.mrf.mxu0
        %v5092 = vadd.f32 %v5078, %v5091
        %5093 = vdwg.mxu0
        %5094 = vmatpush.bf16.msra.mxu0 %v3658
        %5095 = vmatpush.bf16.msra.mxu0 %v3654
        %5096 = vmatpush.bf16.msra.mxu0 %v3650
        %5097 = vmatpush.bf16.msra.mxu0 %v3646
        %5098 = vmatpush.bf16.msra.mxu0 %v3642
        %5099 = vmatpush.bf16.msra.mxu0 %v3638
        %5100 = vmatpush.bf16.msra.mxu0 %v3634
        %5101 = vmatpush.bf16.msra.mxu0 %v3630
        %5102 = vmatmul.bf16.gmra.mxu0 %v1154
        %v5103 = vpop.f32.mrf.mxu0
        %v5104 = vadd.f32 %v5090, %v5103
        %v5105 = vpop.f32.mrf.mxu0
        %v5106 = vadd.f32 %v5092, %v5105
        %5107 = vdwg.mxu0
        %5108 = vmatpush.bf16.msra.mxu0 %v3690
        %5109 = vmatpush.bf16.msra.mxu0 %v3686
        %5110 = vmatpush.bf16.msra.mxu0 %v3682
        %5111 = vmatpush.bf16.msra.mxu0 %v3678
        %5112 = vmatpush.bf16.msra.mxu0 %v3674
        %5113 = vmatpush.bf16.msra.mxu0 %v3670
        %5114 = vmatpush.bf16.msra.mxu0 %v3666
        %5115 = vmatpush.bf16.msra.mxu0 %v3662
        %5116 = vmatmul.bf16.gmra.mxu0 %v1155
        %v5117 = vpop.f32.mrf.mxu0
        %v5118 = vadd.f32 %v5104, %v5117
        %v5119 = vpop.f32.mrf.mxu0
        %v5120 = vadd.f32 %v5106, %v5119
        %5121 = vdwg.mxu0
        %5122 = vmatpush.bf16.msra.mxu0 %v3722
        %5123 = vmatpush.bf16.msra.mxu0 %v3718
        %5124 = vmatpush.bf16.msra.mxu0 %v3714
        %5125 = vmatpush.bf16.msra.mxu0 %v3710
        %5126 = vmatpush.bf16.msra.mxu0 %v3706
        %5127 = vmatpush.bf16.msra.mxu0 %v3702
        %5128 = vmatpush.bf16.msra.mxu0 %v3698
        %5129 = vmatpush.bf16.msra.mxu0 %v3694
        %5130 = vmatmul.bf16.gmra.mxu0 %v1156
        %v5131 = vpop.f32.mrf.mxu0
        %v5132 = vadd.f32 %v5118, %v5131
        %v5133 = vpop.f32.mrf.mxu0
        %v5134 = vadd.f32 %v5120, %v5133
        %5135 = vdwg.mxu0
        %5136 = vmatpush.bf16.msra.mxu0 %v3754
        %5137 = vmatpush.bf16.msra.mxu0 %v3750
        %5138 = vmatpush.bf16.msra.mxu0 %v3746
        %5139 = vmatpush.bf16.msra.mxu0 %v3742
        %5140 = vmatpush.bf16.msra.mxu0 %v3738
        %5141 = vmatpush.bf16.msra.mxu0 %v3734
        %5142 = vmatpush.bf16.msra.mxu0 %v3730
        %5143 = vmatpush.bf16.msra.mxu0 %v3726
        %5144 = vmatmul.bf16.gmra.mxu0 %v1157
        %v5145 = vpop.f32.mrf.mxu0
        %v5146 = vadd.f32 %v5132, %v5145
        %v5147 = vpop.f32.mrf.mxu0
        %v5148 = vadd.f32 %v5134, %v5147
        %5149 = vdwg.mxu0
        %5150 = vmatpush.bf16.msra.mxu0 %v3786
        %5151 = vmatpush.bf16.msra.mxu0 %v3782
        %5152 = vmatpush.bf16.msra.mxu0 %v3778
        %5153 = vmatpush.bf16.msra.mxu0 %v3774
        %5154 = vmatpush.bf16.msra.mxu0 %v3770
        %5155 = vmatpush.bf16.msra.mxu0 %v3766
        %5156 = vmatpush.bf16.msra.mxu0 %v3762
        %5157 = vmatpush.bf16.msra.mxu0 %v3758
        %5158 = vmatmul.bf16.gmra.mxu0 %v1158
        %v5159 = vpop.f32.mrf.mxu0
        %v5160 = vadd.f32 %v5146, %v5159
        %v5161 = vpop.f32.mrf.mxu0
        %v5162 = vadd.f32 %v5148, %v5161
        %5163 = vdwg.mxu0
        %5164 = vmatpush.bf16.msra.mxu0 %v3818
        %5165 = vmatpush.bf16.msra.mxu0 %v3814
        %5166 = vmatpush.bf16.msra.mxu0 %v3810
        %5167 = vmatpush.bf16.msra.mxu0 %v3806
        %5168 = vmatpush.bf16.msra.mxu0 %v3802
        %5169 = vmatpush.bf16.msra.mxu0 %v3798
        %5170 = vmatpush.bf16.msra.mxu0 %v3794
        %5171 = vmatpush.bf16.msra.mxu0 %v3790
        %5172 = vmatmul.bf16.gmra.mxu0 %v1159
        %v5173 = vpop.f32.mrf.mxu0
        %v5174 = vadd.f32 %v5160, %v5173
        %v5175 = vpop.f32.mrf.mxu0
        %v5176 = vadd.f32 %v5162, %v5175
        %5177 = vdwg.mxu0
        %5178 = vmatpush.bf16.msra.mxu0 %v3850
        %5179 = vmatpush.bf16.msra.mxu0 %v3846
        %5180 = vmatpush.bf16.msra.mxu0 %v3842
        %5181 = vmatpush.bf16.msra.mxu0 %v3838
        %5182 = vmatpush.bf16.msra.mxu0 %v3834
        %5183 = vmatpush.bf16.msra.mxu0 %v3830
        %5184 = vmatpush.bf16.msra.mxu0 %v3826
        %5185 = vmatpush.bf16.msra.mxu0 %v3822
        %5186 = vmatmul.bf16.gmra.mxu0 %v1160
        %v5187 = vpop.f32.mrf.mxu0
        %v5188 = vadd.f32 %v5174, %v5187
        %v5189 = vpop.f32.mrf.mxu0
        %v5190 = vadd.f32 %v5176, %v5189
        %5191 = vdwg.mxu0
        %5192 = vmatpush.bf16.msra.mxu0 %v3882
        %5193 = vmatpush.bf16.msra.mxu0 %v3878
        %5194 = vmatpush.bf16.msra.mxu0 %v3874
        %5195 = vmatpush.bf16.msra.mxu0 %v3870
        %5196 = vmatpush.bf16.msra.mxu0 %v3866
        %5197 = vmatpush.bf16.msra.mxu0 %v3862
        %5198 = vmatpush.bf16.msra.mxu0 %v3858
        %5199 = vmatpush.bf16.msra.mxu0 %v3854
        %5200 = vmatmul.bf16.gmra.mxu0 %v1161
        %v5201 = vpop.f32.mrf.mxu0
        %v5202 = vadd.f32 %v5188, %v5201
        %v5203 = vpop.f32.mrf.mxu0
        %v5204 = vadd.f32 %v5190, %v5203
        %5205 = vdwg.mxu0
        %5206 = vmatpush.bf16.msra.mxu0 %v3914
        %5207 = vmatpush.bf16.msra.mxu0 %v3910
        %5208 = vmatpush.bf16.msra.mxu0 %v3906
        %5209 = vmatpush.bf16.msra.mxu0 %v3902
        %5210 = vmatpush.bf16.msra.mxu0 %v3898
        %5211 = vmatpush.bf16.msra.mxu0 %v3894
        %5212 = vmatpush.bf16.msra.mxu0 %v3890
        %5213 = vmatpush.bf16.msra.mxu0 %v3886
        %5214 = vmatmul.bf16.gmra.mxu0 %v1162
        %v5215 = vpop.f32.mrf.mxu0
        %v5216 = vadd.f32 %v5202, %v5215
        %v5217 = vpop.f32.mrf.mxu0
        %v5218 = vadd.f32 %v5204, %v5217
        %5219 = vdwg.mxu0
        %5220 = vmatpush.bf16.msra.mxu0 %v3946
        %5221 = vmatpush.bf16.msra.mxu0 %v3942
        %5222 = vmatpush.bf16.msra.mxu0 %v3938
        %5223 = vmatpush.bf16.msra.mxu0 %v3934
        %5224 = vmatpush.bf16.msra.mxu0 %v3930
        %5225 = vmatpush.bf16.msra.mxu0 %v3926
        %5226 = vmatpush.bf16.msra.mxu0 %v3922
        %5227 = vmatpush.bf16.msra.mxu0 %v3918
        %5228 = vmatmul.bf16.gmra.mxu0 %v1163
        %v5229 = vpop.f32.mrf.mxu0
        %v5230 = vadd.f32 %v5216, %v5229
        %v5231 = vpop.f32.mrf.mxu0
        %v5232 = vadd.f32 %v5218, %v5231
        %5233 = vdwg.mxu0
        %5234 = vmatpush.bf16.msra.mxu0 %v3978
        %5235 = vmatpush.bf16.msra.mxu0 %v3974
        %5236 = vmatpush.bf16.msra.mxu0 %v3970
        %5237 = vmatpush.bf16.msra.mxu0 %v3966
        %5238 = vmatpush.bf16.msra.mxu0 %v3962
        %5239 = vmatpush.bf16.msra.mxu0 %v3958
        %5240 = vmatpush.bf16.msra.mxu0 %v3954
        %5241 = vmatpush.bf16.msra.mxu0 %v3950
        %5242 = vmatmul.bf16.gmra.mxu0 %v1164
        %v5243 = vpop.f32.mrf.mxu0
        %v5244 = vadd.f32 %v5230, %v5243
        %v5245 = vpop.f32.mrf.mxu0
        %v5246 = vadd.f32 %v5232, %v5245
        %5247 = vdwg.mxu0
        %5248 = vmatpush.bf16.msra.mxu0 %v4010
        %5249 = vmatpush.bf16.msra.mxu0 %v4006
        %5250 = vmatpush.bf16.msra.mxu0 %v4002
        %5251 = vmatpush.bf16.msra.mxu0 %v3998
        %5252 = vmatpush.bf16.msra.mxu0 %v3994
        %5253 = vmatpush.bf16.msra.mxu0 %v3990
        %5254 = vmatpush.bf16.msra.mxu0 %v3986
        %5255 = vmatpush.bf16.msra.mxu0 %v3982
        %5256 = vmatmul.bf16.gmra.mxu0 %v1165
        %v5257 = vpop.f32.mrf.mxu0
        %v5258 = vadd.f32 %v5244, %v5257
        %v5259 = vpop.f32.mrf.mxu0
        %v5260 = vadd.f32 %v5246, %v5259
        %5261 = vdwg.mxu0
        %5262 = vmatpush.bf16.msra.mxu0 %v4042
        %5263 = vmatpush.bf16.msra.mxu0 %v4038
        %5264 = vmatpush.bf16.msra.mxu0 %v4034
        %5265 = vmatpush.bf16.msra.mxu0 %v4030
        %5266 = vmatpush.bf16.msra.mxu0 %v4026
        %5267 = vmatpush.bf16.msra.mxu0 %v4022
        %5268 = vmatpush.bf16.msra.mxu0 %v4018
        %5269 = vmatpush.bf16.msra.mxu0 %v4014
        %5270 = vmatmul.bf16.gmra.mxu0 %v1166
        %v5271 = vpop.f32.mrf.mxu0
        %v5272 = vadd.f32 %v5258, %v5271
        %v5273 = vpop.f32.mrf.mxu0
        %v5274 = vadd.f32 %v5260, %v5273
        %5275 = vdwg.mxu0
        %5276 = vmatpush.bf16.msra.mxu0 %v4074
        %5277 = vmatpush.bf16.msra.mxu0 %v4070
        %5278 = vmatpush.bf16.msra.mxu0 %v4066
        %5279 = vmatpush.bf16.msra.mxu0 %v4062
        %5280 = vmatpush.bf16.msra.mxu0 %v4058
        %5281 = vmatpush.bf16.msra.mxu0 %v4054
        %5282 = vmatpush.bf16.msra.mxu0 %v4050
        %5283 = vmatpush.bf16.msra.mxu0 %v4046
        %5284 = vmatmul.bf16.gmra.mxu0 %v1167
        %v5285 = vpop.f32.mrf.mxu0
        %v5286 = vadd.f32 %v5272, %v5285
        %v5287 = vpop.f32.mrf.mxu0
        %v5288 = vadd.f32 %v5274, %v5287
        %5289 = vdwg.mxu0
        %5290 = vmatpush.bf16.msra.mxu0 %v4106
        %5291 = vmatpush.bf16.msra.mxu0 %v4102
        %5292 = vmatpush.bf16.msra.mxu0 %v4098
        %5293 = vmatpush.bf16.msra.mxu0 %v4094
        %5294 = vmatpush.bf16.msra.mxu0 %v4090
        %5295 = vmatpush.bf16.msra.mxu0 %v4086
        %5296 = vmatpush.bf16.msra.mxu0 %v4082
        %5297 = vmatpush.bf16.msra.mxu0 %v4078
        %5298 = vmatmul.bf16.gmra.mxu0 %v1168
        %v5299 = vpop.f32.mrf.mxu0
        %v5300 = vadd.f32 %v5286, %v5299
        %v5301 = vpop.f32.mrf.mxu0
        %v5302 = vadd.f32 %v5288, %v5301
        %5303 = vdwg.mxu0
        %5304 = vmatpush.bf16.msra.mxu0 %v4138
        %5305 = vmatpush.bf16.msra.mxu0 %v4134
        %5306 = vmatpush.bf16.msra.mxu0 %v4130
        %5307 = vmatpush.bf16.msra.mxu0 %v4126
        %5308 = vmatpush.bf16.msra.mxu0 %v4122
        %5309 = vmatpush.bf16.msra.mxu0 %v4118
        %5310 = vmatpush.bf16.msra.mxu0 %v4114
        %5311 = vmatpush.bf16.msra.mxu0 %v4110
        %5312 = vmatmul.bf16.gmra.mxu0 %v1169
        %v5313 = vpop.f32.mrf.mxu0
        %v5314 = vadd.f32 %v5300, %v5313
        %v5315 = vpop.f32.mrf.mxu0
        %v5316 = vadd.f32 %v5302, %v5315
        %5317 = vdwg.mxu0
        %5318 = vmatpush.bf16.msra.mxu0 %v4170
        %5319 = vmatpush.bf16.msra.mxu0 %v4166
        %5320 = vmatpush.bf16.msra.mxu0 %v4162
        %5321 = vmatpush.bf16.msra.mxu0 %v4158
        %5322 = vmatpush.bf16.msra.mxu0 %v4154
        %5323 = vmatpush.bf16.msra.mxu0 %v4150
        %5324 = vmatpush.bf16.msra.mxu0 %v4146
        %5325 = vmatpush.bf16.msra.mxu0 %v4142
        %5326 = vmatmul.bf16.gmra.mxu0 %v1170
        %v5327 = vpop.f32.mrf.mxu0
        %v5328 = vadd.f32 %v5314, %v5327
        %v5329 = vpop.f32.mrf.mxu0
        %v5330 = vadd.f32 %v5316, %v5329
        %5331 = vdwg.mxu0
        %5332 = vmatpush.bf16.msra.mxu0 %v4202
        %5333 = vmatpush.bf16.msra.mxu0 %v4198
        %5334 = vmatpush.bf16.msra.mxu0 %v4194
        %5335 = vmatpush.bf16.msra.mxu0 %v4190
        %5336 = vmatpush.bf16.msra.mxu0 %v4186
        %5337 = vmatpush.bf16.msra.mxu0 %v4182
        %5338 = vmatpush.bf16.msra.mxu0 %v4178
        %5339 = vmatpush.bf16.msra.mxu0 %v4174
        %5340 = vmatmul.bf16.gmra.mxu0 %v1171
        %v5341 = vpop.f32.mrf.mxu0
        %v5342 = vadd.f32 %v5328, %v5341
        %v5343 = vpop.f32.mrf.mxu0
        %v5344 = vadd.f32 %v5330, %v5343
        %5345 = vdwg.mxu0
        %5346 = vmatpush.bf16.msra.mxu0 %v4234
        %5347 = vmatpush.bf16.msra.mxu0 %v4230
        %5348 = vmatpush.bf16.msra.mxu0 %v4226
        %5349 = vmatpush.bf16.msra.mxu0 %v4222
        %5350 = vmatpush.bf16.msra.mxu0 %v4218
        %5351 = vmatpush.bf16.msra.mxu0 %v4214
        %5352 = vmatpush.bf16.msra.mxu0 %v4210
        %5353 = vmatpush.bf16.msra.mxu0 %v4206
        %5354 = vmatmul.bf16.gmra.mxu0 %v1172
        %v5355 = vpop.f32.mrf.mxu0
        %v5356 = vadd.f32 %v5342, %v5355
        %v5357 = vpop.f32.mrf.mxu0
        %v5358 = vadd.f32 %v5344, %v5357
        %5359 = vdwg.mxu0
        %5360 = vmatpush.bf16.msra.mxu0 %v4266
        %5361 = vmatpush.bf16.msra.mxu0 %v4262
        %5362 = vmatpush.bf16.msra.mxu0 %v4258
        %5363 = vmatpush.bf16.msra.mxu0 %v4254
        %5364 = vmatpush.bf16.msra.mxu0 %v4250
        %5365 = vmatpush.bf16.msra.mxu0 %v4246
        %5366 = vmatpush.bf16.msra.mxu0 %v4242
        %5367 = vmatpush.bf16.msra.mxu0 %v4238
        %5368 = vmatmul.bf16.gmra.mxu0 %v1173
        %v5369 = vpop.f32.mrf.mxu0
        %v5370 = vadd.f32 %v5356, %v5369
        %v5371 = vpop.f32.mrf.mxu0
        %v5372 = vadd.f32 %v5358, %v5371
        %5373 = vdwg.mxu0
        %5374 = vmatpush.bf16.msra.mxu0 %v3531
        %5375 = vmatpush.bf16.msra.mxu0 %v3527
        %5376 = vmatpush.bf16.msra.mxu0 %v3523
        %5377 = vmatpush.bf16.msra.mxu0 %v3519
        %5378 = vmatpush.bf16.msra.mxu0 %v3515
        %5379 = vmatpush.bf16.msra.mxu0 %v3511
        %5380 = vmatpush.bf16.msra.mxu0 %v3507
        %5381 = vmatpush.bf16.msra.mxu0 %v3503
        %5382 = vmatmul.bf16.gmra.mxu0 %v1150
        %v5383 = vpop.f32.mrf.mxu0
        %v5384 = vadd.f32 0.0, %v5383
        %v5385 = vpop.f32.mrf.mxu0
        %v5386 = vadd.f32 0.0, %v5385
        %5387 = vdwg.mxu0
        %5388 = vmatpush.bf16.msra.mxu0 %v3563
        %5389 = vmatpush.bf16.msra.mxu0 %v3559
        %5390 = vmatpush.bf16.msra.mxu0 %v3555
        %5391 = vmatpush.bf16.msra.mxu0 %v3551
        %5392 = vmatpush.bf16.msra.mxu0 %v3547
        %5393 = vmatpush.bf16.msra.mxu0 %v3543
        %5394 = vmatpush.bf16.msra.mxu0 %v3539
        %5395 = vmatpush.bf16.msra.mxu0 %v3535
        %5396 = vmatmul.bf16.gmra.mxu0 %v1151
        %v5397 = vpop.f32.mrf.mxu0
        %v5398 = vadd.f32 %v5384, %v5397
        %v5399 = vpop.f32.mrf.mxu0
        %v5400 = vadd.f32 %v5386, %v5399
        %5401 = vdwg.mxu0
        %5402 = vmatpush.bf16.msra.mxu0 %v3595
        %5403 = vmatpush.bf16.msra.mxu0 %v3591
        %5404 = vmatpush.bf16.msra.mxu0 %v3587
        %5405 = vmatpush.bf16.msra.mxu0 %v3583
        %5406 = vmatpush.bf16.msra.mxu0 %v3579
        %5407 = vmatpush.bf16.msra.mxu0 %v3575
        %5408 = vmatpush.bf16.msra.mxu0 %v3571
        %5409 = vmatpush.bf16.msra.mxu0 %v3567
        %5410 = vmatmul.bf16.gmra.mxu0 %v1152
        %v5411 = vpop.f32.mrf.mxu0
        %v5412 = vadd.f32 %v5398, %v5411
        %v5413 = vpop.f32.mrf.mxu0
        %v5414 = vadd.f32 %v5400, %v5413
        %5415 = vdwg.mxu0
        %5416 = vmatpush.bf16.msra.mxu0 %v3627
        %5417 = vmatpush.bf16.msra.mxu0 %v3623
        %5418 = vmatpush.bf16.msra.mxu0 %v3619
        %5419 = vmatpush.bf16.msra.mxu0 %v3615
        %5420 = vmatpush.bf16.msra.mxu0 %v3611
        %5421 = vmatpush.bf16.msra.mxu0 %v3607
        %5422 = vmatpush.bf16.msra.mxu0 %v3603
        %5423 = vmatpush.bf16.msra.mxu0 %v3599
        %5424 = vmatmul.bf16.gmra.mxu0 %v1153
        %v5425 = vpop.f32.mrf.mxu0
        %v5426 = vadd.f32 %v5412, %v5425
        %v5427 = vpop.f32.mrf.mxu0
        %v5428 = vadd.f32 %v5414, %v5427
        %5429 = vdwg.mxu0
        %5430 = vmatpush.bf16.msra.mxu0 %v3659
        %5431 = vmatpush.bf16.msra.mxu0 %v3655
        %5432 = vmatpush.bf16.msra.mxu0 %v3651
        %5433 = vmatpush.bf16.msra.mxu0 %v3647
        %5434 = vmatpush.bf16.msra.mxu0 %v3643
        %5435 = vmatpush.bf16.msra.mxu0 %v3639
        %5436 = vmatpush.bf16.msra.mxu0 %v3635
        %5437 = vmatpush.bf16.msra.mxu0 %v3631
        %5438 = vmatmul.bf16.gmra.mxu0 %v1154
        %v5439 = vpop.f32.mrf.mxu0
        %v5440 = vadd.f32 %v5426, %v5439
        %v5441 = vpop.f32.mrf.mxu0
        %v5442 = vadd.f32 %v5428, %v5441
        %5443 = vdwg.mxu0
        %5444 = vmatpush.bf16.msra.mxu0 %v3691
        %5445 = vmatpush.bf16.msra.mxu0 %v3687
        %5446 = vmatpush.bf16.msra.mxu0 %v3683
        %5447 = vmatpush.bf16.msra.mxu0 %v3679
        %5448 = vmatpush.bf16.msra.mxu0 %v3675
        %5449 = vmatpush.bf16.msra.mxu0 %v3671
        %5450 = vmatpush.bf16.msra.mxu0 %v3667
        %5451 = vmatpush.bf16.msra.mxu0 %v3663
        %5452 = vmatmul.bf16.gmra.mxu0 %v1155
        %v5453 = vpop.f32.mrf.mxu0
        %v5454 = vadd.f32 %v5440, %v5453
        %v5455 = vpop.f32.mrf.mxu0
        %v5456 = vadd.f32 %v5442, %v5455
        %5457 = vdwg.mxu0
        %5458 = vmatpush.bf16.msra.mxu0 %v3723
        %5459 = vmatpush.bf16.msra.mxu0 %v3719
        %5460 = vmatpush.bf16.msra.mxu0 %v3715
        %5461 = vmatpush.bf16.msra.mxu0 %v3711
        %5462 = vmatpush.bf16.msra.mxu0 %v3707
        %5463 = vmatpush.bf16.msra.mxu0 %v3703
        %5464 = vmatpush.bf16.msra.mxu0 %v3699
        %5465 = vmatpush.bf16.msra.mxu0 %v3695
        %5466 = vmatmul.bf16.gmra.mxu0 %v1156
        %v5467 = vpop.f32.mrf.mxu0
        %v5468 = vadd.f32 %v5454, %v5467
        %v5469 = vpop.f32.mrf.mxu0
        %v5470 = vadd.f32 %v5456, %v5469
        %5471 = vdwg.mxu0
        %5472 = vmatpush.bf16.msra.mxu0 %v3755
        %5473 = vmatpush.bf16.msra.mxu0 %v3751
        %5474 = vmatpush.bf16.msra.mxu0 %v3747
        %5475 = vmatpush.bf16.msra.mxu0 %v3743
        %5476 = vmatpush.bf16.msra.mxu0 %v3739
        %5477 = vmatpush.bf16.msra.mxu0 %v3735
        %5478 = vmatpush.bf16.msra.mxu0 %v3731
        %5479 = vmatpush.bf16.msra.mxu0 %v3727
        %5480 = vmatmul.bf16.gmra.mxu0 %v1157
        %v5481 = vpop.f32.mrf.mxu0
        %v5482 = vadd.f32 %v5468, %v5481
        %v5483 = vpop.f32.mrf.mxu0
        %v5484 = vadd.f32 %v5470, %v5483
        %5485 = vdwg.mxu0
        %5486 = vmatpush.bf16.msra.mxu0 %v3787
        %5487 = vmatpush.bf16.msra.mxu0 %v3783
        %5488 = vmatpush.bf16.msra.mxu0 %v3779
        %5489 = vmatpush.bf16.msra.mxu0 %v3775
        %5490 = vmatpush.bf16.msra.mxu0 %v3771
        %5491 = vmatpush.bf16.msra.mxu0 %v3767
        %5492 = vmatpush.bf16.msra.mxu0 %v3763
        %5493 = vmatpush.bf16.msra.mxu0 %v3759
        %5494 = vmatmul.bf16.gmra.mxu0 %v1158
        %v5495 = vpop.f32.mrf.mxu0
        %v5496 = vadd.f32 %v5482, %v5495
        %v5497 = vpop.f32.mrf.mxu0
        %v5498 = vadd.f32 %v5484, %v5497
        %5499 = vdwg.mxu0
        %5500 = vmatpush.bf16.msra.mxu0 %v3819
        %5501 = vmatpush.bf16.msra.mxu0 %v3815
        %5502 = vmatpush.bf16.msra.mxu0 %v3811
        %5503 = vmatpush.bf16.msra.mxu0 %v3807
        %5504 = vmatpush.bf16.msra.mxu0 %v3803
        %5505 = vmatpush.bf16.msra.mxu0 %v3799
        %5506 = vmatpush.bf16.msra.mxu0 %v3795
        %5507 = vmatpush.bf16.msra.mxu0 %v3791
        %5508 = vmatmul.bf16.gmra.mxu0 %v1159
        %v5509 = vpop.f32.mrf.mxu0
        %v5510 = vadd.f32 %v5496, %v5509
        %v5511 = vpop.f32.mrf.mxu0
        %v5512 = vadd.f32 %v5498, %v5511
        %5513 = vdwg.mxu0
        %5514 = vmatpush.bf16.msra.mxu0 %v3851
        %5515 = vmatpush.bf16.msra.mxu0 %v3847
        %5516 = vmatpush.bf16.msra.mxu0 %v3843
        %5517 = vmatpush.bf16.msra.mxu0 %v3839
        %5518 = vmatpush.bf16.msra.mxu0 %v3835
        %5519 = vmatpush.bf16.msra.mxu0 %v3831
        %5520 = vmatpush.bf16.msra.mxu0 %v3827
        %5521 = vmatpush.bf16.msra.mxu0 %v3823
        %5522 = vmatmul.bf16.gmra.mxu0 %v1160
        %v5523 = vpop.f32.mrf.mxu0
        %v5524 = vadd.f32 %v5510, %v5523
        %v5525 = vpop.f32.mrf.mxu0
        %v5526 = vadd.f32 %v5512, %v5525
        %5527 = vdwg.mxu0
        %5528 = vmatpush.bf16.msra.mxu0 %v3883
        %5529 = vmatpush.bf16.msra.mxu0 %v3879
        %5530 = vmatpush.bf16.msra.mxu0 %v3875
        %5531 = vmatpush.bf16.msra.mxu0 %v3871
        %5532 = vmatpush.bf16.msra.mxu0 %v3867
        %5533 = vmatpush.bf16.msra.mxu0 %v3863
        %5534 = vmatpush.bf16.msra.mxu0 %v3859
        %5535 = vmatpush.bf16.msra.mxu0 %v3855
        %5536 = vmatmul.bf16.gmra.mxu0 %v1161
        %v5537 = vpop.f32.mrf.mxu0
        %v5538 = vadd.f32 %v5524, %v5537
        %v5539 = vpop.f32.mrf.mxu0
        %v5540 = vadd.f32 %v5526, %v5539
        %5541 = vdwg.mxu0
        %5542 = vmatpush.bf16.msra.mxu0 %v3915
        %5543 = vmatpush.bf16.msra.mxu0 %v3911
        %5544 = vmatpush.bf16.msra.mxu0 %v3907
        %5545 = vmatpush.bf16.msra.mxu0 %v3903
        %5546 = vmatpush.bf16.msra.mxu0 %v3899
        %5547 = vmatpush.bf16.msra.mxu0 %v3895
        %5548 = vmatpush.bf16.msra.mxu0 %v3891
        %5549 = vmatpush.bf16.msra.mxu0 %v3887
        %5550 = vmatmul.bf16.gmra.mxu0 %v1162
        %v5551 = vpop.f32.mrf.mxu0
        %v5552 = vadd.f32 %v5538, %v5551
        %v5553 = vpop.f32.mrf.mxu0
        %v5554 = vadd.f32 %v5540, %v5553
        %5555 = vdwg.mxu0
        %5556 = vmatpush.bf16.msra.mxu0 %v3947
        %5557 = vmatpush.bf16.msra.mxu0 %v3943
        %5558 = vmatpush.bf16.msra.mxu0 %v3939
        %5559 = vmatpush.bf16.msra.mxu0 %v3935
        %5560 = vmatpush.bf16.msra.mxu0 %v3931
        %5561 = vmatpush.bf16.msra.mxu0 %v3927
        %5562 = vmatpush.bf16.msra.mxu0 %v3923
        %5563 = vmatpush.bf16.msra.mxu0 %v3919
        %5564 = vmatmul.bf16.gmra.mxu0 %v1163
        %v5565 = vpop.f32.mrf.mxu0
        %v5566 = vadd.f32 %v5552, %v5565
        %v5567 = vpop.f32.mrf.mxu0
        %v5568 = vadd.f32 %v5554, %v5567
        %5569 = vdwg.mxu0
        %5570 = vmatpush.bf16.msra.mxu0 %v3979
        %5571 = vmatpush.bf16.msra.mxu0 %v3975
        %5572 = vmatpush.bf16.msra.mxu0 %v3971
        %5573 = vmatpush.bf16.msra.mxu0 %v3967
        %5574 = vmatpush.bf16.msra.mxu0 %v3963
        %5575 = vmatpush.bf16.msra.mxu0 %v3959
        %5576 = vmatpush.bf16.msra.mxu0 %v3955
        %5577 = vmatpush.bf16.msra.mxu0 %v3951
        %5578 = vmatmul.bf16.gmra.mxu0 %v1164
        %v5579 = vpop.f32.mrf.mxu0
        %v5580 = vadd.f32 %v5566, %v5579
        %v5581 = vpop.f32.mrf.mxu0
        %v5582 = vadd.f32 %v5568, %v5581
        %5583 = vdwg.mxu0
        %5584 = vmatpush.bf16.msra.mxu0 %v4011
        %5585 = vmatpush.bf16.msra.mxu0 %v4007
        %5586 = vmatpush.bf16.msra.mxu0 %v4003
        %5587 = vmatpush.bf16.msra.mxu0 %v3999
        %5588 = vmatpush.bf16.msra.mxu0 %v3995
        %5589 = vmatpush.bf16.msra.mxu0 %v3991
        %5590 = vmatpush.bf16.msra.mxu0 %v3987
        %5591 = vmatpush.bf16.msra.mxu0 %v3983
        %5592 = vmatmul.bf16.gmra.mxu0 %v1165
        %v5593 = vpop.f32.mrf.mxu0
        %v5594 = vadd.f32 %v5580, %v5593
        %v5595 = vpop.f32.mrf.mxu0
        %v5596 = vadd.f32 %v5582, %v5595
        %5597 = vdwg.mxu0
        %5598 = vmatpush.bf16.msra.mxu0 %v4043
        %5599 = vmatpush.bf16.msra.mxu0 %v4039
        %5600 = vmatpush.bf16.msra.mxu0 %v4035
        %5601 = vmatpush.bf16.msra.mxu0 %v4031
        %5602 = vmatpush.bf16.msra.mxu0 %v4027
        %5603 = vmatpush.bf16.msra.mxu0 %v4023
        %5604 = vmatpush.bf16.msra.mxu0 %v4019
        %5605 = vmatpush.bf16.msra.mxu0 %v4015
        %5606 = vmatmul.bf16.gmra.mxu0 %v1166
        %v5607 = vpop.f32.mrf.mxu0
        %v5608 = vadd.f32 %v5594, %v5607
        %v5609 = vpop.f32.mrf.mxu0
        %v5610 = vadd.f32 %v5596, %v5609
        %5611 = vdwg.mxu0
        %5612 = vmatpush.bf16.msra.mxu0 %v4075
        %5613 = vmatpush.bf16.msra.mxu0 %v4071
        %5614 = vmatpush.bf16.msra.mxu0 %v4067
        %5615 = vmatpush.bf16.msra.mxu0 %v4063
        %5616 = vmatpush.bf16.msra.mxu0 %v4059
        %5617 = vmatpush.bf16.msra.mxu0 %v4055
        %5618 = vmatpush.bf16.msra.mxu0 %v4051
        %5619 = vmatpush.bf16.msra.mxu0 %v4047
        %5620 = vmatmul.bf16.gmra.mxu0 %v1167
        %v5621 = vpop.f32.mrf.mxu0
        %v5622 = vadd.f32 %v5608, %v5621
        %v5623 = vpop.f32.mrf.mxu0
        %v5624 = vadd.f32 %v5610, %v5623
        %5625 = vdwg.mxu0
        %5626 = vmatpush.bf16.msra.mxu0 %v4107
        %5627 = vmatpush.bf16.msra.mxu0 %v4103
        %5628 = vmatpush.bf16.msra.mxu0 %v4099
        %5629 = vmatpush.bf16.msra.mxu0 %v4095
        %5630 = vmatpush.bf16.msra.mxu0 %v4091
        %5631 = vmatpush.bf16.msra.mxu0 %v4087
        %5632 = vmatpush.bf16.msra.mxu0 %v4083
        %5633 = vmatpush.bf16.msra.mxu0 %v4079
        %5634 = vmatmul.bf16.gmra.mxu0 %v1168
        %v5635 = vpop.f32.mrf.mxu0
        %v5636 = vadd.f32 %v5622, %v5635
        %v5637 = vpop.f32.mrf.mxu0
        %v5638 = vadd.f32 %v5624, %v5637
        %5639 = vdwg.mxu0
        %5640 = vmatpush.bf16.msra.mxu0 %v4139
        %5641 = vmatpush.bf16.msra.mxu0 %v4135
        %5642 = vmatpush.bf16.msra.mxu0 %v4131
        %5643 = vmatpush.bf16.msra.mxu0 %v4127
        %5644 = vmatpush.bf16.msra.mxu0 %v4123
        %5645 = vmatpush.bf16.msra.mxu0 %v4119
        %5646 = vmatpush.bf16.msra.mxu0 %v4115
        %5647 = vmatpush.bf16.msra.mxu0 %v4111
        %5648 = vmatmul.bf16.gmra.mxu0 %v1169
        %v5649 = vpop.f32.mrf.mxu0
        %v5650 = vadd.f32 %v5636, %v5649
        %v5651 = vpop.f32.mrf.mxu0
        %v5652 = vadd.f32 %v5638, %v5651
        %5653 = vdwg.mxu0
        %5654 = vmatpush.bf16.msra.mxu0 %v4171
        %5655 = vmatpush.bf16.msra.mxu0 %v4167
        %5656 = vmatpush.bf16.msra.mxu0 %v4163
        %5657 = vmatpush.bf16.msra.mxu0 %v4159
        %5658 = vmatpush.bf16.msra.mxu0 %v4155
        %5659 = vmatpush.bf16.msra.mxu0 %v4151
        %5660 = vmatpush.bf16.msra.mxu0 %v4147
        %5661 = vmatpush.bf16.msra.mxu0 %v4143
        %5662 = vmatmul.bf16.gmra.mxu0 %v1170
        %v5663 = vpop.f32.mrf.mxu0
        %v5664 = vadd.f32 %v5650, %v5663
        %v5665 = vpop.f32.mrf.mxu0
        %v5666 = vadd.f32 %v5652, %v5665
        %5667 = vdwg.mxu0
        %5668 = vmatpush.bf16.msra.mxu0 %v4203
        %5669 = vmatpush.bf16.msra.mxu0 %v4199
        %5670 = vmatpush.bf16.msra.mxu0 %v4195
        %5671 = vmatpush.bf16.msra.mxu0 %v4191
        %5672 = vmatpush.bf16.msra.mxu0 %v4187
        %5673 = vmatpush.bf16.msra.mxu0 %v4183
        %5674 = vmatpush.bf16.msra.mxu0 %v4179
        %5675 = vmatpush.bf16.msra.mxu0 %v4175
        %5676 = vmatmul.bf16.gmra.mxu0 %v1171
        %v5677 = vpop.f32.mrf.mxu0
        %v5678 = vadd.f32 %v5664, %v5677
        %v5679 = vpop.f32.mrf.mxu0
        %v5680 = vadd.f32 %v5666, %v5679
        %5681 = vdwg.mxu0
        %5682 = vmatpush.bf16.msra.mxu0 %v4235
        %5683 = vmatpush.bf16.msra.mxu0 %v4231
        %5684 = vmatpush.bf16.msra.mxu0 %v4227
        %5685 = vmatpush.bf16.msra.mxu0 %v4223
        %5686 = vmatpush.bf16.msra.mxu0 %v4219
        %5687 = vmatpush.bf16.msra.mxu0 %v4215
        %5688 = vmatpush.bf16.msra.mxu0 %v4211
        %5689 = vmatpush.bf16.msra.mxu0 %v4207
        %5690 = vmatmul.bf16.gmra.mxu0 %v1172
        %v5691 = vpop.f32.mrf.mxu0
        %v5692 = vadd.f32 %v5678, %v5691
        %v5693 = vpop.f32.mrf.mxu0
        %v5694 = vadd.f32 %v5680, %v5693
        %5695 = vdwg.mxu0
        %5696 = vmatpush.bf16.msra.mxu0 %v4267
        %5697 = vmatpush.bf16.msra.mxu0 %v4263
        %5698 = vmatpush.bf16.msra.mxu0 %v4259
        %5699 = vmatpush.bf16.msra.mxu0 %v4255
        %5700 = vmatpush.bf16.msra.mxu0 %v4251
        %5701 = vmatpush.bf16.msra.mxu0 %v4247
        %5702 = vmatpush.bf16.msra.mxu0 %v4243
        %5703 = vmatpush.bf16.msra.mxu0 %v4239
        %5704 = vmatmul.bf16.gmra.mxu0 %v1173
        %v5705 = vpop.f32.mrf.mxu0
        %v5706 = vadd.f32 %v5692, %v5705
        %v5707 = vpop.f32.mrf.mxu0
        %v5708 = vadd.f32 %v5694, %v5707
        %5709 = vdwg.mxu0
        %5710 = vmatpush.bf16.msra.mxu0 %v3532
        %5711 = vmatpush.bf16.msra.mxu0 %v3528
        %5712 = vmatpush.bf16.msra.mxu0 %v3524
        %5713 = vmatpush.bf16.msra.mxu0 %v3520
        %5714 = vmatpush.bf16.msra.mxu0 %v3516
        %5715 = vmatpush.bf16.msra.mxu0 %v3512
        %5716 = vmatpush.bf16.msra.mxu0 %v3508
        %5717 = vmatpush.bf16.msra.mxu0 %v3504
        %5718 = vmatmul.bf16.gmra.mxu0 %v1150
        %v5719 = vpop.f32.mrf.mxu0
        %v5720 = vadd.f32 0.0, %v5719
        %v5721 = vpop.f32.mrf.mxu0
        %v5722 = vadd.f32 0.0, %v5721
        %5723 = vdwg.mxu0
        %5724 = vmatpush.bf16.msra.mxu0 %v3564
        %5725 = vmatpush.bf16.msra.mxu0 %v3560
        %5726 = vmatpush.bf16.msra.mxu0 %v3556
        %5727 = vmatpush.bf16.msra.mxu0 %v3552
        %5728 = vmatpush.bf16.msra.mxu0 %v3548
        %5729 = vmatpush.bf16.msra.mxu0 %v3544
        %5730 = vmatpush.bf16.msra.mxu0 %v3540
        %5731 = vmatpush.bf16.msra.mxu0 %v3536
        %5732 = vmatmul.bf16.gmra.mxu0 %v1151
        %v5733 = vpop.f32.mrf.mxu0
        %v5734 = vadd.f32 %v5720, %v5733
        %v5735 = vpop.f32.mrf.mxu0
        %v5736 = vadd.f32 %v5722, %v5735
        %5737 = vdwg.mxu0
        %5738 = vmatpush.bf16.msra.mxu0 %v3596
        %5739 = vmatpush.bf16.msra.mxu0 %v3592
        %5740 = vmatpush.bf16.msra.mxu0 %v3588
        %5741 = vmatpush.bf16.msra.mxu0 %v3584
        %5742 = vmatpush.bf16.msra.mxu0 %v3580
        %5743 = vmatpush.bf16.msra.mxu0 %v3576
        %5744 = vmatpush.bf16.msra.mxu0 %v3572
        %5745 = vmatpush.bf16.msra.mxu0 %v3568
        %5746 = vmatmul.bf16.gmra.mxu0 %v1152
        %v5747 = vpop.f32.mrf.mxu0
        %v5748 = vadd.f32 %v5734, %v5747
        %v5749 = vpop.f32.mrf.mxu0
        %v5750 = vadd.f32 %v5736, %v5749
        %5751 = vdwg.mxu0
        %5752 = vmatpush.bf16.msra.mxu0 %v3628
        %5753 = vmatpush.bf16.msra.mxu0 %v3624
        %5754 = vmatpush.bf16.msra.mxu0 %v3620
        %5755 = vmatpush.bf16.msra.mxu0 %v3616
        %5756 = vmatpush.bf16.msra.mxu0 %v3612
        %5757 = vmatpush.bf16.msra.mxu0 %v3608
        %5758 = vmatpush.bf16.msra.mxu0 %v3604
        %5759 = vmatpush.bf16.msra.mxu0 %v3600
        %5760 = vmatmul.bf16.gmra.mxu0 %v1153
        %v5761 = vpop.f32.mrf.mxu0
        %v5762 = vadd.f32 %v5748, %v5761
        %v5763 = vpop.f32.mrf.mxu0
        %v5764 = vadd.f32 %v5750, %v5763
        %5765 = vdwg.mxu0
        %5766 = vmatpush.bf16.msra.mxu0 %v3660
        %5767 = vmatpush.bf16.msra.mxu0 %v3656
        %5768 = vmatpush.bf16.msra.mxu0 %v3652
        %5769 = vmatpush.bf16.msra.mxu0 %v3648
        %5770 = vmatpush.bf16.msra.mxu0 %v3644
        %5771 = vmatpush.bf16.msra.mxu0 %v3640
        %5772 = vmatpush.bf16.msra.mxu0 %v3636
        %5773 = vmatpush.bf16.msra.mxu0 %v3632
        %5774 = vmatmul.bf16.gmra.mxu0 %v1154
        %v5775 = vpop.f32.mrf.mxu0
        %v5776 = vadd.f32 %v5762, %v5775
        %v5777 = vpop.f32.mrf.mxu0
        %v5778 = vadd.f32 %v5764, %v5777
        %5779 = vdwg.mxu0
        %5780 = vmatpush.bf16.msra.mxu0 %v3692
        %5781 = vmatpush.bf16.msra.mxu0 %v3688
        %5782 = vmatpush.bf16.msra.mxu0 %v3684
        %5783 = vmatpush.bf16.msra.mxu0 %v3680
        %5784 = vmatpush.bf16.msra.mxu0 %v3676
        %5785 = vmatpush.bf16.msra.mxu0 %v3672
        %5786 = vmatpush.bf16.msra.mxu0 %v3668
        %5787 = vmatpush.bf16.msra.mxu0 %v3664
        %5788 = vmatmul.bf16.gmra.mxu0 %v1155
        %v5789 = vpop.f32.mrf.mxu0
        %v5790 = vadd.f32 %v5776, %v5789
        %v5791 = vpop.f32.mrf.mxu0
        %v5792 = vadd.f32 %v5778, %v5791
        %5793 = vdwg.mxu0
        %5794 = vmatpush.bf16.msra.mxu0 %v3724
        %5795 = vmatpush.bf16.msra.mxu0 %v3720
        %5796 = vmatpush.bf16.msra.mxu0 %v3716
        %5797 = vmatpush.bf16.msra.mxu0 %v3712
        %5798 = vmatpush.bf16.msra.mxu0 %v3708
        %5799 = vmatpush.bf16.msra.mxu0 %v3704
        %5800 = vmatpush.bf16.msra.mxu0 %v3700
        %5801 = vmatpush.bf16.msra.mxu0 %v3696
        %5802 = vmatmul.bf16.gmra.mxu0 %v1156
        %v5803 = vpop.f32.mrf.mxu0
        %v5804 = vadd.f32 %v5790, %v5803
        %v5805 = vpop.f32.mrf.mxu0
        %v5806 = vadd.f32 %v5792, %v5805
        %5807 = vdwg.mxu0
        %5808 = vmatpush.bf16.msra.mxu0 %v3756
        %5809 = vmatpush.bf16.msra.mxu0 %v3752
        %5810 = vmatpush.bf16.msra.mxu0 %v3748
        %5811 = vmatpush.bf16.msra.mxu0 %v3744
        %5812 = vmatpush.bf16.msra.mxu0 %v3740
        %5813 = vmatpush.bf16.msra.mxu0 %v3736
        %5814 = vmatpush.bf16.msra.mxu0 %v3732
        %5815 = vmatpush.bf16.msra.mxu0 %v3728
        %5816 = vmatmul.bf16.gmra.mxu0 %v1157
        %v5817 = vpop.f32.mrf.mxu0
        %v5818 = vadd.f32 %v5804, %v5817
        %v5819 = vpop.f32.mrf.mxu0
        %v5820 = vadd.f32 %v5806, %v5819
        %5821 = vdwg.mxu0
        %5822 = vmatpush.bf16.msra.mxu0 %v3788
        %5823 = vmatpush.bf16.msra.mxu0 %v3784
        %5824 = vmatpush.bf16.msra.mxu0 %v3780
        %5825 = vmatpush.bf16.msra.mxu0 %v3776
        %5826 = vmatpush.bf16.msra.mxu0 %v3772
        %5827 = vmatpush.bf16.msra.mxu0 %v3768
        %5828 = vmatpush.bf16.msra.mxu0 %v3764
        %5829 = vmatpush.bf16.msra.mxu0 %v3760
        %5830 = vmatmul.bf16.gmra.mxu0 %v1158
        %v5831 = vpop.f32.mrf.mxu0
        %v5832 = vadd.f32 %v5818, %v5831
        %v5833 = vpop.f32.mrf.mxu0
        %v5834 = vadd.f32 %v5820, %v5833
        %5835 = vdwg.mxu0
        %5836 = vmatpush.bf16.msra.mxu0 %v3820
        %5837 = vmatpush.bf16.msra.mxu0 %v3816
        %5838 = vmatpush.bf16.msra.mxu0 %v3812
        %5839 = vmatpush.bf16.msra.mxu0 %v3808
        %5840 = vmatpush.bf16.msra.mxu0 %v3804
        %5841 = vmatpush.bf16.msra.mxu0 %v3800
        %5842 = vmatpush.bf16.msra.mxu0 %v3796
        %5843 = vmatpush.bf16.msra.mxu0 %v3792
        %5844 = vmatmul.bf16.gmra.mxu0 %v1159
        %v5845 = vpop.f32.mrf.mxu0
        %v5846 = vadd.f32 %v5832, %v5845
        %v5847 = vpop.f32.mrf.mxu0
        %v5848 = vadd.f32 %v5834, %v5847
        %5849 = vdwg.mxu0
        %5850 = vmatpush.bf16.msra.mxu0 %v3852
        %5851 = vmatpush.bf16.msra.mxu0 %v3848
        %5852 = vmatpush.bf16.msra.mxu0 %v3844
        %5853 = vmatpush.bf16.msra.mxu0 %v3840
        %5854 = vmatpush.bf16.msra.mxu0 %v3836
        %5855 = vmatpush.bf16.msra.mxu0 %v3832
        %5856 = vmatpush.bf16.msra.mxu0 %v3828
        %5857 = vmatpush.bf16.msra.mxu0 %v3824
        %5858 = vmatmul.bf16.gmra.mxu0 %v1160
        %v5859 = vpop.f32.mrf.mxu0
        %v5860 = vadd.f32 %v5846, %v5859
        %v5861 = vpop.f32.mrf.mxu0
        %v5862 = vadd.f32 %v5848, %v5861
        %5863 = vdwg.mxu0
        %5864 = vmatpush.bf16.msra.mxu0 %v3884
        %5865 = vmatpush.bf16.msra.mxu0 %v3880
        %5866 = vmatpush.bf16.msra.mxu0 %v3876
        %5867 = vmatpush.bf16.msra.mxu0 %v3872
        %5868 = vmatpush.bf16.msra.mxu0 %v3868
        %5869 = vmatpush.bf16.msra.mxu0 %v3864
        %5870 = vmatpush.bf16.msra.mxu0 %v3860
        %5871 = vmatpush.bf16.msra.mxu0 %v3856
        %5872 = vmatmul.bf16.gmra.mxu0 %v1161
        %v5873 = vpop.f32.mrf.mxu0
        %v5874 = vadd.f32 %v5860, %v5873
        %v5875 = vpop.f32.mrf.mxu0
        %v5876 = vadd.f32 %v5862, %v5875
        %5877 = vdwg.mxu0
        %5878 = vmatpush.bf16.msra.mxu0 %v3916
        %5879 = vmatpush.bf16.msra.mxu0 %v3912
        %5880 = vmatpush.bf16.msra.mxu0 %v3908
        %5881 = vmatpush.bf16.msra.mxu0 %v3904
        %5882 = vmatpush.bf16.msra.mxu0 %v3900
        %5883 = vmatpush.bf16.msra.mxu0 %v3896
        %5884 = vmatpush.bf16.msra.mxu0 %v3892
        %5885 = vmatpush.bf16.msra.mxu0 %v3888
        %5886 = vmatmul.bf16.gmra.mxu0 %v1162
        %v5887 = vpop.f32.mrf.mxu0
        %v5888 = vadd.f32 %v5874, %v5887
        %v5889 = vpop.f32.mrf.mxu0
        %v5890 = vadd.f32 %v5876, %v5889
        %5891 = vdwg.mxu0
        %5892 = vmatpush.bf16.msra.mxu0 %v3948
        %5893 = vmatpush.bf16.msra.mxu0 %v3944
        %5894 = vmatpush.bf16.msra.mxu0 %v3940
        %5895 = vmatpush.bf16.msra.mxu0 %v3936
        %5896 = vmatpush.bf16.msra.mxu0 %v3932
        %5897 = vmatpush.bf16.msra.mxu0 %v3928
        %5898 = vmatpush.bf16.msra.mxu0 %v3924
        %5899 = vmatpush.bf16.msra.mxu0 %v3920
        %5900 = vmatmul.bf16.gmra.mxu0 %v1163
        %v5901 = vpop.f32.mrf.mxu0
        %v5902 = vadd.f32 %v5888, %v5901
        %v5903 = vpop.f32.mrf.mxu0
        %v5904 = vadd.f32 %v5890, %v5903
        %5905 = vdwg.mxu0
        %5906 = vmatpush.bf16.msra.mxu0 %v3980
        %5907 = vmatpush.bf16.msra.mxu0 %v3976
        %5908 = vmatpush.bf16.msra.mxu0 %v3972
        %5909 = vmatpush.bf16.msra.mxu0 %v3968
        %5910 = vmatpush.bf16.msra.mxu0 %v3964
        %5911 = vmatpush.bf16.msra.mxu0 %v3960
        %5912 = vmatpush.bf16.msra.mxu0 %v3956
        %5913 = vmatpush.bf16.msra.mxu0 %v3952
        %5914 = vmatmul.bf16.gmra.mxu0 %v1164
        %v5915 = vpop.f32.mrf.mxu0
        %v5916 = vadd.f32 %v5902, %v5915
        %v5917 = vpop.f32.mrf.mxu0
        %v5918 = vadd.f32 %v5904, %v5917
        %5919 = vdwg.mxu0
        %5920 = vmatpush.bf16.msra.mxu0 %v4012
        %5921 = vmatpush.bf16.msra.mxu0 %v4008
        %5922 = vmatpush.bf16.msra.mxu0 %v4004
        %5923 = vmatpush.bf16.msra.mxu0 %v4000
        %5924 = vmatpush.bf16.msra.mxu0 %v3996
        %5925 = vmatpush.bf16.msra.mxu0 %v3992
        %5926 = vmatpush.bf16.msra.mxu0 %v3988
        %5927 = vmatpush.bf16.msra.mxu0 %v3984
        %5928 = vmatmul.bf16.gmra.mxu0 %v1165
        %v5929 = vpop.f32.mrf.mxu0
        %v5930 = vadd.f32 %v5916, %v5929
        %v5931 = vpop.f32.mrf.mxu0
        %v5932 = vadd.f32 %v5918, %v5931
        %5933 = vdwg.mxu0
        %5934 = vmatpush.bf16.msra.mxu0 %v4044
        %5935 = vmatpush.bf16.msra.mxu0 %v4040
        %5936 = vmatpush.bf16.msra.mxu0 %v4036
        %5937 = vmatpush.bf16.msra.mxu0 %v4032
        %5938 = vmatpush.bf16.msra.mxu0 %v4028
        %5939 = vmatpush.bf16.msra.mxu0 %v4024
        %5940 = vmatpush.bf16.msra.mxu0 %v4020
        %5941 = vmatpush.bf16.msra.mxu0 %v4016
        %5942 = vmatmul.bf16.gmra.mxu0 %v1166
        %v5943 = vpop.f32.mrf.mxu0
        %v5944 = vadd.f32 %v5930, %v5943
        %v5945 = vpop.f32.mrf.mxu0
        %v5946 = vadd.f32 %v5932, %v5945
        %5947 = vdwg.mxu0
        %5948 = vmatpush.bf16.msra.mxu0 %v4076
        %5949 = vmatpush.bf16.msra.mxu0 %v4072
        %5950 = vmatpush.bf16.msra.mxu0 %v4068
        %5951 = vmatpush.bf16.msra.mxu0 %v4064
        %5952 = vmatpush.bf16.msra.mxu0 %v4060
        %5953 = vmatpush.bf16.msra.mxu0 %v4056
        %5954 = vmatpush.bf16.msra.mxu0 %v4052
        %5955 = vmatpush.bf16.msra.mxu0 %v4048
        %5956 = vmatmul.bf16.gmra.mxu0 %v1167
        %v5957 = vpop.f32.mrf.mxu0
        %v5958 = vadd.f32 %v5944, %v5957
        %v5959 = vpop.f32.mrf.mxu0
        %v5960 = vadd.f32 %v5946, %v5959
        %5961 = vdwg.mxu0
        %5962 = vmatpush.bf16.msra.mxu0 %v4108
        %5963 = vmatpush.bf16.msra.mxu0 %v4104
        %5964 = vmatpush.bf16.msra.mxu0 %v4100
        %5965 = vmatpush.bf16.msra.mxu0 %v4096
        %5966 = vmatpush.bf16.msra.mxu0 %v4092
        %5967 = vmatpush.bf16.msra.mxu0 %v4088
        %5968 = vmatpush.bf16.msra.mxu0 %v4084
        %5969 = vmatpush.bf16.msra.mxu0 %v4080
        %5970 = vmatmul.bf16.gmra.mxu0 %v1168
        %v5971 = vpop.f32.mrf.mxu0
        %v5972 = vadd.f32 %v5958, %v5971
        %v5973 = vpop.f32.mrf.mxu0
        %v5974 = vadd.f32 %v5960, %v5973
        %5975 = vdwg.mxu0
        %5976 = vmatpush.bf16.msra.mxu0 %v4140
        %5977 = vmatpush.bf16.msra.mxu0 %v4136
        %5978 = vmatpush.bf16.msra.mxu0 %v4132
        %5979 = vmatpush.bf16.msra.mxu0 %v4128
        %5980 = vmatpush.bf16.msra.mxu0 %v4124
        %5981 = vmatpush.bf16.msra.mxu0 %v4120
        %5982 = vmatpush.bf16.msra.mxu0 %v4116
        %5983 = vmatpush.bf16.msra.mxu0 %v4112
        %5984 = vmatmul.bf16.gmra.mxu0 %v1169
        %v5985 = vpop.f32.mrf.mxu0
        %v5986 = vadd.f32 %v5972, %v5985
        %v5987 = vpop.f32.mrf.mxu0
        %v5988 = vadd.f32 %v5974, %v5987
        %5989 = vdwg.mxu0
        %5990 = vmatpush.bf16.msra.mxu0 %v4172
        %5991 = vmatpush.bf16.msra.mxu0 %v4168
        %5992 = vmatpush.bf16.msra.mxu0 %v4164
        %5993 = vmatpush.bf16.msra.mxu0 %v4160
        %5994 = vmatpush.bf16.msra.mxu0 %v4156
        %5995 = vmatpush.bf16.msra.mxu0 %v4152
        %5996 = vmatpush.bf16.msra.mxu0 %v4148
        %5997 = vmatpush.bf16.msra.mxu0 %v4144
        %5998 = vmatmul.bf16.gmra.mxu0 %v1170
        %v5999 = vpop.f32.mrf.mxu0
        %v6000 = vadd.f32 %v5986, %v5999
        %v6001 = vpop.f32.mrf.mxu0
        %v6002 = vadd.f32 %v5988, %v6001
        %6003 = vdwg.mxu0
        %6004 = vmatpush.bf16.msra.mxu0 %v4204
        %6005 = vmatpush.bf16.msra.mxu0 %v4200
        %6006 = vmatpush.bf16.msra.mxu0 %v4196
        %6007 = vmatpush.bf16.msra.mxu0 %v4192
        %6008 = vmatpush.bf16.msra.mxu0 %v4188
        %6009 = vmatpush.bf16.msra.mxu0 %v4184
        %6010 = vmatpush.bf16.msra.mxu0 %v4180
        %6011 = vmatpush.bf16.msra.mxu0 %v4176
        %6012 = vmatmul.bf16.gmra.mxu0 %v1171
        %v6013 = vpop.f32.mrf.mxu0
        %v6014 = vadd.f32 %v6000, %v6013
        %v6015 = vpop.f32.mrf.mxu0
        %v6016 = vadd.f32 %v6002, %v6015
        %6017 = vdwg.mxu0
        %6018 = vmatpush.bf16.msra.mxu0 %v4236
        %6019 = vmatpush.bf16.msra.mxu0 %v4232
        %6020 = vmatpush.bf16.msra.mxu0 %v4228
        %6021 = vmatpush.bf16.msra.mxu0 %v4224
        %6022 = vmatpush.bf16.msra.mxu0 %v4220
        %6023 = vmatpush.bf16.msra.mxu0 %v4216
        %6024 = vmatpush.bf16.msra.mxu0 %v4212
        %6025 = vmatpush.bf16.msra.mxu0 %v4208
        %6026 = vmatmul.bf16.gmra.mxu0 %v1172
        %v6027 = vpop.f32.mrf.mxu0
        %v6028 = vadd.f32 %v6014, %v6027
        %v6029 = vpop.f32.mrf.mxu0
        %v6030 = vadd.f32 %v6016, %v6029
        %6031 = vdwg.mxu0
        %6032 = vmatpush.bf16.msra.mxu0 %v4268
        %6033 = vmatpush.bf16.msra.mxu0 %v4264
        %6034 = vmatpush.bf16.msra.mxu0 %v4260
        %6035 = vmatpush.bf16.msra.mxu0 %v4256
        %6036 = vmatpush.bf16.msra.mxu0 %v4252
        %6037 = vmatpush.bf16.msra.mxu0 %v4248
        %6038 = vmatpush.bf16.msra.mxu0 %v4244
        %6039 = vmatpush.bf16.msra.mxu0 %v4240
        %6040 = vmatmul.bf16.gmra.mxu0 %v1173
        %v6041 = vpop.f32.mrf.mxu0
        %v6042 = vadd.f32 %v6028, %v6041
        %v6043 = vpop.f32.mrf.mxu0
        %v6044 = vadd.f32 %v6030, %v6043
        %6045 = vdwg.mxu0
        %6046 = vmatpush.bf16.msra.mxu0 %v3533
        %6047 = vmatpush.bf16.msra.mxu0 %v3529
        %6048 = vmatpush.bf16.msra.mxu0 %v3525
        %6049 = vmatpush.bf16.msra.mxu0 %v3521
        %6050 = vmatpush.bf16.msra.mxu0 %v3517
        %6051 = vmatpush.bf16.msra.mxu0 %v3513
        %6052 = vmatpush.bf16.msra.mxu0 %v3509
        %6053 = vmatpush.bf16.msra.mxu0 %v3505
        %6054 = vmatmul.bf16.gmra.mxu0 %v1150
        %v6055 = vpop.f32.mrf.mxu0
        %v6056 = vadd.f32 0.0, %v6055
        %v6057 = vpop.f32.mrf.mxu0
        %v6058 = vadd.f32 0.0, %v6057
        %6059 = vdwg.mxu0
        %6060 = vmatpush.bf16.msra.mxu0 %v3565
        %6061 = vmatpush.bf16.msra.mxu0 %v3561
        %6062 = vmatpush.bf16.msra.mxu0 %v3557
        %6063 = vmatpush.bf16.msra.mxu0 %v3553
        %6064 = vmatpush.bf16.msra.mxu0 %v3549
        %6065 = vmatpush.bf16.msra.mxu0 %v3545
        %6066 = vmatpush.bf16.msra.mxu0 %v3541
        %6067 = vmatpush.bf16.msra.mxu0 %v3537
        %6068 = vmatmul.bf16.gmra.mxu0 %v1151
        %v6069 = vpop.f32.mrf.mxu0
        %v6070 = vadd.f32 %v6056, %v6069
        %v6071 = vpop.f32.mrf.mxu0
        %v6072 = vadd.f32 %v6058, %v6071
        %6073 = vdwg.mxu0
        %6074 = vmatpush.bf16.msra.mxu0 %v3597
        %6075 = vmatpush.bf16.msra.mxu0 %v3593
        %6076 = vmatpush.bf16.msra.mxu0 %v3589
        %6077 = vmatpush.bf16.msra.mxu0 %v3585
        %6078 = vmatpush.bf16.msra.mxu0 %v3581
        %6079 = vmatpush.bf16.msra.mxu0 %v3577
        %6080 = vmatpush.bf16.msra.mxu0 %v3573
        %6081 = vmatpush.bf16.msra.mxu0 %v3569
        %6082 = vmatmul.bf16.gmra.mxu0 %v1152
        %v6083 = vpop.f32.mrf.mxu0
        %v6084 = vadd.f32 %v6070, %v6083
        %v6085 = vpop.f32.mrf.mxu0
        %v6086 = vadd.f32 %v6072, %v6085
        %6087 = vdwg.mxu0
        %6088 = vmatpush.bf16.msra.mxu0 %v3629
        %6089 = vmatpush.bf16.msra.mxu0 %v3625
        %6090 = vmatpush.bf16.msra.mxu0 %v3621
        %6091 = vmatpush.bf16.msra.mxu0 %v3617
        %6092 = vmatpush.bf16.msra.mxu0 %v3613
        %6093 = vmatpush.bf16.msra.mxu0 %v3609
        %6094 = vmatpush.bf16.msra.mxu0 %v3605
        %6095 = vmatpush.bf16.msra.mxu0 %v3601
        %6096 = vmatmul.bf16.gmra.mxu0 %v1153
        %v6097 = vpop.f32.mrf.mxu0
        %v6098 = vadd.f32 %v6084, %v6097
        %v6099 = vpop.f32.mrf.mxu0
        %v6100 = vadd.f32 %v6086, %v6099
        %6101 = vdwg.mxu0
        %6102 = vmatpush.bf16.msra.mxu0 %v3661
        %6103 = vmatpush.bf16.msra.mxu0 %v3657
        %6104 = vmatpush.bf16.msra.mxu0 %v3653
        %6105 = vmatpush.bf16.msra.mxu0 %v3649
        %6106 = vmatpush.bf16.msra.mxu0 %v3645
        %6107 = vmatpush.bf16.msra.mxu0 %v3641
        %6108 = vmatpush.bf16.msra.mxu0 %v3637
        %6109 = vmatpush.bf16.msra.mxu0 %v3633
        %6110 = vmatmul.bf16.gmra.mxu0 %v1154
        %v6111 = vpop.f32.mrf.mxu0
        %v6112 = vadd.f32 %v6098, %v6111
        %v6113 = vpop.f32.mrf.mxu0
        %v6114 = vadd.f32 %v6100, %v6113
        %6115 = vdwg.mxu0
        %6116 = vmatpush.bf16.msra.mxu0 %v3693
        %6117 = vmatpush.bf16.msra.mxu0 %v3689
        %6118 = vmatpush.bf16.msra.mxu0 %v3685
        %6119 = vmatpush.bf16.msra.mxu0 %v3681
        %6120 = vmatpush.bf16.msra.mxu0 %v3677
        %6121 = vmatpush.bf16.msra.mxu0 %v3673
        %6122 = vmatpush.bf16.msra.mxu0 %v3669
        %6123 = vmatpush.bf16.msra.mxu0 %v3665
        %6124 = vmatmul.bf16.gmra.mxu0 %v1155
        %v6125 = vpop.f32.mrf.mxu0
        %v6126 = vadd.f32 %v6112, %v6125
        %v6127 = vpop.f32.mrf.mxu0
        %v6128 = vadd.f32 %v6114, %v6127
        %6129 = vdwg.mxu0
        %6130 = vmatpush.bf16.msra.mxu0 %v3725
        %6131 = vmatpush.bf16.msra.mxu0 %v3721
        %6132 = vmatpush.bf16.msra.mxu0 %v3717
        %6133 = vmatpush.bf16.msra.mxu0 %v3713
        %6134 = vmatpush.bf16.msra.mxu0 %v3709
        %6135 = vmatpush.bf16.msra.mxu0 %v3705
        %6136 = vmatpush.bf16.msra.mxu0 %v3701
        %6137 = vmatpush.bf16.msra.mxu0 %v3697
        %6138 = vmatmul.bf16.gmra.mxu0 %v1156
        %v6139 = vpop.f32.mrf.mxu0
        %v6140 = vadd.f32 %v6126, %v6139
        %v6141 = vpop.f32.mrf.mxu0
        %v6142 = vadd.f32 %v6128, %v6141
        %6143 = vdwg.mxu0
        %6144 = vmatpush.bf16.msra.mxu0 %v3757
        %6145 = vmatpush.bf16.msra.mxu0 %v3753
        %6146 = vmatpush.bf16.msra.mxu0 %v3749
        %6147 = vmatpush.bf16.msra.mxu0 %v3745
        %6148 = vmatpush.bf16.msra.mxu0 %v3741
        %6149 = vmatpush.bf16.msra.mxu0 %v3737
        %6150 = vmatpush.bf16.msra.mxu0 %v3733
        %6151 = vmatpush.bf16.msra.mxu0 %v3729
        %6152 = vmatmul.bf16.gmra.mxu0 %v1157
        %v6153 = vpop.f32.mrf.mxu0
        %v6154 = vadd.f32 %v6140, %v6153
        %v6155 = vpop.f32.mrf.mxu0
        %v6156 = vadd.f32 %v6142, %v6155
        %6157 = vdwg.mxu0
        %6158 = vmatpush.bf16.msra.mxu0 %v3789
        %6159 = vmatpush.bf16.msra.mxu0 %v3785
        %6160 = vmatpush.bf16.msra.mxu0 %v3781
        %6161 = vmatpush.bf16.msra.mxu0 %v3777
        %6162 = vmatpush.bf16.msra.mxu0 %v3773
        %6163 = vmatpush.bf16.msra.mxu0 %v3769
        %6164 = vmatpush.bf16.msra.mxu0 %v3765
        %6165 = vmatpush.bf16.msra.mxu0 %v3761
        %6166 = vmatmul.bf16.gmra.mxu0 %v1158
        %v6167 = vpop.f32.mrf.mxu0
        %v6168 = vadd.f32 %v6154, %v6167
        %v6169 = vpop.f32.mrf.mxu0
        %v6170 = vadd.f32 %v6156, %v6169
        %6171 = vdwg.mxu0
        %6172 = vmatpush.bf16.msra.mxu0 %v3821
        %6173 = vmatpush.bf16.msra.mxu0 %v3817
        %6174 = vmatpush.bf16.msra.mxu0 %v3813
        %6175 = vmatpush.bf16.msra.mxu0 %v3809
        %6176 = vmatpush.bf16.msra.mxu0 %v3805
        %6177 = vmatpush.bf16.msra.mxu0 %v3801
        %6178 = vmatpush.bf16.msra.mxu0 %v3797
        %6179 = vmatpush.bf16.msra.mxu0 %v3793
        %6180 = vmatmul.bf16.gmra.mxu0 %v1159
        %v6181 = vpop.f32.mrf.mxu0
        %v6182 = vadd.f32 %v6168, %v6181
        %v6183 = vpop.f32.mrf.mxu0
        %v6184 = vadd.f32 %v6170, %v6183
        %6185 = vdwg.mxu0
        %6186 = vmatpush.bf16.msra.mxu0 %v3853
        %6187 = vmatpush.bf16.msra.mxu0 %v3849
        %6188 = vmatpush.bf16.msra.mxu0 %v3845
        %6189 = vmatpush.bf16.msra.mxu0 %v3841
        %6190 = vmatpush.bf16.msra.mxu0 %v3837
        %6191 = vmatpush.bf16.msra.mxu0 %v3833
        %6192 = vmatpush.bf16.msra.mxu0 %v3829
        %6193 = vmatpush.bf16.msra.mxu0 %v3825
        %6194 = vmatmul.bf16.gmra.mxu0 %v1160
        %v6195 = vpop.f32.mrf.mxu0
        %v6196 = vadd.f32 %v6182, %v6195
        %v6197 = vpop.f32.mrf.mxu0
        %v6198 = vadd.f32 %v6184, %v6197
        %6199 = vdwg.mxu0
        %6200 = vmatpush.bf16.msra.mxu0 %v3885
        %6201 = vmatpush.bf16.msra.mxu0 %v3881
        %6202 = vmatpush.bf16.msra.mxu0 %v3877
        %6203 = vmatpush.bf16.msra.mxu0 %v3873
        %6204 = vmatpush.bf16.msra.mxu0 %v3869
        %6205 = vmatpush.bf16.msra.mxu0 %v3865
        %6206 = vmatpush.bf16.msra.mxu0 %v3861
        %6207 = vmatpush.bf16.msra.mxu0 %v3857
        %6208 = vmatmul.bf16.gmra.mxu0 %v1161
        %v6209 = vpop.f32.mrf.mxu0
        %v6210 = vadd.f32 %v6196, %v6209
        %v6211 = vpop.f32.mrf.mxu0
        %v6212 = vadd.f32 %v6198, %v6211
        %6213 = vdwg.mxu0
        %6214 = vmatpush.bf16.msra.mxu0 %v3917
        %6215 = vmatpush.bf16.msra.mxu0 %v3913
        %6216 = vmatpush.bf16.msra.mxu0 %v3909
        %6217 = vmatpush.bf16.msra.mxu0 %v3905
        %6218 = vmatpush.bf16.msra.mxu0 %v3901
        %6219 = vmatpush.bf16.msra.mxu0 %v3897
        %6220 = vmatpush.bf16.msra.mxu0 %v3893
        %6221 = vmatpush.bf16.msra.mxu0 %v3889
        %6222 = vmatmul.bf16.gmra.mxu0 %v1162
        %v6223 = vpop.f32.mrf.mxu0
        %v6224 = vadd.f32 %v6210, %v6223
        %v6225 = vpop.f32.mrf.mxu0
        %v6226 = vadd.f32 %v6212, %v6225
        %6227 = vdwg.mxu0
        %6228 = vmatpush.bf16.msra.mxu0 %v3949
        %6229 = vmatpush.bf16.msra.mxu0 %v3945
        %6230 = vmatpush.bf16.msra.mxu0 %v3941
        %6231 = vmatpush.bf16.msra.mxu0 %v3937
        %6232 = vmatpush.bf16.msra.mxu0 %v3933
        %6233 = vmatpush.bf16.msra.mxu0 %v3929
        %6234 = vmatpush.bf16.msra.mxu0 %v3925
        %6235 = vmatpush.bf16.msra.mxu0 %v3921
        %6236 = vmatmul.bf16.gmra.mxu0 %v1163
        %v6237 = vpop.f32.mrf.mxu0
        %v6238 = vadd.f32 %v6224, %v6237
        %v6239 = vpop.f32.mrf.mxu0
        %v6240 = vadd.f32 %v6226, %v6239
        %6241 = vdwg.mxu0
        %6242 = vmatpush.bf16.msra.mxu0 %v3981
        %6243 = vmatpush.bf16.msra.mxu0 %v3977
        %6244 = vmatpush.bf16.msra.mxu0 %v3973
        %6245 = vmatpush.bf16.msra.mxu0 %v3969
        %6246 = vmatpush.bf16.msra.mxu0 %v3965
        %6247 = vmatpush.bf16.msra.mxu0 %v3961
        %6248 = vmatpush.bf16.msra.mxu0 %v3957
        %6249 = vmatpush.bf16.msra.mxu0 %v3953
        %6250 = vmatmul.bf16.gmra.mxu0 %v1164
        %v6251 = vpop.f32.mrf.mxu0
        %v6252 = vadd.f32 %v6238, %v6251
        %v6253 = vpop.f32.mrf.mxu0
        %v6254 = vadd.f32 %v6240, %v6253
        %6255 = vdwg.mxu0
        %6256 = vmatpush.bf16.msra.mxu0 %v4013
        %6257 = vmatpush.bf16.msra.mxu0 %v4009
        %6258 = vmatpush.bf16.msra.mxu0 %v4005
        %6259 = vmatpush.bf16.msra.mxu0 %v4001
        %6260 = vmatpush.bf16.msra.mxu0 %v3997
        %6261 = vmatpush.bf16.msra.mxu0 %v3993
        %6262 = vmatpush.bf16.msra.mxu0 %v3989
        %6263 = vmatpush.bf16.msra.mxu0 %v3985
        %6264 = vmatmul.bf16.gmra.mxu0 %v1165
        %v6265 = vpop.f32.mrf.mxu0
        %v6266 = vadd.f32 %v6252, %v6265
        %v6267 = vpop.f32.mrf.mxu0
        %v6268 = vadd.f32 %v6254, %v6267
        %6269 = vdwg.mxu0
        %6270 = vmatpush.bf16.msra.mxu0 %v4045
        %6271 = vmatpush.bf16.msra.mxu0 %v4041
        %6272 = vmatpush.bf16.msra.mxu0 %v4037
        %6273 = vmatpush.bf16.msra.mxu0 %v4033
        %6274 = vmatpush.bf16.msra.mxu0 %v4029
        %6275 = vmatpush.bf16.msra.mxu0 %v4025
        %6276 = vmatpush.bf16.msra.mxu0 %v4021
        %6277 = vmatpush.bf16.msra.mxu0 %v4017
        %6278 = vmatmul.bf16.gmra.mxu0 %v1166
        %v6279 = vpop.f32.mrf.mxu0
        %v6280 = vadd.f32 %v6266, %v6279
        %v6281 = vpop.f32.mrf.mxu0
        %v6282 = vadd.f32 %v6268, %v6281
        %6283 = vdwg.mxu0
        %6284 = vmatpush.bf16.msra.mxu0 %v4077
        %6285 = vmatpush.bf16.msra.mxu0 %v4073
        %6286 = vmatpush.bf16.msra.mxu0 %v4069
        %6287 = vmatpush.bf16.msra.mxu0 %v4065
        %6288 = vmatpush.bf16.msra.mxu0 %v4061
        %6289 = vmatpush.bf16.msra.mxu0 %v4057
        %6290 = vmatpush.bf16.msra.mxu0 %v4053
        %6291 = vmatpush.bf16.msra.mxu0 %v4049
        %6292 = vmatmul.bf16.gmra.mxu0 %v1167
        %v6293 = vpop.f32.mrf.mxu0
        %v6294 = vadd.f32 %v6280, %v6293
        %v6295 = vpop.f32.mrf.mxu0
        %v6296 = vadd.f32 %v6282, %v6295
        %6297 = vdwg.mxu0
        %6298 = vmatpush.bf16.msra.mxu0 %v4109
        %6299 = vmatpush.bf16.msra.mxu0 %v4105
        %6300 = vmatpush.bf16.msra.mxu0 %v4101
        %6301 = vmatpush.bf16.msra.mxu0 %v4097
        %6302 = vmatpush.bf16.msra.mxu0 %v4093
        %6303 = vmatpush.bf16.msra.mxu0 %v4089
        %6304 = vmatpush.bf16.msra.mxu0 %v4085
        %6305 = vmatpush.bf16.msra.mxu0 %v4081
        %6306 = vmatmul.bf16.gmra.mxu0 %v1168
        %v6307 = vpop.f32.mrf.mxu0
        %v6308 = vadd.f32 %v6294, %v6307
        %v6309 = vpop.f32.mrf.mxu0
        %v6310 = vadd.f32 %v6296, %v6309
        %6311 = vdwg.mxu0
        %6312 = vmatpush.bf16.msra.mxu0 %v4141
        %6313 = vmatpush.bf16.msra.mxu0 %v4137
        %6314 = vmatpush.bf16.msra.mxu0 %v4133
        %6315 = vmatpush.bf16.msra.mxu0 %v4129
        %6316 = vmatpush.bf16.msra.mxu0 %v4125
        %6317 = vmatpush.bf16.msra.mxu0 %v4121
        %6318 = vmatpush.bf16.msra.mxu0 %v4117
        %6319 = vmatpush.bf16.msra.mxu0 %v4113
        %6320 = vmatmul.bf16.gmra.mxu0 %v1169
        %v6321 = vpop.f32.mrf.mxu0
        %v6322 = vadd.f32 %v6308, %v6321
        %v6323 = vpop.f32.mrf.mxu0
        %v6324 = vadd.f32 %v6310, %v6323
        %6325 = vdwg.mxu0
        %6326 = vmatpush.bf16.msra.mxu0 %v4173
        %6327 = vmatpush.bf16.msra.mxu0 %v4169
        %6328 = vmatpush.bf16.msra.mxu0 %v4165
        %6329 = vmatpush.bf16.msra.mxu0 %v4161
        %6330 = vmatpush.bf16.msra.mxu0 %v4157
        %6331 = vmatpush.bf16.msra.mxu0 %v4153
        %6332 = vmatpush.bf16.msra.mxu0 %v4149
        %6333 = vmatpush.bf16.msra.mxu0 %v4145
        %6334 = vmatmul.bf16.gmra.mxu0 %v1170
        %v6335 = vpop.f32.mrf.mxu0
        %v6336 = vadd.f32 %v6322, %v6335
        %v6337 = vpop.f32.mrf.mxu0
        %v6338 = vadd.f32 %v6324, %v6337
        %6339 = vdwg.mxu0
        %6340 = vmatpush.bf16.msra.mxu0 %v4205
        %6341 = vmatpush.bf16.msra.mxu0 %v4201
        %6342 = vmatpush.bf16.msra.mxu0 %v4197
        %6343 = vmatpush.bf16.msra.mxu0 %v4193
        %6344 = vmatpush.bf16.msra.mxu0 %v4189
        %6345 = vmatpush.bf16.msra.mxu0 %v4185
        %6346 = vmatpush.bf16.msra.mxu0 %v4181
        %6347 = vmatpush.bf16.msra.mxu0 %v4177
        %6348 = vmatmul.bf16.gmra.mxu0 %v1171
        %v6349 = vpop.f32.mrf.mxu0
        %v6350 = vadd.f32 %v6336, %v6349
        %v6351 = vpop.f32.mrf.mxu0
        %v6352 = vadd.f32 %v6338, %v6351
        %6353 = vdwg.mxu0
        %6354 = vmatpush.bf16.msra.mxu0 %v4237
        %6355 = vmatpush.bf16.msra.mxu0 %v4233
        %6356 = vmatpush.bf16.msra.mxu0 %v4229
        %6357 = vmatpush.bf16.msra.mxu0 %v4225
        %6358 = vmatpush.bf16.msra.mxu0 %v4221
        %6359 = vmatpush.bf16.msra.mxu0 %v4217
        %6360 = vmatpush.bf16.msra.mxu0 %v4213
        %6361 = vmatpush.bf16.msra.mxu0 %v4209
        %6362 = vmatmul.bf16.gmra.mxu0 %v1172
        %v6363 = vpop.f32.mrf.mxu0
        %v6364 = vadd.f32 %v6350, %v6363
        %v6365 = vpop.f32.mrf.mxu0
        %v6366 = vadd.f32 %v6352, %v6365
        %6367 = vdwg.mxu0
        %6368 = vmatpush.bf16.msra.mxu0 %v4269
        %6369 = vmatpush.bf16.msra.mxu0 %v4265
        %6370 = vmatpush.bf16.msra.mxu0 %v4261
        %6371 = vmatpush.bf16.msra.mxu0 %v4257
        %6372 = vmatpush.bf16.msra.mxu0 %v4253
        %6373 = vmatpush.bf16.msra.mxu0 %v4249
        %6374 = vmatpush.bf16.msra.mxu0 %v4245
        %6375 = vmatpush.bf16.msra.mxu0 %v4241
        %6376 = vmatmul.bf16.gmra.mxu0 %v1173
        %v6377 = vpop.f32.mrf.mxu0
        %v6378 = vadd.f32 %v6364, %v6377
        %v6379 = vpop.f32.mrf.mxu0
        %v6380 = vadd.f32 %v6366, %v6379
        %6381 = vdwg.mxu0
        %v6382 = vmul.f32 %v5370, %v5370
        %v6383 = vmul.f32 %v5706, %v5706
        %v6384 = vmul.f32 %v5372, %v5372
        %v6385 = vmul.f32 %v5708, %v5708
        %v6386 = vmul.f32 %v6042, %v6042
        %v6387 = vmul.f32 %v6378, %v6378
        %v6388 = vmul.f32 %v6044, %v6044
        %v6389 = vmul.f32 %v6380, %v6380
        %v6390 = vadd.f32 %v6382, %v6386
        %v6391 = vadd.f32 %v6383, %v6387
        %v6392 = vadd.f32 %v6384, %v6388
        %v6393 = vadd.f32 %v6385, %v6389
        %v6394 = vpack.c.bf16 %v6392, %v6390
        %v6395 = vpack.c.bf16 %v6393, %v6391
        %v6396 = vld [vmem:[%s276] sm:$0xff]
        %v6397 = vld [vmem:[%s276 + $0x8] sm:$0xff]
        %v6398 = vld [vmem:[%s276 + $0x10] sm:$0xff]
        %v6399 = vld [vmem:[%s276 + $0x18] sm:$0xff]
        %v6400 = vld [vmem:[%s226] sm:$0xff]
        %v6401 = vld [vmem:[%s226 + $0x8] sm:$0xff]
        %v6402 = vld [vmem:[%s226 + $0x10] sm:$0xff]
        %v6403 = vld [vmem:[%s226 + $0x18] sm:$0xff]
        %v6404 = vld [vmem:[%s226 + $0x20] sm:$0xff]
        %v6405 = vld [vmem:[%s226 + $0x28] sm:$0xff]
        %v6406 = vld [vmem:[%s226 + $0x30] sm:$0xff]
        %v6407 = vld [vmem:[%s226 + $0x38] sm:$0xff]
        %v6408 = vld [vmem:[%s226 + $0x40] sm:$0xff]
        %v6409 = vld [vmem:[%s226 + $0x48] sm:$0xff]
        %v6410 = vld [vmem:[%s226 + $0x50] sm:$0xff]
        %v6411 = vld [vmem:[%s226 + $0x58] sm:$0xff]
        %v6412 = vld [vmem:[%s226 + $0x60] sm:$0xff]
        %v6413 = vld [vmem:[%s226 + $0x68] sm:$0xff]
        %v6414 = vld [vmem:[%s226 + $0x70] sm:$0xff]
        %v6415 = vld [vmem:[%s226 + $0x78] sm:$0xff]
        %v6416 = vld [vmem:[%s226 + $0x80] sm:$0xff]
        %v6417 = vld [vmem:[%s226 + $0x88] sm:$0xff]
        %v6418 = vld [vmem:[%s226 + $0x90] sm:$0xff]
        %v6419 = vld [vmem:[%s226 + $0x98] sm:$0xff]
        %v6420 = vld [vmem:[%s226 + $0xa0] sm:$0xff]
        %v6421 = vld [vmem:[%s226 + $0xa8] sm:$0xff]
        %v6422 = vld [vmem:[%s226 + $0xb0] sm:$0xff]
        %v6423 = vld [vmem:[%s226 + $0xb8] sm:$0xff]
        %v6424 = vld [vmem:[%s226 + $0xc0] sm:$0xff]
        %v6425 = vld [vmem:[%s226 + $0xc8] sm:$0xff]
        %v6426 = vld [vmem:[%s226 + $0xd0] sm:$0xff]
        %v6427 = vld [vmem:[%s226 + $0xd8] sm:$0xff]
        %v6428 = vld [vmem:[%s226 + $0xe0] sm:$0xff]
        %v6429 = vld [vmem:[%s226 + $0xe8] sm:$0xff]
        %v6430 = vld [vmem:[%s226 + $0xf0] sm:$0xff]
        %v6431 = vld [vmem:[%s226 + $0xf8] sm:$0xff]
        %v6464 = vunpack.c.l.b16 %v6400
        %v6465 = vunpack.c.h.b16 %v6400
        %v6466 = vunpack.c.l.b16 %v6401
        %v6467 = vunpack.c.h.b16 %v6401
        %v6468 = vunpack.c.l.b16 %v6402
        %v6469 = vunpack.c.h.b16 %v6402
        %v6470 = vunpack.c.l.b16 %v6403
        %v6471 = vunpack.c.h.b16 %v6403
        %v6472 = vunpack.c.l.b16 %v6404
        %v6473 = vunpack.c.h.b16 %v6404
        %v6474 = vunpack.c.l.b16 %v6405
        %v6475 = vunpack.c.h.b16 %v6405
        %v6476 = vunpack.c.l.b16 %v6406
        %v6477 = vunpack.c.h.b16 %v6406
        %v6478 = vunpack.c.l.b16 %v6407
        %v6479 = vunpack.c.h.b16 %v6407
        %v6480 = vunpack.c.l.b16 %v6408
        %v6481 = vunpack.c.h.b16 %v6408
        %v6482 = vunpack.c.l.b16 %v6409
        %v6483 = vunpack.c.h.b16 %v6409
        %v6484 = vunpack.c.l.b16 %v6410
        %v6485 = vunpack.c.h.b16 %v6410
        %v6486 = vunpack.c.l.b16 %v6411
        %v6487 = vunpack.c.h.b16 %v6411
        %v6488 = vunpack.c.l.b16 %v6412
        %v6489 = vunpack.c.h.b16 %v6412
        %v6490 = vunpack.c.l.b16 %v6413
        %v6491 = vunpack.c.h.b16 %v6413
        %v6492 = vunpack.c.l.b16 %v6414
        %v6493 = vunpack.c.h.b16 %v6414
        %v6494 = vunpack.c.l.b16 %v6415
        %v6495 = vunpack.c.h.b16 %v6415
        %v6496 = vunpack.c.l.b16 %v6416
        %v6497 = vunpack.c.h.b16 %v6416
        %v6498 = vunpack.c.l.b16 %v6417
        %v6499 = vunpack.c.h.b16 %v6417
        %v6500 = vunpack.c.l.b16 %v6418
        %v6501 = vunpack.c.h.b16 %v6418
        %v6502 = vunpack.c.l.b16 %v6419
        %v6503 = vunpack.c.h.b16 %v6419
        %v6504 = vunpack.c.l.b16 %v6420
        %v6505 = vunpack.c.h.b16 %v6420
        %v6506 = vunpack.c.l.b16 %v6421
        %v6507 = vunpack.c.h.b16 %v6421
        %v6508 = vunpack.c.l.b16 %v6422
        %v6509 = vunpack.c.h.b16 %v6422
        %v6510 = vunpack.c.l.b16 %v6423
        %v6511 = vunpack.c.h.b16 %v6423
        %v6512 = vunpack.c.l.b16 %v6424
        %v6513 = vunpack.c.h.b16 %v6424
        %v6514 = vunpack.c.l.b16 %v6425
        %v6515 = vunpack.c.h.b16 %v6425
        %v6516 = vunpack.c.l.b16 %v6426
        %v6517 = vunpack.c.h.b16 %v6426
        %v6518 = vunpack.c.l.b16 %v6427
        %v6519 = vunpack.c.h.b16 %v6427
        %v6520 = vunpack.c.l.b16 %v6428
        %v6521 = vunpack.c.h.b16 %v6428
        %v6522 = vunpack.c.l.b16 %v6429
        %v6523 = vunpack.c.h.b16 %v6429
        %v6524 = vunpack.c.l.b16 %v6430
        %v6525 = vunpack.c.h.b16 %v6430
        %v6526 = vunpack.c.l.b16 %v6431
        %v6527 = vunpack.c.h.b16 %v6431
        %v6528 = vpack.c.b16 %v6466, %v6464
        %v6529 = vpack.c.b16 %v6467, %v6465
        %v6530 = vpack.c.b16 %v6470, %v6468
        %v6531 = vpack.c.b16 %v6471, %v6469
        %v6532 = vpack.c.b16 %v6474, %v6472
        %v6533 = vpack.c.b16 %v6475, %v6473
        %v6534 = vpack.c.b16 %v6478, %v6476
        %v6535 = vpack.c.b16 %v6479, %v6477
        %v6536 = vpack.c.b16 %v6482, %v6480
        %v6537 = vpack.c.b16 %v6483, %v6481
        %v6538 = vpack.c.b16 %v6486, %v6484
        %v6539 = vpack.c.b16 %v6487, %v6485
        %v6540 = vpack.c.b16 %v6490, %v6488
        %v6541 = vpack.c.b16 %v6491, %v6489
        %v6542 = vpack.c.b16 %v6494, %v6492
        %v6543 = vpack.c.b16 %v6495, %v6493
        %v6544 = vpack.c.b16 %v6498, %v6496
        %v6545 = vpack.c.b16 %v6499, %v6497
        %v6546 = vpack.c.b16 %v6502, %v6500
        %v6547 = vpack.c.b16 %v6503, %v6501
        %v6548 = vpack.c.b16 %v6506, %v6504
        %v6549 = vpack.c.b16 %v6507, %v6505
        %v6550 = vpack.c.b16 %v6510, %v6508
        %v6551 = vpack.c.b16 %v6511, %v6509
        %v6552 = vpack.c.b16 %v6514, %v6512
        %v6553 = vpack.c.b16 %v6515, %v6513
        %v6554 = vpack.c.b16 %v6518, %v6516
        %v6555 = vpack.c.b16 %v6519, %v6517
        %v6556 = vpack.c.b16 %v6522, %v6520
        %v6557 = vpack.c.b16 %v6523, %v6521
        %v6558 = vpack.c.b16 %v6526, %v6524
        %v6559 = vpack.c.b16 %v6527, %v6525
        %6592 = vmatpush.bf16.msra.mxu0 %v6542
        %6593 = vmatpush.bf16.msra.mxu0 %v6540
        %6594 = vmatpush.bf16.msra.mxu0 %v6538
        %6595 = vmatpush.bf16.msra.mxu0 %v6536
        %6596 = vmatpush.bf16.msra.mxu0 %v6534
        %6597 = vmatpush.bf16.msra.mxu0 %v6532
        %6598 = vmatpush.bf16.msra.mxu0 %v6530
        %6599 = vmatpush.bf16.msra.mxu0 %v6528
        %6600 = vmatmul.bf16.gmra.mxu0 %v6394
        %v6601 = vpop.f32.mrf.mxu0
        %v6602 = vadd.f32 0.0, %v6601
        %v6603 = vpop.f32.mrf.mxu0
        %v6604 = vadd.f32 0.0, %v6603
        %6605 = vdwg.mxu0
        %6606 = vmatpush.bf16.msra.mxu0 %v6558
        %6607 = vmatpush.bf16.msra.mxu0 %v6556
        %6608 = vmatpush.bf16.msra.mxu0 %v6554
        %6609 = vmatpush.bf16.msra.mxu0 %v6552
        %6610 = vmatpush.bf16.msra.mxu0 %v6550
        %6611 = vmatpush.bf16.msra.mxu0 %v6548
        %6612 = vmatpush.bf16.msra.mxu0 %v6546
        %6613 = vmatpush.bf16.msra.mxu0 %v6544
        %6614 = vmatmul.bf16.gmra.mxu0 %v6395
        %v6615 = vpop.f32.mrf.mxu0
        %v6616 = vadd.f32 %v6602, %v6615
        %v6617 = vpop.f32.mrf.mxu0
        %v6618 = vadd.f32 %v6604, %v6617
        %6619 = vdwg.mxu0
        %6620 = vmatpush.bf16.msra.mxu0 %v6543
        %6621 = vmatpush.bf16.msra.mxu0 %v6541
        %6622 = vmatpush.bf16.msra.mxu0 %v6539
        %6623 = vmatpush.bf16.msra.mxu0 %v6537
        %6624 = vmatpush.bf16.msra.mxu0 %v6535
        %6625 = vmatpush.bf16.msra.mxu0 %v6533
        %6626 = vmatpush.bf16.msra.mxu0 %v6531
        %6627 = vmatpush.bf16.msra.mxu0 %v6529
        %6628 = vmatmul.bf16.gmra.mxu0 %v6394
        %v6629 = vpop.f32.mrf.mxu0
        %v6630 = vadd.f32 0.0, %v6629
        %v6631 = vpop.f32.mrf.mxu0
        %v6632 = vadd.f32 0.0, %v6631
        %6633 = vdwg.mxu0
        %6634 = vmatpush.bf16.msra.mxu0 %v6559
        %6635 = vmatpush.bf16.msra.mxu0 %v6557
        %6636 = vmatpush.bf16.msra.mxu0 %v6555
        %6637 = vmatpush.bf16.msra.mxu0 %v6553
        %6638 = vmatpush.bf16.msra.mxu0 %v6551
        %6639 = vmatpush.bf16.msra.mxu0 %v6549
        %6640 = vmatpush.bf16.msra.mxu0 %v6547
        %6641 = vmatpush.bf16.msra.mxu0 %v6545
        %6642 = vmatmul.bf16.gmra.mxu0 %v6395
        %v6643 = vpop.f32.mrf.mxu0
        %v6644 = vadd.f32 %v6630, %v6643
        %v6645 = vpop.f32.mrf.mxu0
        %v6646 = vadd.f32 %v6632, %v6645
        %6647 = vdwg.mxu0
        %v6648 = vadd.f32 %v6396, %v6616
        %v6649 = vadd.f32 %v6397, %v6644
        %v6650 = vadd.f32 %v6398, %v6618
        %v6651 = vadd.f32 %v6399, %v6646
        %6652 = vst [vmem:[%s276] sm:$0xff] %v6648
        %6653 = vst [vmem:[%s276 + $0x8] sm:$0xff] %v6649
        %6654 = vst [vmem:[%s276 + $0x10] sm:$0xff] %v6650
        %6655 = vst [vmem:[%s276 + $0x18] sm:$0xff] %v6651
        %p6656 = scmp.eq.s32.totalorder %s25, 7
        // Predicated region
        $region45: #{_lambda_.3} parent=31 // pred_check
          %p6657 = pneg %p6656
        $region46: #{_lambda_.3} parent=31 // pred_check_branch
          %6659 = sbr.rel (%p6657) target = $region48
        $region47: #{_lambda_.3} parent=31 // pred_region
          %v6660 = vld [vmem:[%s276] sm:$0xff]
          %v6661 = vld [vmem:[%s276 + $0x8] sm:$0xff]
          %v6662 = vld [vmem:[%s276 + $0x10] sm:$0xff]
          %v6663 = vld [vmem:[%s276 + $0x18] sm:$0xff]
          %v6664 = vadd.f32 %v6660, 1e-05
          %v6665 = vadd.f32 %v6661, 1e-05
          %v6666 = vadd.f32 %v6662, 1e-05
          %v6667 = vadd.f32 %v6663, 1e-05
          %v6668 = vlog2.pop %v6664
          %v6669 = vmul.f32 %v6668, 0.6931472
          %v6670 = vlog2.pop %v6665
          %v6671 = vmul.f32 %v6670, 0.6931472
          %v6672 = vlog2.pop %v6666
          %v6673 = vmul.f32 %v6672, 0.6931472
          %v6674 = vlog2.pop %v6667
          %v6675 = vmul.f32 %v6674, 0.6931472
          %6676 = vst [vmem:[%s276] sm:$0xff] %v6669
          %6677 = vst [vmem:[%s276 + $0x8] sm:$0xff] %v6671
          %6678 = vst [vmem:[%s276 + $0x10] sm:$0xff] %v6673
          %6679 = vst [vmem:[%s276 + $0x18] sm:$0xff] %v6675
        $region48: #{_lambda_.3} parent=31 // pred_fallthru
          _
        %s6680 = smul.u32 2, %s24
        %p6681 = scmp.lt.s32.totalorder %s6680, 1
        %s6682 = scalar_select %p6681, %s6680, 1
        %s6683 = smul.addr %s6682, 2
        %s6684 = smul.addr %s6683, 8
        %s6685 = scalar_lea.vmem %s3, %s6684
        // Predicated region
        $region49: #{_lambda_.3} parent=31 // pred_check
          %p6686 = pneg %p128
        $region50: #{_lambda_.3} parent=31 // pred_check_branch
          %6688 = sbr.rel (%p6686) target = $region52
        $region51: #{_lambda_.3} parent=31 // pred_region
          %s6689 = smul.u32 2, %s24
        $region52: #{_lambda_.3} parent=31 // pred_fallthru
          _
        // Predicated region
        $region53: #{_lambda_.3} parent=31 // pred_check
          %p6690 = pneg %p128
        $region54: #{_lambda_.3} parent=31 // pred_check_branch
          %6692 = sbr.rel (%p6690) target = $region56
        $region55: #{_lambda_.3} parent=31 // pred_region
          %s6693 = smul.u32 2, %s24
          %p6694 = scmp.lt.s32.totalorder %s6693, 1
          %s6695 = scalar_select %p6694, %s6693, 1
          %s6696 = smul.addr %s6695, 2
          %s6697 = smul.addr %s6696, 8
          %s6698 = scalar_lea.vmem %s3, %s6697
        $region56: #{_lambda_.3} parent=31 // pred_fallthru
          _
      $region32: #{_lambda_.3} parent=5 // pred_fallthru
        _
      %p6699 = scmp.le.s32.totalorder 2, %s15
      // Predicated region
      $region57: #{_lambda_.3} parent=5 // pred_check
        %p6700 = pneg %p6699
      $region58: #{_lambda_.3} parent=5 // pred_check_branch
        %6702 = sbr.rel (%p6700) target = $region60
      $region59: #{_lambda_.3} parent=5 // pred_region
        %s6703 = ssub.s32 %s15, 2
      $region60: #{_lambda_.3} parent=5 // pred_fallthru
        _
    $region6: #{_lambda_.3} parent=1 // loop_footer
      %s19 = sadd.s32 1, %s15
    $region7: #{_lambda_.3} parent=1 // loop_footer_branch
      %14 = sbr.rel target = $region3
    $region8: #{_lambda_.3} parent=1 // loop_exit
      _
    %6704 = vsyncpa [#allocation3], 1
    %s6705 = scalar_lea.sflag [#allocation3], 1
    %6706 = vsyncpa %s6705, 1
    %6707 = vsyncpa [#allocation5], 1
    %s6708 = scalar_lea.sflag [#allocation5], 1
    %6709 = vsyncpa %s6708, 1

</llo_original>
